<compile_context>
chip_gen: v5e
topology: v5e:2x2
jax: 0.10.0
libtpu: 0.0.40
codegen_flags: <defaults>
</compile_context>

<pallas_src>
import numpy as np
import jax
import jax.numpy as jnp
from jax.experimental import pallas as pl
from jax.experimental.pallas import tpu as pltpu  # noqa: F401  (TPU backend)

# ---- model constants (from the PyTorch source) ------------------------------
d_model = 7
d_k = d_v = 2
n_heads = 8
src_len = 5
src_vocab_size = 5
n_layers = 2          # not defined in snippet; chosen small
d_ff = 16             # not defined in snippet; chosen small
LN_EPS = 1e-5         # torch.nn.LayerNorm default

PAD_FILL = -1e9       # torch masked_fill value for PAD keys (matches reference)
SEG_FILL = -1e30      # fill for cross-batch keys: exp underflows to exactly 0

HD = n_heads * d_k            # 16
PACK_W = 3 * HD + d_ff        # 64: [Wq|Wk|Wv|W1] / [bq|bk|bv|b1] packed width
EMB_TBL_ROWS = 8              # emb table padded to a sublane-aligned offset


# ---- sinusoid positional table (numpy, matches get_sinusoid_encoding_table) --
def get_sinusoid_encoding_table(n_position, dm):
    def cal_angle(position, hid_idx):
        return position / np.power(10000, 2 * (hid_idx // 2) / dm)

    table = np.array(
        [[cal_angle(pos, j) for j in range(dm)] for pos in range(n_position)],
        dtype=np.float64,
    )
    table[:, 0::2] = np.sin(table[:, 0::2])
    table[:, 1::2] = np.cos(table[:, 1::2])
    return jnp.asarray(table, dtype=jnp.float32)


# ---- Pallas kernel: whole Encoder forward in one invocation ------------------
def encoder_kernel(ids_col_ref, ids_row_ref, embpos_ref,
                   w_in_ref, w_out_ref, vecs_ref,
                   out_ref, *attn_refs):
    N = out_ref.shape[0]                 # B * src_len
    L = src_len
    B = N // L
    V = src_vocab_size
    num_layers = w_in_ref.shape[0]

    # --- embedding: one-hot gather + positional add (folded into kernel) ----
    ids_col = ids_col_ref[...]                                       # (N, 1) i32
    ids_row = ids_row_ref[...]                                       # (1, N) i32
    vocab_iota = jax.lax.broadcasted_iota(jnp.int32, (N, V), 1)
    one_hot = jnp.where(vocab_iota == jnp.broadcast_to(ids_col, (N, V)),
                        jnp.float32(1.0), jnp.float32(0.0))          # (N, V)
    emb_tbl = embpos_ref[0:V, :]                                     # (V, D)
    pos = embpos_ref[EMB_TBL_ROWS:EMB_TBL_ROWS + N, :]               # (N, D)
    x = (jnp.dot(one_hot, emb_tbl, preferred_element_type=jnp.float32)
         + pos)                                                      # (N, D)

    # --- masks, computed once in-kernel (no (N,N) operands from the host) ---
    key_pad = jnp.broadcast_to(ids_row, (N, N)) == 0                 # key is PAD
    r_iota = jax.lax.broadcasted_iota(jnp.int32, (N, N), 0)
    c_iota = jax.lax.broadcasted_iota(jnp.int32, (N, N), 1)
    same_batch = None
    for b in range(B):                    # static B: no integer division needed
        in_b_r = (r_iota >= b * L) & (r_iota < (b + 1) * L)
        in_b_c = (c_iota >= b * L) & (c_iota < (b + 1) * L)
        blk = in_b_r & in_b_c
        same_batch = blk if same_batch is None else (same_batch | blk)
    cross = jnp.logical_not(same_batch)                              # other batch

    # combined replacement fill (cross overrides PAD), hoisted out of the loop
    do_fill = cross | key_pad
    neg_fill = jnp.where(cross, jnp.float32(SEG_FILL), jnp.float32(PAD_FILL))
    do_fill3 = jnp.broadcast_to(do_fill[None, :, :], (n_heads, N, N))
    neg_fill3 = jnp.broadcast_to(neg_fill[None, :, :], (n_heads, N, N))

    scale = jnp.float32(1.0 / np.sqrt(d_k))

    for layer in range(num_layers):       # all layers fused; tiny static unroll
        w_in = w_in_ref[layer]                       # (D, 64) = [Wq | Wk | Wv | W1]
        wqkv = w_in[:, :3 * HD]
        w1 = w_in[:, 3 * HD:]
        wo = w_out_ref[layer, 0]                     # (n_heads*d_v, D)
        w2 = w_out_ref[layer, 1]                     # (d_ff, D)
        vecs = vecs_ref[layer]                       # (7, 64)
        b_row = vecs[0:1, :]                         # (1, 64) = [bq | bk | bv | b1]
        b_qkv = b_row[:, :3 * HD]
        b1 = b_row[:, 3 * HD:]
        bo = vecs[1:2, 0:d_model]
        ln1g = vecs[2:3, 0:d_model]
        ln1b = vecs[3:4, 0:d_model]
        b2 = vecs[4:5, 0:d_model]
        ln2g = vecs[5:6, 0:d_model]
        ln2b = vecs[6:7, 0:d_model]

        # fused Q/K/V projection (one MXU matmul instead of three)
        qkv = jnp.dot(x, wqkv, preferred_element_type=jnp.float32) + b_qkv

        # split heads -> (n_heads, N, d) via cheap static lane slices + stack
        q3 = jnp.stack([qkv[:, h * d_k:(h + 1) * d_k]
                        for h in range(n_heads)], axis=0)
        k3 = jnp.stack([qkv[:, HD + h * d_k:HD + (h + 1) * d_k]
                        for h in range(n_heads)], axis=0)
        v3 = jnp.stack([qkv[:, 2 * HD + h * d_v:2 * HD + (h + 1) * d_v]
                        for h in range(n_heads)], axis=0)

        # head-batched scores / context: 2 batched contractions per layer
        s = jnp.einsum('hqd,hkd->hqk', q3, k3,
                       preferred_element_type=jnp.float32) * scale   # (H, N, N)
        s = jnp.where(do_fill3, neg_fill3, s)
        m = jnp.max(s, axis=-1, keepdims=True)
        e = jnp.exp(s - m)
        p = e / jnp.sum(e, axis=-1, keepdims=True)                   # (H, N, N)
        ctx3 = jnp.einsum('hqk,hkd->hqd', p, v3,
                          preferred_element_type=jnp.float32)        # (H, N, d_v)

        # attention in FINAL layout: only the block-diagonal (B, H, L, L) blocks
        attn_ref = attn_refs[layer]
        for b in range(B):
            attn_ref[b] = p[:, b * L:(b + 1) * L, b * L:(b + 1) * L]

        context = jnp.concatenate([ctx3[h] for h in range(n_heads)], axis=-1)
        mha = jnp.dot(context, wo, preferred_element_type=jnp.float32) + bo

        # residual + LayerNorm 1
        y = mha + x
        mu = jnp.mean(y, axis=-1, keepdims=True)
        var = jnp.mean((y - mu) ** 2, axis=-1, keepdims=True)
        y = (y - mu) * jax.lax.rsqrt(var + LN_EPS) * ln1g + ln1b

        # position-wise FFN (Conv1d k=1 == per-position linear), ReLU
        h1 = jnp.maximum(
            jnp.dot(y, w1, preferred_element_type=jnp.float32) + b1, 0.0)
        ff = jnp.dot(h1, w2, preferred_element_type=jnp.float32) + b2

        # residual + LayerNorm 2
        z = ff + y
        mu2 = jnp.mean(z, axis=-1, keepdims=True)
        var2 = jnp.mean((z - mu2) ** 2, axis=-1, keepdims=True)
        x = (z - mu2) * jax.lax.rsqrt(var2 + LN_EPS) * ln2g + ln2b

    out_ref[...] = x


# ---- wrapper -----------------------------------------------------------------
@jax.jit
def encoder_forward(enc_inputs, emb_pos, params):
    """enc_inputs: (B, src_len) int32 token ids. Returns (enc_out, [attn]*n_layers)."""
    B, L = enc_inputs.shape
    N = B * L
    num_layers = params["w_in"].shape[0]

    ids = enc_inputs.astype(jnp.int32)
    ids_col = ids.reshape(N, 1)
    ids_row = ids.reshape(1, N)

    out_shapes = tuple(
        [jax.ShapeDtypeStruct((N, d_model), jnp.float32)]
        + [jax.ShapeDtypeStruct((B, n_heads, L, L), jnp.float32)
           for _ in range(num_layers)])

    res = pl.pallas_call(
        encoder_kernel,
        out_shape=out_shapes,
        # no grid: whole problem fits one VMEM-resident, single-TC invocation
    )(ids_col, ids_row, emb_pos,
      params["w_in"], params["w_out"], params["vecs"])

    enc_out = res[0].reshape(B, L, d_model)
    return enc_out, list(res[1:])          # attn already in final (B,H,L,L) layout


# ---- host-side packing (done once, outside the jitted forward) ---------------
def pack_embeddings(src_emb, pos_table, batch):
    """[emb table (padded to 8 rows) ; per-row positional embedding] -> (8+B*L, D)."""
    pos_ids = jnp.asarray([1, 2, 3, 4, 0], dtype=jnp.int32)   # as in the torch code
    pos_rep = jnp.tile(pos_table[pos_ids], (batch, 1))        # (B*L, D)
    pad = jnp.zeros((EMB_TBL_ROWS - src_vocab_size, d_model), jnp.float32)
    return jnp.concatenate([src_emb, pad, pos_rep], axis=0)


def init_packed_params(key):
    assert d_ff == n_heads * d_v  # lets W_O and W2 share one packed buffer
    def pad_row(v):
        return jnp.pad(v, (0, PACK_W - v.shape[0]))[None, :]

    keys = jax.random.split(key, n_layers)
    w_in, w_out, vecs = [], [], []
    for lk in keys:
        ks = jax.random.split(lk, 16)
        # stored as (in, out) so the kernel does x @ W (equiv. to torch x @ W.T)
        wq = jax.random.normal(ks[0], (d_model, n_heads * d_k), jnp.float32) * 0.1
        wk = jax.random.normal(ks[1], (d_model, n_heads * d_k), jnp.float32) * 0.1
        wv = jax.random.normal(ks[2], (d_model, n_heads * d_v), jnp.float32) * 0.1
        wo = jax.random.normal(ks[3], (n_heads * d_v, d_model), jnp.float32) * 0.1
        w1 = jax.random.normal(ks[4], (d_model, d_ff), jnp.float32) * 0.1
        w2 = jax.random.normal(ks[5], (d_ff, d_model), jnp.float32) * 0.1
        bq = jax.random.normal(ks[6], (n_heads * d_k,), jnp.float32) * 0.05
        bk = jax.random.normal(ks[7], (n_heads * d_k,), jnp.float32) * 0.05
        bv = jax.random.normal(ks[8], (n_heads * d_v,), jnp.float32) * 0.05
        b1 = jax.random.normal(ks[9], (d_ff,), jnp.float32) * 0.05
        bo = jax.random.normal(ks[10], (d_model,), jnp.float32) * 0.05
        b2 = jax.random.normal(ks[11], (d_model,), jnp.float32) * 0.05
        ln1g = 1.0 + jax.random.normal(ks[12], (d_model,), jnp.float32) * 0.05
        ln1b = jax.random.normal(ks[13], (d_model,), jnp.float32) * 0.05
        ln2g = 1.0 + jax.random.normal(ks[14], (d_model,), jnp.float32) * 0.05
        ln2b = jax.random.normal(ks[15], (d_model,), jnp.float32) * 0.05

        w_in.append(jnp.concatenate([wq, wk, wv, w1], axis=1))        # (D, 64)
        w_out.append(jnp.stack([wo, w2], axis=0))                     # (2, 16, D)
        vecs.append(jnp.concatenate(
            [jnp.concatenate([bq, bk, bv, b1])[None, :],
             pad_row(bo), pad_row(ln1g), pad_row(ln1b),
             pad_row(b2), pad_row(ln2g), pad_row(ln2b)], axis=0))     # (7, 64)

    return {
        "w_in": jnp.stack(w_in),      # (n_layers, D, 64)
        "w_out": jnp.stack(w_out),    # (n_layers, 2, 16, D)
        "vecs": jnp.stack(vecs),      # (n_layers, 7, 64)
    }


# ---- pure-JAX reference (mirrors the PyTorch forward; used for validation) ---
def encoder_reference(enc_inputs, emb_pos, params):
    B, L = enc_inputs.shape
    N = B * L
    emb = emb_pos[0:src_vocab_size]
    pos = emb_pos[EMB_TBL_ROWS:EMB_TBL_ROWS + N].reshape(B, L, d_model)
    x = emb[enc_inputs] + pos
    pad_mask = (enc_inputs == 0)[:, None, None, :]        # (B,1,1,L): key is PAD
    attns = []
    for layer in range(params["w_in"].shape[0]):
        w_in = params["w_in"][layer]
        wqkv, w1 = w_in[:, :3 * HD], w_in[:, 3 * HD:]
        wo, w2 = params["w_out"][layer, 0], params["w_out"][layer, 1]
        vecs = params["vecs"][layer]
        b_qkv, b1 = vecs[0, :3 * HD], vecs[0, 3 * HD:]
        bo, ln1g, ln1b = vecs[1, :d_model], vecs[2, :d_model], vecs[3, :d_model]
        b2, ln2g, ln2b = vecs[4, :d_model], vecs[5, :d_model], vecs[6, :d_model]

        qkv = x @ wqkv + b_qkv
        q = qkv[..., :HD].reshape(B, L, n_heads, d_k).transpose(0, 2, 1, 3)
        k = qkv[..., HD:2 * HD].reshape(B, L, n_heads, d_k).transpose(0, 2, 1, 3)
        v = qkv[..., 2 * HD:].reshape(B, L, n_heads, d_v).transpose(0, 2, 1, 3)
        s = jnp.einsum('bhqd,bhkd->bhqk', q, k) / np.sqrt(d_k)
        s = jnp.where(pad_mask, PAD_FILL, s)
        p = jax.nn.softmax(s, axis=-1)
        ctx = jnp.einsum('bhqk,bhkd->bhqd', p, v)
        ctx = ctx.transpose(0, 2, 1, 3).reshape(B, L, n_heads * d_v)
        mha = ctx @ wo + bo
        y = mha + x
        mu = y.mean(-1, keepdims=True)
        var = ((y - mu) ** 2).mean(-1, keepdims=True)
        y = (y - mu) * jax.lax.rsqrt(var + LN_EPS) * ln1g + ln1b
        h1 = jnp.maximum(y @ w1 + b1, 0.0)
        ff = h1 @ w2 + b2
        z = ff + y
        mu2 = z.mean(-1, keepdims=True)
        var2 = ((z - mu2) ** 2).mean(-1, keepdims=True)
        x = (z - mu2) * jax.lax.rsqrt(var2 + LN_EPS) * ln2g + ln2b
        attns.append(p)
    return x, attns


if __name__ == "__main__":
    key = jax.random.PRNGKey(0)
    k_emb, k_tok, k_layers = jax.random.split(key, 3)

    # deterministic synthetic parameters
    src_emb = jax.random.normal(k_emb, (src_vocab_size, d_model), jnp.float32) * 0.1
    pos_table = get_sinusoid_encoding_table(src_len + 1, d_model)     # (6, 7), frozen
    params = init_packed_params(k_layers)

    # deterministic input tokens (batch=2, seq=5), vocab ids in [0, 5)
    batch = 2
    enc_inputs = jax.random.randint(k_tok, (batch, src_len), 0, src_vocab_size,
                                    dtype=jnp.int32)
    enc_inputs = enc_inputs.at[0, -1].set(0)      # guarantee at least one PAD key

    # host-side, once: packed [emb table ; tiled positional rows] buffer
    emb_pos = pack_embeddings(src_emb, pos_table, batch)

    enc_out, enc_attns = encoder_forward(enc_inputs, emb_pos, params)
    enc_out = jax.block_until_ready(enc_out)
    for a in enc_attns:
        jax.block_until_ready(a)

    assert enc_out.shape == (batch, src_len, d_model)
    assert len(enc_attns) == n_layers
    assert enc_attns[0].shape == (batch, n_heads, src_len, src_len)
    assert bool(jnp.isfinite(enc_out).all())
    # each attention row is a softmax over its own sequence's keys -> sums to 1
    assert bool(jnp.allclose(enc_attns[0].sum(-1), 1.0, atol=1e-4))

    # validate against a plain-JAX reference of the PyTorch forward
    ref_out, ref_attns = encoder_reference(enc_inputs, emb_pos, params)
    assert bool(jnp.allclose(enc_out, ref_out, atol=1e-2, rtol=1e-2))
    for a, ra in zip(enc_attns, ref_attns):
        assert bool(jnp.allclose(a, ra, atol=1e-2, rtol=1e-2))

    print("KERNEL_OK")
</pallas_src>

<mosaic_0001>
module attributes {stable_mosaic.version = 11 : i64} {
  func.func @encoder_kernel(%arg0: memref<10x1xi32, #tpu.memory_space<vmem>>, %arg1: memref<1x10xi32, #tpu.memory_space<vmem>>, %arg2: memref<18x7xf32, #tpu.memory_space<vmem>>, %arg3: memref<2x7x64xf32, #tpu.memory_space<vmem>>, %arg4: memref<2x2x16x7xf32, #tpu.memory_space<vmem>>, %arg5: memref<2x7x64xf32, #tpu.memory_space<vmem>>, %arg6: memref<10x7xf32, #tpu.memory_space<vmem>>, %arg7: memref<2x8x5x5xf32, #tpu.memory_space<vmem>>, %arg8: memref<2x8x5x5xf32, #tpu.memory_space<vmem>>) attributes {dimension_semantics = [], scalar_prefetch = 0 : i64, scratch_operands = 0 : i64, tpu.core_type = #tpu.core_type<tc>} {
    %c0 = arith.constant 0 : index
    %c0_0 = arith.constant 0 : index
    %0 = vector.load %arg0[%c0, %c0_0] : memref<10x1xi32, #tpu.memory_space<vmem>>, vector<10x1xi32>
    %c0_1 = arith.constant 0 : index
    %c0_2 = arith.constant 0 : index
    %1 = vector.load %arg1[%c0_1, %c0_2] : memref<1x10xi32, #tpu.memory_space<vmem>>, vector<1x10xi32>
    %2 = tpu.iota {dimensions = array<i32: 1>} : vector<10x5xi32>
    %3 = vector.shape_cast %0 : vector<10x1xi32> to vector<10x1xi32>
    %4 = vector.broadcast %3 : vector<10x1xi32> to vector<10x5xi32>
    %5 = arith.cmpi eq, %2, %4 : vector<10x5xi32>
    %cst = arith.constant 1.000000e+00 : f32
    %cst_3 = arith.constant 0.000000e+00 : f32
    %6 = vector.broadcast %cst : f32 to vector<10x5xf32>
    %7 = vector.broadcast %cst_3 : f32 to vector<10x5xf32>
    %8 = arith.select %5, %6, %7 : vector<10x5xi1>, vector<10x5xf32>
    %c0_4 = arith.constant 0 : index
    %c0_5 = arith.constant 0 : index
    %9 = vector.load %arg2[%c0_4, %c0_5] : memref<18x7xf32, #tpu.memory_space<vmem>>, vector<5x7xf32>
    %c8 = arith.constant 8 : index
    %c0_6 = arith.constant 0 : index
    %10 = vector.load %arg2[%c8, %c0_6] : memref<18x7xf32, #tpu.memory_space<vmem>>, vector<10x7xf32>
    %cst_7 = arith.constant dense<0.000000e+00> : vector<10x7xf32>
    %11 = tpu.matmul %8, %9, %cst_7 {dimension_numbers = #tpu.dot_dimension_numbers<[1], [0], [0], [1], [0, 0, 1, 1], [], []>} : vector<10x5xf32>, vector<5x7xf32>, vector<10x7xf32> -> vector<10x7xf32>
    %12 = arith.addf %11, %10 : vector<10x7xf32>
    %13 = vector.shape_cast %1 : vector<1x10xi32> to vector<1x10xi32>
    %14 = vector.broadcast %13 : vector<1x10xi32> to vector<10x10xi32>
    %c0_i32 = arith.constant 0 : i32
    %15 = vector.broadcast %c0_i32 : i32 to vector<10x10xi32>
    %16 = arith.cmpi eq, %14, %15 : vector<10x10xi32>
    %17 = tpu.iota {dimensions = array<i32: 0>} : vector<10x10xi32>
    %18 = tpu.iota {dimensions = array<i32: 1>} : vector<10x10xi32>
    %c0_i32_8 = arith.constant 0 : i32
    %19 = vector.broadcast %c0_i32_8 : i32 to vector<10x10xi32>
    %20 = arith.cmpi sge, %17, %19 : vector<10x10xi32>
    %c5_i32 = arith.constant 5 : i32
    %21 = vector.broadcast %c5_i32 : i32 to vector<10x10xi32>
    %22 = arith.cmpi slt, %17, %21 : vector<10x10xi32>
    %23 = arith.andi %20, %22 : vector<10x10xi1>
    %c0_i32_9 = arith.constant 0 : i32
    %24 = vector.broadcast %c0_i32_9 : i32 to vector<10x10xi32>
    %25 = arith.cmpi sge, %18, %24 : vector<10x10xi32>
    %c5_i32_10 = arith.constant 5 : i32
    %26 = vector.broadcast %c5_i32_10 : i32 to vector<10x10xi32>
    %27 = arith.cmpi slt, %18, %26 : vector<10x10xi32>
    %28 = arith.andi %25, %27 : vector<10x10xi1>
    %29 = arith.andi %23, %28 : vector<10x10xi1>
    %c5_i32_11 = arith.constant 5 : i32
    %30 = vector.broadcast %c5_i32_11 : i32 to vector<10x10xi32>
    %31 = arith.cmpi sge, %17, %30 : vector<10x10xi32>
    %c10_i32 = arith.constant 10 : i32
    %32 = vector.broadcast %c10_i32 : i32 to vector<10x10xi32>
    %33 = arith.cmpi slt, %17, %32 : vector<10x10xi32>
    %34 = arith.andi %31, %33 : vector<10x10xi1>
    %c5_i32_12 = arith.constant 5 : i32
    %35 = vector.broadcast %c5_i32_12 : i32 to vector<10x10xi32>
    %36 = arith.cmpi sge, %18, %35 : vector<10x10xi32>
    %c10_i32_13 = arith.constant 10 : i32
    %37 = vector.broadcast %c10_i32_13 : i32 to vector<10x10xi32>
    %38 = arith.cmpi slt, %18, %37 : vector<10x10xi32>
    %39 = arith.andi %36, %38 : vector<10x10xi1>
    %40 = arith.andi %34, %39 : vector<10x10xi1>
    %41 = arith.ori %29, %40 : vector<10x10xi1>
    %cst_14 = arith.constant dense<true> : vector<10x10xi1>
    %42 = arith.xori %41, %cst_14 : vector<10x10xi1>
    %43 = arith.ori %42, %16 : vector<10x10xi1>
    %cst_15 = arith.constant -1.000000e+30 : f32
    %cst_16 = arith.constant -1.000000e+09 : f32
    %44 = vector.broadcast %cst_15 : f32 to vector<10x10xf32>
    %45 = vector.broadcast %cst_16 : f32 to vector<10x10xf32>
    %46 = arith.select %42, %44, %45 : vector<10x10xi1>, vector<10x10xf32>
    %47 = vector.shape_cast %43 : vector<10x10xi1> to vector<1x10x10xi1>
    %48 = vector.shape_cast %47 : vector<1x10x10xi1> to vector<1x10x10xi1>
    %49 = vector.broadcast %48 : vector<1x10x10xi1> to vector<8x10x10xi1>
    %50 = vector.shape_cast %46 : vector<10x10xf32> to vector<1x10x10xf32>
    %51 = vector.shape_cast %50 : vector<1x10x10xf32> to vector<1x10x10xf32>
    %52 = vector.broadcast %51 : vector<1x10x10xf32> to vector<8x10x10xf32>
    %c0_17 = arith.constant 0 : index
    %c0_18 = arith.constant 0 : index
    %c0_19 = arith.constant 0 : index
    %53 = vector.load %arg3[%c0_17, %c0_18, %c0_19] : memref<2x7x64xf32, #tpu.memory_space<vmem>>, vector<1x7x64xf32>
    %54 = vector.shape_cast %53 : vector<1x7x64xf32> to vector<7x64xf32>
    %55 = vector.extract_strided_slice %54 {offsets = [0, 0], sizes = [7, 48], strides = [1, 1]} : vector<7x64xf32> to vector<7x48xf32>
    %56 = vector.extract_strided_slice %54 {offsets = [0, 48], sizes = [7, 16], strides = [1, 1]} : vector<7x64xf32> to vector<7x16xf32>
    %c0_20 = arith.constant 0 : index
    %c0_21 = arith.constant 0 : index
    %c0_22 = arith.constant 0 : index
    %c0_23 = arith.constant 0 : index
    %57 = vector.load %arg4[%c0_20, %c0_21, %c0_22, %c0_23] : memref<2x2x16x7xf32, #tpu.memory_space<vmem>>, vector<1x1x16x7xf32>
    %58 = vector.shape_cast %57 : vector<1x1x16x7xf32> to vector<16x7xf32>
    %c0_24 = arith.constant 0 : index
    %c1 = arith.constant 1 : index
    %c0_25 = arith.constant 0 : index
    %c0_26 = arith.constant 0 : index
    %59 = vector.load %arg4[%c0_24, %c1, %c0_25, %c0_26] : memref<2x2x16x7xf32, #tpu.memory_space<vmem>>, vector<1x1x16x7xf32>
    %60 = vector.shape_cast %59 : vector<1x1x16x7xf32> to vector<16x7xf32>
    %c0_27 = arith.constant 0 : index
    %c0_28 = arith.constant 0 : index
    %c0_29 = arith.constant 0 : index
    %61 = vector.load %arg5[%c0_27, %c0_28, %c0_29] : memref<2x7x64xf32, #tpu.memory_space<vmem>>, vector<1x7x64xf32>
    %62 = vector.shape_cast %61 : vector<1x7x64xf32> to vector<7x64xf32>
    %63 = vector.extract_strided_slice %62 {offsets = [0, 0], sizes = [1, 64], strides = [1, 1]} : vector<7x64xf32> to vector<1x64xf32>
    %64 = vector.extract_strided_slice %63 {offsets = [0, 0], sizes = [1, 48], strides = [1, 1]} : vector<1x64xf32> to vector<1x48xf32>
    %65 = vector.extract_strided_slice %63 {offsets = [0, 48], sizes = [1, 16], strides = [1, 1]} : vector<1x64xf32> to vector<1x16xf32>
    %66 = vector.extract_strided_slice %62 {offsets = [1, 0], sizes = [1, 7], strides = [1, 1]} : vector<7x64xf32> to vector<1x7xf32>
    %67 = vector.extract_strided_slice %62 {offsets = [2, 0], sizes = [1, 7], strides = [1, 1]} : vector<7x64xf32> to vector<1x7xf32>
    %68 = vector.extract_strided_slice %62 {offsets = [3, 0], sizes = [1, 7], strides = [1, 1]} : vector<7x64xf32> to vector<1x7xf32>
    %69 = vector.extract_strided_slice %62 {offsets = [4, 0], sizes = [1, 7], strides = [1, 1]} : vector<7x64xf32> to vector<1x7xf32>
    %70 = vector.extract_strided_slice %62 {offsets = [5, 0], sizes = [1, 7], strides = [1, 1]} : vector<7x64xf32> to vector<1x7xf32>
    %71 = vector.extract_strided_slice %62 {offsets = [6, 0], sizes = [1, 7], strides = [1, 1]} : vector<7x64xf32> to vector<1x7xf32>
    %cst_30 = arith.constant dense<0.000000e+00> : vector<10x48xf32>
    %72 = tpu.matmul %12, %55, %cst_30 {dimension_numbers = #tpu.dot_dimension_numbers<[1], [0], [0], [1], [0, 0, 1, 1], [], []>} : vector<10x7xf32>, vector<7x48xf32>, vector<10x48xf32> -> vector<10x48xf32>
    %73 = vector.broadcast %64 : vector<1x48xf32> to vector<10x48xf32>
    %74 = arith.addf %72, %73 : vector<10x48xf32>
    %75 = vector.extract_strided_slice %74 {offsets = [0, 0], sizes = [10, 2], strides = [1, 1]} : vector<10x48xf32> to vector<10x2xf32>
    %76 = vector.extract_strided_slice %74 {offsets = [0, 2], sizes = [10, 2], strides = [1, 1]} : vector<10x48xf32> to vector<10x2xf32>
    %77 = vector.extract_strided_slice %74 {offsets = [0, 4], sizes = [10, 2], strides = [1, 1]} : vector<10x48xf32> to vector<10x2xf32>
    %78 = vector.extract_strided_slice %74 {offsets = [0, 6], sizes = [10, 2], strides = [1, 1]} : vector<10x48xf32> to vector<10x2xf32>
    %79 = vector.extract_strided_slice %74 {offsets = [0, 8], sizes = [10, 2], strides = [1, 1]} : vector<10x48xf32> to vector<10x2xf32>
    %80 = vector.extract_strided_slice %74 {offsets = [0, 10], sizes = [10, 2], strides = [1, 1]} : vector<10x48xf32> to vector<10x2xf32>
    %81 = vector.extract_strided_slice %74 {offsets = [0, 12], sizes = [10, 2], strides = [1, 1]} : vector<10x48xf32> to vector<10x2xf32>
    %82 = vector.extract_strided_slice %74 {offsets = [0, 14], sizes = [10, 2], strides = [1, 1]} : vector<10x48xf32> to vector<10x2xf32>
    %83 = vector.shape_cast %75 : vector<10x2xf32> to vector<1x10x2xf32>
    %84 = vector.shape_cast %76 : vector<10x2xf32> to vector<1x10x2xf32>
    %85 = vector.shape_cast %77 : vector<10x2xf32> to vector<1x10x2xf32>
    %86 = vector.shape_cast %78 : vector<10x2xf32> to vector<1x10x2xf32>
    %87 = vector.shape_cast %79 : vector<10x2xf32> to vector<1x10x2xf32>
    %88 = vector.shape_cast %80 : vector<10x2xf32> to vector<1x10x2xf32>
    %89 = vector.shape_cast %81 : vector<10x2xf32> to vector<1x10x2xf32>
    %90 = vector.shape_cast %82 : vector<10x2xf32> to vector<1x10x2xf32>
    %91 = tpu.concatenate %83, %84, %85, %86, %87, %88, %89, %90 in 0 : vector<1x10x2xf32>, vector<1x10x2xf32>, vector<1x10x2xf32>, vector<1x10x2xf32>, vector<1x10x2xf32>, vector<1x10x2xf32>, vector<1x10x2xf32>, vector<1x10x2xf32> -> vector<8x10x2xf32>
    %92 = vector.extract_strided_slice %74 {offsets = [0, 16], sizes = [10, 2], strides = [1, 1]} : vector<10x48xf32> to vector<10x2xf32>
    %93 = vector.extract_strided_slice %74 {offsets = [0, 18], sizes = [10, 2], strides = [1, 1]} : vector<10x48xf32> to vector<10x2xf32>
    %94 = vector.extract_strided_slice %74 {offsets = [0, 20], sizes = [10, 2], strides = [1, 1]} : vector<10x48xf32> to vector<10x2xf32>
    %95 = vector.extract_strided_slice %74 {offsets = [0, 22], sizes = [10, 2], strides = [1, 1]} : vector<10x48xf32> to vector<10x2xf32>
    %96 = vector.extract_strided_slice %74 {offsets = [0, 24], sizes = [10, 2], strides = [1, 1]} : vector<10x48xf32> to vector<10x2xf32>
    %97 = vector.extract_strided_slice %74 {offsets = [0, 26], sizes = [10, 2], strides = [1, 1]} : vector<10x48xf32> to vector<10x2xf32>
    %98 = vector.extract_strided_slice %74 {offsets = [0, 28], sizes = [10, 2], strides = [1, 1]} : vector<10x48xf32> to vector<10x2xf32>
    %99 = vector.extract_strided_slice %74 {offsets = [0, 30], sizes = [10, 2], strides = [1, 1]} : vector<10x48xf32> to vector<10x2xf32>
    %100 = vector.shape_cast %92 : vector<10x2xf32> to vector<1x10x2xf32>
    %101 = vector.shape_cast %93 : vector<10x2xf32> to vector<1x10x2xf32>
    %102 = vector.shape_cast %94 : vector<10x2xf32> to vector<1x10x2xf32>
    %103 = vector.shape_cast %95 : vector<10x2xf32> to vector<1x10x2xf32>
    %104 = vector.shape_cast %96 : vector<10x2xf32> to vector<1x10x2xf32>
    %105 = vector.shape_cast %97 : vector<10x2xf32> to vector<1x10x2xf32>
    %106 = vector.shape_cast %98 : vector<10x2xf32> to vector<1x10x2xf32>
    %107 = vector.shape_cast %99 : vector<10x2xf32> to vector<1x10x2xf32>
    %108 = tpu.concatenate %100, %101, %102, %103, %104, %105, %106, %107 in 0 : vector<1x10x2xf32>, vector<1x10x2xf32>, vector<1x10x2xf32>, vector<1x10x2xf32>, vector<1x10x2xf32>, vector<1x10x2xf32>, vector<1x10x2xf32>, vector<1x10x2xf32> -> vector<8x10x2xf32>
    %109 = vector.extract_strided_slice %74 {offsets = [0, 32], sizes = [10, 2], strides = [1, 1]} : vector<10x48xf32> to vector<10x2xf32>
    %110 = vector.extract_strided_slice %74 {offsets = [0, 34], sizes = [10, 2], strides = [1, 1]} : vector<10x48xf32> to vector<10x2xf32>
    %111 = vector.extract_strided_slice %74 {offsets = [0, 36], sizes = [10, 2], strides = [1, 1]} : vector<10x48xf32> to vector<10x2xf32>
    %112 = vector.extract_strided_slice %74 {offsets = [0, 38], sizes = [10, 2], strides = [1, 1]} : vector<10x48xf32> to vector<10x2xf32>
    %113 = vector.extract_strided_slice %74 {offsets = [0, 40], sizes = [10, 2], strides = [1, 1]} : vector<10x48xf32> to vector<10x2xf32>
    %114 = vector.extract_strided_slice %74 {offsets = [0, 42], sizes = [10, 2], strides = [1, 1]} : vector<10x48xf32> to vector<10x2xf32>
    %115 = vector.extract_strided_slice %74 {offsets = [0, 44], sizes = [10, 2], strides = [1, 1]} : vector<10x48xf32> to vector<10x2xf32>
    %116 = vector.extract_strided_slice %74 {offsets = [0, 46], sizes = [10, 2], strides = [1, 1]} : vector<10x48xf32> to vector<10x2xf32>
    %117 = vector.shape_cast %109 : vector<10x2xf32> to vector<1x10x2xf32>
    %118 = vector.shape_cast %110 : vector<10x2xf32> to vector<1x10x2xf32>
    %119 = vector.shape_cast %111 : vector<10x2xf32> to vector<1x10x2xf32>
    %120 = vector.shape_cast %112 : vector<10x2xf32> to vector<1x10x2xf32>
    %121 = vector.shape_cast %113 : vector<10x2xf32> to vector<1x10x2xf32>
    %122 = vector.shape_cast %114 : vector<10x2xf32> to vector<1x10x2xf32>
    %123 = vector.shape_cast %115 : vector<10x2xf32> to vector<1x10x2xf32>
    %124 = vector.shape_cast %116 : vector<10x2xf32> to vector<1x10x2xf32>
    %125 = tpu.concatenate %117, %118, %119, %120, %121, %122, %123, %124 in 0 : vector<1x10x2xf32>, vector<1x10x2xf32>, vector<1x10x2xf32>, vector<1x10x2xf32>, vector<1x10x2xf32>, vector<1x10x2xf32>, vector<1x10x2xf32>, vector<1x10x2xf32> -> vector<8x10x2xf32>
    "tpu.trace_start"() <{level = 10 : i32, message = "hqd,hkd->hqk"}> : () -> ()
    %cst_31 = arith.constant dense<0.000000e+00> : vector<8x10x10xf32>
    %126 = tpu.matmul %91, %108, %cst_31 {dimension_numbers = #tpu.dot_dimension_numbers<[2], [2], [1], [1], [0, 0, 0, 1, 1, 1], [0], [0]>} : vector<8x10x2xf32>, vector<8x10x2xf32>, vector<8x10x10xf32> -> vector<8x10x10xf32>
    "tpu.trace_stop"() : () -> ()
    %cst_32 = arith.constant 0.707106769 : f32
    %127 = vector.broadcast %cst_32 : f32 to vector<8x10x10xf32>
    %128 = arith.mulf %126, %127 : vector<8x10x10xf32>
    %129 = arith.select %49, %52, %128 : vector<8x10x10xi1>, vector<8x10x10xf32>
    %cst_33 = arith.constant dense<0xFF800000> : vector<8x10xf32>
    %130 = vector.multi_reduction <maximumf>, %129, %cst_33 [2] : vector<8x10x10xf32> to vector<8x10xf32>
    %131 = vector.shape_cast %130 : vector<8x10xf32> to vector<8x10x1xf32>
    %132 = vector.broadcast %131 : vector<8x10x1xf32> to vector<8x10x10xf32>
    %133 = arith.subf %129, %132 : vector<8x10x10xf32>
    %134 = math.exp %133 : vector<8x10x10xf32>
    %cst_34 = arith.constant dense<0.000000e+00> : vector<8x10xf32>
    %135 = vector.multi_reduction <add>, %134, %cst_34 [2] : vector<8x10x10xf32> to vector<8x10xf32>
    %136 = vector.shape_cast %135 : vector<8x10xf32> to vector<8x10x1xf32>
    %137 = vector.broadcast %136 : vector<8x10x1xf32> to vector<8x10x10xf32>
    %138 = arith.divf %134, %137 : vector<8x10x10xf32>
    "tpu.trace_start"() <{level = 10 : i32, message = "hqk,hkd->hqd"}> : () -> ()
    %cst_35 = arith.constant dense<0.000000e+00> : vector<8x10x2xf32>
    %139 = tpu.matmul %138, %125, %cst_35 {dimension_numbers = #tpu.dot_dimension_numbers<[2], [1], [1], [2], [0, 0, 0, 1, 1, 2], [0], [0]>} : vector<8x10x10xf32>, vector<8x10x2xf32>, vector<8x10x2xf32> -> vector<8x10x2xf32>
    "tpu.trace_stop"() : () -> ()
    %140 = vector.extract_strided_slice %138 {offsets = [0, 0, 0], sizes = [8, 5, 5], strides = [1, 1, 1]} : vector<8x10x10xf32> to vector<8x5x5xf32>
    %c0_36 = arith.constant 0 : index
    %c0_37 = arith.constant 0 : index
    %c0_38 = arith.constant 0 : index
    %c0_39 = arith.constant 0 : index
    %141 = vector.load %arg7[%c0_36, %c0_37, %c0_38, %c0_39] : memref<2x8x5x5xf32, #tpu.memory_space<vmem>>, vector<1x8x5x5xf32>
    %142 = vector.shape_cast %141 : vector<1x8x5x5xf32> to vector<8x5x5xf32>
    %143 = vector.shape_cast %140 : vector<8x5x5xf32> to vector<1x8x5x5xf32>
    tpu.vector_store %arg7[%c0_36, %c0_37, %c0_38, %c0_39], %143 {strides = array<i32>} : memref<2x8x5x5xf32, #tpu.memory_space<vmem>>, vector<1x8x5x5xf32>,
    %144 = vector.extract_strided_slice %138 {offsets = [0, 5, 5], sizes = [8, 5, 5], strides = [1, 1, 1]} : vector<8x10x10xf32> to vector<8x5x5xf32>
    %c1_40 = arith.constant 1 : index
    %c0_41 = arith.constant 0 : index
    %c0_42 = arith.constant 0 : index
    %c0_43 = arith.constant 0 : index
    %145 = vector.load %arg7[%c1_40, %c0_41, %c0_42, %c0_43] : memref<2x8x5x5xf32, #tpu.memory_space<vmem>>, vector<1x8x5x5xf32>
    %146 = vector.shape_cast %145 : vector<1x8x5x5xf32> to vector<8x5x5xf32>
    %147 = vector.shape_cast %144 : vector<8x5x5xf32> to vector<1x8x5x5xf32>
    tpu.vector_store %arg7[%c1_40, %c0_41, %c0_42, %c0_43], %147 {strides = array<i32>} : memref<2x8x5x5xf32, #tpu.memory_space<vmem>>, vector<1x8x5x5xf32>,
    %148 = vector.extract_strided_slice %139 {offsets = [0, 0, 0], sizes = [1, 10, 2], strides = [1, 1, 1]} : vector<8x10x2xf32> to vector<1x10x2xf32>
    %149 = vector.shape_cast %148 : vector<1x10x2xf32> to vector<10x2xf32>
    %150 = vector.extract_strided_slice %139 {offsets = [1, 0, 0], sizes = [1, 10, 2], strides = [1, 1, 1]} : vector<8x10x2xf32> to vector<1x10x2xf32>
    %151 = vector.shape_cast %150 : vector<1x10x2xf32> to vector<10x2xf32>
    %152 = vector.extract_strided_slice %139 {offsets = [2, 0, 0], sizes = [1, 10, 2], strides = [1, 1, 1]} : vector<8x10x2xf32> to vector<1x10x2xf32>
    %153 = vector.shape_cast %152 : vector<1x10x2xf32> to vector<10x2xf32>
    %154 = vector.extract_strided_slice %139 {offsets = [3, 0, 0], sizes = [1, 10, 2], strides = [1, 1, 1]} : vector<8x10x2xf32> to vector<1x10x2xf32>
    %155 = vector.shape_cast %154 : vector<1x10x2xf32> to vector<10x2xf32>
    %156 = vector.extract_strided_slice %139 {offsets = [4, 0, 0], sizes = [1, 10, 2], strides = [1, 1, 1]} : vector<8x10x2xf32> to vector<1x10x2xf32>
    %157 = vector.shape_cast %156 : vector<1x10x2xf32> to vector<10x2xf32>
    %158 = vector.extract_strided_slice %139 {offsets = [5, 0, 0], sizes = [1, 10, 2], strides = [1, 1, 1]} : vector<8x10x2xf32> to vector<1x10x2xf32>
    %159 = vector.shape_cast %158 : vector<1x10x2xf32> to vector<10x2xf32>
    %160 = vector.extract_strided_slice %139 {offsets = [6, 0, 0], sizes = [1, 10, 2], strides = [1, 1, 1]} : vector<8x10x2xf32> to vector<1x10x2xf32>
    %161 = vector.shape_cast %160 : vector<1x10x2xf32> to vector<10x2xf32>
    %162 = vector.extract_strided_slice %139 {offsets = [7, 0, 0], sizes = [1, 10, 2], strides = [1, 1, 1]} : vector<8x10x2xf32> to vector<1x10x2xf32>
    %163 = vector.shape_cast %162 : vector<1x10x2xf32> to vector<10x2xf32>
    %164 = tpu.concatenate %149, %151, %153, %155, %157, %159, %161, %163 in 1 : vector<10x2xf32>, vector<10x2xf32>, vector<10x2xf32>, vector<10x2xf32>, vector<10x2xf32>, vector<10x2xf32>, vector<10x2xf32>, vector<10x2xf32> -> vector<10x16xf32>
    %cst_44 = arith.constant dense<0.000000e+00> : vector<10x7xf32>
    %165 = tpu.matmul %164, %58, %cst_44 {dimension_numbers = #tpu.dot_dimension_numbers<[1], [0], [0], [1], [0, 0, 1, 1], [], []>} : vector<10x16xf32>, vector<16x7xf32>, vector<10x7xf32> -> vector<10x7xf32>
    %166 = vector.broadcast %66 : vector<1x7xf32> to vector<10x7xf32>
    %167 = arith.addf %165, %166 : vector<10x7xf32>
    %168 = arith.addf %167, %12 : vector<10x7xf32>
    %cst_45 = arith.constant dense<0.000000e+00> : vector<10xf32>
    %169 = vector.multi_reduction <add>, %168, %cst_45 [1] : vector<10x7xf32> to vector<10xf32>
    %170 = vector.shape_cast %169 : vector<10xf32> to vector<10x1xf32>
    %cst_46 = arith.constant 7.000000e+00 : f32
    %171 = vector.broadcast %cst_46 : f32 to vector<10x1xf32>
    %172 = arith.divf %170, %171 : vector<10x1xf32>
    %173 = vector.broadcast %172 : vector<10x1xf32> to vector<10x7xf32>
    %174 = arith.subf %168, %173 : vector<10x7xf32>
    %175 = arith.mulf %174, %174 : vector<10x7xf32>
    %cst_47 = arith.constant dense<0.000000e+00> : vector<10xf32>
    %176 = vector.multi_reduction <add>, %175, %cst_47 [1] : vector<10x7xf32> to vector<10xf32>
    %177 = vector.shape_cast %176 : vector<10xf32> to vector<10x1xf32>
    %cst_48 = arith.constant 7.000000e+00 : f32
    %178 = vector.broadcast %cst_48 : f32 to vector<10x1xf32>
    %179 = arith.divf %177, %178 : vector<10x1xf32>
    %180 = vector.broadcast %172 : vector<10x1xf32> to vector<10x7xf32>
    %181 = arith.subf %168, %180 : vector<10x7xf32>
    %cst_49 = arith.constant 9.99999974E-6 : f32
    %182 = vector.broadcast %cst_49 : f32 to vector<10x1xf32>
    %183 = arith.addf %179, %182 : vector<10x1xf32>
    %184 = math.rsqrt %183 : vector<10x1xf32>
    %185 = vector.broadcast %184 : vector<10x1xf32> to vector<10x7xf32>
    %186 = arith.mulf %181, %185 : vector<10x7xf32>
    %187 = vector.broadcast %67 : vector<1x7xf32> to vector<10x7xf32>
    %188 = arith.mulf %186, %187 : vector<10x7xf32>
    %189 = vector.broadcast %68 : vector<1x7xf32> to vector<10x7xf32>
    %190 = arith.addf %188, %189 : vector<10x7xf32>
    %cst_50 = arith.constant dense<0.000000e+00> : vector<10x16xf32>
    %191 = tpu.matmul %190, %56, %cst_50 {dimension_numbers = #tpu.dot_dimension_numbers<[1], [0], [0], [1], [0, 0, 1, 1], [], []>} : vector<10x7xf32>, vector<7x16xf32>, vector<10x16xf32> -> vector<10x16xf32>
    %192 = vector.broadcast %65 : vector<1x16xf32> to vector<10x16xf32>
    %193 = arith.addf %191, %192 : vector<10x16xf32>
    %cst_51 = arith.constant 0.000000e+00 : f32
    %194 = vector.broadcast %cst_51 : f32 to vector<10x16xf32>
    %195 = arith.maximumf %193, %194 : vector<10x16xf32>
    %cst_52 = arith.constant dense<0.000000e+00> : vector<10x7xf32>
    %196 = tpu.matmul %195, %60, %cst_52 {dimension_numbers = #tpu.dot_dimension_numbers<[1], [0], [0], [1], [0, 0, 1, 1], [], []>} : vector<10x16xf32>, vector<16x7xf32>, vector<10x7xf32> -> vector<10x7xf32>
    %197 = vector.broadcast %69 : vector<1x7xf32> to vector<10x7xf32>
    %198 = arith.addf %196, %197 : vector<10x7xf32>
    %199 = arith.addf %198, %190 : vector<10x7xf32>
    %cst_53 = arith.constant dense<0.000000e+00> : vector<10xf32>
    %200 = vector.multi_reduction <add>, %199, %cst_53 [1] : vector<10x7xf32> to vector<10xf32>
    %201 = vector.shape_cast %200 : vector<10xf32> to vector<10x1xf32>
    %cst_54 = arith.constant 7.000000e+00 : f32
    %202 = vector.broadcast %cst_54 : f32 to vector<10x1xf32>
    %203 = arith.divf %201, %202 : vector<10x1xf32>
    %204 = vector.broadcast %203 : vector<10x1xf32> to vector<10x7xf32>
    %205 = arith.subf %199, %204 : vector<10x7xf32>
    %206 = arith.mulf %205, %205 : vector<10x7xf32>
    %cst_55 = arith.constant dense<0.000000e+00> : vector<10xf32>
    %207 = vector.multi_reduction <add>, %206, %cst_55 [1] : vector<10x7xf32> to vector<10xf32>
    %208 = vector.shape_cast %207 : vector<10xf32> to vector<10x1xf32>
    %cst_56 = arith.constant 7.000000e+00 : f32
    %209 = vector.broadcast %cst_56 : f32 to vector<10x1xf32>
    %210 = arith.divf %208, %209 : vector<10x1xf32>
    %211 = vector.broadcast %203 : vector<10x1xf32> to vector<10x7xf32>
    %212 = arith.subf %199, %211 : vector<10x7xf32>
    %cst_57 = arith.constant 9.99999974E-6 : f32
    %213 = vector.broadcast %cst_57 : f32 to vector<10x1xf32>
    %214 = arith.addf %210, %213 : vector<10x1xf32>
    %215 = math.rsqrt %214 : vector<10x1xf32>
    %216 = vector.broadcast %215 : vector<10x1xf32> to vector<10x7xf32>
    %217 = arith.mulf %212, %216 : vector<10x7xf32>
    %218 = vector.broadcast %70 : vector<1x7xf32> to vector<10x7xf32>
    %219 = arith.mulf %217, %218 : vector<10x7xf32>
    %220 = vector.broadcast %71 : vector<1x7xf32> to vector<10x7xf32>
    %221 = arith.addf %219, %220 : vector<10x7xf32>
    %c1_58 = arith.constant 1 : index
    %c0_59 = arith.constant 0 : index
    %c0_60 = arith.constant 0 : index
    %222 = vector.load %arg3[%c1_58, %c0_59, %c0_60] : memref<2x7x64xf32, #tpu.memory_space<vmem>>, vector<1x7x64xf32>
    %223 = vector.shape_cast %222 : vector<1x7x64xf32> to vector<7x64xf32>
    %224 = vector.extract_strided_slice %223 {offsets = [0, 0], sizes = [7, 48], strides = [1, 1]} : vector<7x64xf32> to vector<7x48xf32>
    %225 = vector.extract_strided_slice %223 {offsets = [0, 48], sizes = [7, 16], strides = [1, 1]} : vector<7x64xf32> to vector<7x16xf32>
    %c1_61 = arith.constant 1 : index
    %c0_62 = arith.constant 0 : index
    %c0_63 = arith.constant 0 : index
    %c0_64 = arith.constant 0 : index
    %226 = vector.load %arg4[%c1_61, %c0_62, %c0_63, %c0_64] : memref<2x2x16x7xf32, #tpu.memory_space<vmem>>, vector<1x1x16x7xf32>
    %227 = vector.shape_cast %226 : vector<1x1x16x7xf32> to vector<16x7xf32>
    %c1_65 = arith.constant 1 : index
    %c1_66 = arith.constant 1 : index
    %c0_67 = arith.constant 0 : index
    %c0_68 = arith.constant 0 : index
    %228 = vector.load %arg4[%c1_65, %c1_66, %c0_67, %c0_68] : memref<2x2x16x7xf32, #tpu.memory_space<vmem>>, vector<1x1x16x7xf32>
    %229 = vector.shape_cast %228 : vector<1x1x16x7xf32> to vector<16x7xf32>
    %c1_69 = arith.constant 1 : index
    %c0_70 = arith.constant 0 : index
    %c0_71 = arith.constant 0 : index
    %230 = vector.load %arg5[%c1_69, %c0_70, %c0_71] : memref<2x7x64xf32, #tpu.memory_space<vmem>>, vector<1x7x64xf32>
    %231 = vector.shape_cast %230 : vector<1x7x64xf32> to vector<7x64xf32>
    %232 = vector.extract_strided_slice %231 {offsets = [0, 0], sizes = [1, 64], strides = [1, 1]} : vector<7x64xf32> to vector<1x64xf32>
    %233 = vector.extract_strided_slice %232 {offsets = [0, 0], sizes = [1, 48], strides = [1, 1]} : vector<1x64xf32> to vector<1x48xf32>
    %234 = vector.extract_strided_slice %232 {offsets = [0, 48], sizes = [1, 16], strides = [1, 1]} : vector<1x64xf32> to vector<1x16xf32>
    %235 = vector.extract_strided_slice %231 {offsets = [1, 0], sizes = [1, 7], strides = [1, 1]} : vector<7x64xf32> to vector<1x7xf32>
    %236 = vector.extract_strided_slice %231 {offsets = [2, 0], sizes = [1, 7], strides = [1, 1]} : vector<7x64xf32> to vector<1x7xf32>
    %237 = vector.extract_strided_slice %231 {offsets = [3, 0], sizes = [1, 7], strides = [1, 1]} : vector<7x64xf32> to vector<1x7xf32>
    %238 = vector.extract_strided_slice %231 {offsets = [4, 0], sizes = [1, 7], strides = [1, 1]} : vector<7x64xf32> to vector<1x7xf32>
    %239 = vector.extract_strided_slice %231 {offsets = [5, 0], sizes = [1, 7], strides = [1, 1]} : vector<7x64xf32> to vector<1x7xf32>
    %240 = vector.extract_strided_slice %231 {offsets = [6, 0], sizes = [1, 7], strides = [1, 1]} : vector<7x64xf32> to vector<1x7xf32>
    %cst_72 = arith.constant dense<0.000000e+00> : vector<10x48xf32>
    %241 = tpu.matmul %221, %224, %cst_72 {dimension_numbers = #tpu.dot_dimension_numbers<[1], [0], [0], [1], [0, 0, 1, 1], [], []>} : vector<10x7xf32>, vector<7x48xf32>, vector<10x48xf32> -> vector<10x48xf32>
    %242 = vector.broadcast %233 : vector<1x48xf32> to vector<10x48xf32>
    %243 = arith.addf %241, %242 : vector<10x48xf32>
    %244 = vector.extract_strided_slice %243 {offsets = [0, 0], sizes = [10, 2], strides = [1, 1]} : vector<10x48xf32> to vector<10x2xf32>
    %245 = vector.extract_strided_slice %243 {offsets = [0, 2], sizes = [10, 2], strides = [1, 1]} : vector<10x48xf32> to vector<10x2xf32>
    %246 = vector.extract_strided_slice %243 {offsets = [0, 4], sizes = [10, 2], strides = [1, 1]} : vector<10x48xf32> to vector<10x2xf32>
    %247 = vector.extract_strided_slice %243 {offsets = [0, 6], sizes = [10, 2], strides = [1, 1]} : vector<10x48xf32> to vector<10x2xf32>
    %248 = vector.extract_strided_slice %243 {offsets = [0, 8], sizes = [10, 2], strides = [1, 1]} : vector<10x48xf32> to vector<10x2xf32>
    %249 = vector.extract_strided_slice %243 {offsets = [0, 10], sizes = [10, 2], strides = [1, 1]} : vector<10x48xf32> to vector<10x2xf32>
    %250 = vector.extract_strided_slice %243 {offsets = [0, 12], sizes = [10, 2], strides = [1, 1]} : vector<10x48xf32> to vector<10x2xf32>
    %251 = vector.extract_strided_slice %243 {offsets = [0, 14], sizes = [10, 2], strides = [1, 1]} : vector<10x48xf32> to vector<10x2xf32>
    %252 = vector.shape_cast %244 : vector<10x2xf32> to vector<1x10x2xf32>
    %253 = vector.shape_cast %245 : vector<10x2xf32> to vector<1x10x2xf32>
    %254 = vector.shape_cast %246 : vector<10x2xf32> to vector<1x10x2xf32>
    %255 = vector.shape_cast %247 : vector<10x2xf32> to vector<1x10x2xf32>
    %256 = vector.shape_cast %248 : vector<10x2xf32> to vector<1x10x2xf32>
    %257 = vector.shape_cast %249 : vector<10x2xf32> to vector<1x10x2xf32>
    %258 = vector.shape_cast %250 : vector<10x2xf32> to vector<1x10x2xf32>
    %259 = vector.shape_cast %251 : vector<10x2xf32> to vector<1x10x2xf32>
    %260 = tpu.concatenate %252, %253, %254, %255, %256, %257, %258, %259 in 0 : vector<1x10x2xf32>, vector<1x10x2xf32>, vector<1x10x2xf32>, vector<1x10x2xf32>, vector<1x10x2xf32>, vector<1x10x2xf32>, vector<1x10x2xf32>, vector<1x10x2xf32> -> vector<8x10x2xf32>
    %261 = vector.extract_strided_slice %243 {offsets = [0, 16], sizes = [10, 2], strides = [1, 1]} : vector<10x48xf32> to vector<10x2xf32>
    %262 = vector.extract_strided_slice %243 {offsets = [0, 18], sizes = [10, 2], strides = [1, 1]} : vector<10x48xf32> to vector<10x2xf32>
    %263 = vector.extract_strided_slice %243 {offsets = [0, 20], sizes = [10, 2], strides = [1, 1]} : vector<10x48xf32> to vector<10x2xf32>
    %264 = vector.extract_strided_slice %243 {offsets = [0, 22], sizes = [10, 2], strides = [1, 1]} : vector<10x48xf32> to vector<10x2xf32>
    %265 = vector.extract_strided_slice %243 {offsets = [0, 24], sizes = [10, 2], strides = [1, 1]} : vector<10x48xf32> to vector<10x2xf32>
    %266 = vector.extract_strided_slice %243 {offsets = [0, 26], sizes = [10, 2], strides = [1, 1]} : vector<10x48xf32> to vector<10x2xf32>
    %267 = vector.extract_strided_slice %243 {offsets = [0, 28], sizes = [10, 2], strides = [1, 1]} : vector<10x48xf32> to vector<10x2xf32>
    %268 = vector.extract_strided_slice %243 {offsets = [0, 30], sizes = [10, 2], strides = [1, 1]} : vector<10x48xf32> to vector<10x2xf32>
    %269 = vector.shape_cast %261 : vector<10x2xf32> to vector<1x10x2xf32>
    %270 = vector.shape_cast %262 : vector<10x2xf32> to vector<1x10x2xf32>
    %271 = vector.shape_cast %263 : vector<10x2xf32> to vector<1x10x2xf32>
    %272 = vector.shape_cast %264 : vector<10x2xf32> to vector<1x10x2xf32>
    %273 = vector.shape_cast %265 : vector<10x2xf32> to vector<1x10x2xf32>
    %274 = vector.shape_cast %266 : vector<10x2xf32> to vector<1x10x2xf32>
    %275 = vector.shape_cast %267 : vector<10x2xf32> to vector<1x10x2xf32>
    %276 = vector.shape_cast %268 : vector<10x2xf32> to vector<1x10x2xf32>
    %277 = tpu.concatenate %269, %270, %271, %272, %273, %274, %275, %276 in 0 : vector<1x10x2xf32>, vector<1x10x2xf32>, vector<1x10x2xf32>, vector<1x10x2xf32>, vector<1x10x2xf32>, vector<1x10x2xf32>, vector<1x10x2xf32>, vector<1x10x2xf32> -> vector<8x10x2xf32>
    %278 = vector.extract_strided_slice %243 {offsets = [0, 32], sizes = [10, 2], strides = [1, 1]} : vector<10x48xf32> to vector<10x2xf32>
    %279 = vector.extract_strided_slice %243 {offsets = [0, 34], sizes = [10, 2], strides = [1, 1]} : vector<10x48xf32> to vector<10x2xf32>
    %280 = vector.extract_strided_slice %243 {offsets = [0, 36], sizes = [10, 2], strides = [1, 1]} : vector<10x48xf32> to vector<10x2xf32>
    %281 = vector.extract_strided_slice %243 {offsets = [0, 38], sizes = [10, 2], strides = [1, 1]} : vector<10x48xf32> to vector<10x2xf32>
    %282 = vector.extract_strided_slice %243 {offsets = [0, 40], sizes = [10, 2], strides = [1, 1]} : vector<10x48xf32> to vector<10x2xf32>
    %283 = vector.extract_strided_slice %243 {offsets = [0, 42], sizes = [10, 2], strides = [1, 1]} : vector<10x48xf32> to vector<10x2xf32>
    %284 = vector.extract_strided_slice %243 {offsets = [0, 44], sizes = [10, 2], strides = [1, 1]} : vector<10x48xf32> to vector<10x2xf32>
    %285 = vector.extract_strided_slice %243 {offsets = [0, 46], sizes = [10, 2], strides = [1, 1]} : vector<10x48xf32> to vector<10x2xf32>
    %286 = vector.shape_cast %278 : vector<10x2xf32> to vector<1x10x2xf32>
    %287 = vector.shape_cast %279 : vector<10x2xf32> to vector<1x10x2xf32>
    %288 = vector.shape_cast %280 : vector<10x2xf32> to vector<1x10x2xf32>
    %289 = vector.shape_cast %281 : vector<10x2xf32> to vector<1x10x2xf32>
    %290 = vector.shape_cast %282 : vector<10x2xf32> to vector<1x10x2xf32>
    %291 = vector.shape_cast %283 : vector<10x2xf32> to vector<1x10x2xf32>
    %292 = vector.shape_cast %284 : vector<10x2xf32> to vector<1x10x2xf32>
    %293 = vector.shape_cast %285 : vector<10x2xf32> to vector<1x10x2xf32>
    %294 = tpu.concatenate %286, %287, %288, %289, %290, %291, %292, %293 in 0 : vector<1x10x2xf32>, vector<1x10x2xf32>, vector<1x10x2xf32>, vector<1x10x2xf32>, vector<1x10x2xf32>, vector<1x10x2xf32>, vector<1x10x2xf32>, vector<1x10x2xf32> -> vector<8x10x2xf32>
    "tpu.trace_start"() <{level = 10 : i32, message = "hqd,hkd->hqk"}> : () -> ()
    %cst_73 = arith.constant dense<0.000000e+00> : vector<8x10x10xf32>
    %295 = tpu.matmul %260, %277, %cst_73 {dimension_numbers = #tpu.dot_dimension_numbers<[2], [2], [1], [1], [0, 0, 0, 1, 1, 1], [0], [0]>} : vector<8x10x2xf32>, vector<8x10x2xf32>, vector<8x10x10xf32> -> vector<8x10x10xf32>
    "tpu.trace_stop"() : () -> ()
    %cst_74 = arith.constant 0.707106769 : f32
    %296 = vector.broadcast %cst_74 : f32 to vector<8x10x10xf32>
    %297 = arith.mulf %295, %296 : vector<8x10x10xf32>
    %298 = arith.select %49, %52, %297 : vector<8x10x10xi1>, vector<8x10x10xf32>
    %cst_75 = arith.constant dense<0xFF800000> : vector<8x10xf32>
    %299 = vector.multi_reduction <maximumf>, %298, %cst_75 [2] : vector<8x10x10xf32> to vector<8x10xf32>
    %300 = vector.shape_cast %299 : vector<8x10xf32> to vector<8x10x1xf32>
    %301 = vector.broadcast %300 : vector<8x10x1xf32> to vector<8x10x10xf32>
    %302 = arith.subf %298, %301 : vector<8x10x10xf32>
    %303 = math.exp %302 : vector<8x10x10xf32>
    %cst_76 = arith.constant dense<0.000000e+00> : vector<8x10xf32>
    %304 = vector.multi_reduction <add>, %303, %cst_76 [2] : vector<8x10x10xf32> to vector<8x10xf32>
    %305 = vector.shape_cast %304 : vector<8x10xf32> to vector<8x10x1xf32>
    %306 = vector.broadcast %305 : vector<8x10x1xf32> to vector<8x10x10xf32>
    %307 = arith.divf %303, %306 : vector<8x10x10xf32>
    "tpu.trace_start"() <{level = 10 : i32, message = "hqk,hkd->hqd"}> : () -> ()
    %cst_77 = arith.constant dense<0.000000e+00> : vector<8x10x2xf32>
    %308 = tpu.matmul %307, %294, %cst_77 {dimension_numbers = #tpu.dot_dimension_numbers<[2], [1], [1], [2], [0, 0, 0, 1, 1, 2], [0], [0]>} : vector<8x10x10xf32>, vector<8x10x2xf32>, vector<8x10x2xf32> -> vector<8x10x2xf32>
    "tpu.trace_stop"() : () -> ()
    %309 = vector.extract_strided_slice %307 {offsets = [0, 0, 0], sizes = [8, 5, 5], strides = [1, 1, 1]} : vector<8x10x10xf32> to vector<8x5x5xf32>
    %c0_78 = arith.constant 0 : index
    %c0_79 = arith.constant 0 : index
    %c0_80 = arith.constant 0 : index
    %c0_81 = arith.constant 0 : index
    %310 = vector.load %arg8[%c0_78, %c0_79, %c0_80, %c0_81] : memref<2x8x5x5xf32, #tpu.memory_space<vmem>>, vector<1x8x5x5xf32>
    %311 = vector.shape_cast %310 : vector<1x8x5x5xf32> to vector<8x5x5xf32>
    %312 = vector.shape_cast %309 : vector<8x5x5xf32> to vector<1x8x5x5xf32>
    tpu.vector_store %arg8[%c0_78, %c0_79, %c0_80, %c0_81], %312 {strides = array<i32>} : memref<2x8x5x5xf32, #tpu.memory_space<vmem>>, vector<1x8x5x5xf32>,
    %313 = vector.extract_strided_slice %307 {offsets = [0, 5, 5], sizes = [8, 5, 5], strides = [1, 1, 1]} : vector<8x10x10xf32> to vector<8x5x5xf32>
    %c1_82 = arith.constant 1 : index
    %c0_83 = arith.constant 0 : index
    %c0_84 = arith.constant 0 : index
    %c0_85 = arith.constant 0 : index
    %314 = vector.load %arg8[%c1_82, %c0_83, %c0_84, %c0_85] : memref<2x8x5x5xf32, #tpu.memory_space<vmem>>, vector<1x8x5x5xf32>
    %315 = vector.shape_cast %314 : vector<1x8x5x5xf32> to vector<8x5x5xf32>
    %316 = vector.shape_cast %313 : vector<8x5x5xf32> to vector<1x8x5x5xf32>
    tpu.vector_store %arg8[%c1_82, %c0_83, %c0_84, %c0_85], %316 {strides = array<i32>} : memref<2x8x5x5xf32, #tpu.memory_space<vmem>>, vector<1x8x5x5xf32>,
    %317 = vector.extract_strided_slice %308 {offsets = [0, 0, 0], sizes = [1, 10, 2], strides = [1, 1, 1]} : vector<8x10x2xf32> to vector<1x10x2xf32>
    %318 = vector.shape_cast %317 : vector<1x10x2xf32> to vector<10x2xf32>
    %319 = vector.extract_strided_slice %308 {offsets = [1, 0, 0], sizes = [1, 10, 2], strides = [1, 1, 1]} : vector<8x10x2xf32> to vector<1x10x2xf32>
    %320 = vector.shape_cast %319 : vector<1x10x2xf32> to vector<10x2xf32>
    %321 = vector.extract_strided_slice %308 {offsets = [2, 0, 0], sizes = [1, 10, 2], strides = [1, 1, 1]} : vector<8x10x2xf32> to vector<1x10x2xf32>
    %322 = vector.shape_cast %321 : vector<1x10x2xf32> to vector<10x2xf32>
    %323 = vector.extract_strided_slice %308 {offsets = [3, 0, 0], sizes = [1, 10, 2], strides = [1, 1, 1]} : vector<8x10x2xf32> to vector<1x10x2xf32>
    %324 = vector.shape_cast %323 : vector<1x10x2xf32> to vector<10x2xf32>
    %325 = vector.extract_strided_slice %308 {offsets = [4, 0, 0], sizes = [1, 10, 2], strides = [1, 1, 1]} : vector<8x10x2xf32> to vector<1x10x2xf32>
    %326 = vector.shape_cast %325 : vector<1x10x2xf32> to vector<10x2xf32>
    %327 = vector.extract_strided_slice %308 {offsets = [5, 0, 0], sizes = [1, 10, 2], strides = [1, 1, 1]} : vector<8x10x2xf32> to vector<1x10x2xf32>
    %328 = vector.shape_cast %327 : vector<1x10x2xf32> to vector<10x2xf32>
    %329 = vector.extract_strided_slice %308 {offsets = [6, 0, 0], sizes = [1, 10, 2], strides = [1, 1, 1]} : vector<8x10x2xf32> to vector<1x10x2xf32>
    %330 = vector.shape_cast %329 : vector<1x10x2xf32> to vector<10x2xf32>
    %331 = vector.extract_strided_slice %308 {offsets = [7, 0, 0], sizes = [1, 10, 2], strides = [1, 1, 1]} : vector<8x10x2xf32> to vector<1x10x2xf32>
    %332 = vector.shape_cast %331 : vector<1x10x2xf32> to vector<10x2xf32>
    %333 = tpu.concatenate %318, %320, %322, %324, %326, %328, %330, %332 in 1 : vector<10x2xf32>, vector<10x2xf32>, vector<10x2xf32>, vector<10x2xf32>, vector<10x2xf32>, vector<10x2xf32>, vector<10x2xf32>, vector<10x2xf32> -> vector<10x16xf32>
    %cst_86 = arith.constant dense<0.000000e+00> : vector<10x7xf32>
    %334 = tpu.matmul %333, %227, %cst_86 {dimension_numbers = #tpu.dot_dimension_numbers<[1], [0], [0], [1], [0, 0, 1, 1], [], []>} : vector<10x16xf32>, vector<16x7xf32>, vector<10x7xf32> -> vector<10x7xf32>
    %335 = vector.broadcast %235 : vector<1x7xf32> to vector<10x7xf32>
    %336 = arith.addf %334, %335 : vector<10x7xf32>
    %337 = arith.addf %336, %221 : vector<10x7xf32>
    %cst_87 = arith.constant dense<0.000000e+00> : vector<10xf32>
    %338 = vector.multi_reduction <add>, %337, %cst_87 [1] : vector<10x7xf32> to vector<10xf32>
    %339 = vector.shape_cast %338 : vector<10xf32> to vector<10x1xf32>
    %cst_88 = arith.constant 7.000000e+00 : f32
    %340 = vector.broadcast %cst_88 : f32 to vector<10x1xf32>
    %341 = arith.divf %339, %340 : vector<10x1xf32>
    %342 = vector.broadcast %341 : vector<10x1xf32> to vector<10x7xf32>
    %343 = arith.subf %337, %342 : vector<10x7xf32>
    %344 = arith.mulf %343, %343 : vector<10x7xf32>
    %cst_89 = arith.constant dense<0.000000e+00> : vector<10xf32>
    %345 = vector.multi_reduction <add>, %344, %cst_89 [1] : vector<10x7xf32> to vector<10xf32>
    %346 = vector.shape_cast %345 : vector<10xf32> to vector<10x1xf32>
    %cst_90 = arith.constant 7.000000e+00 : f32
    %347 = vector.broadcast %cst_90 : f32 to vector<10x1xf32>
    %348 = arith.divf %346, %347 : vector<10x1xf32>
    %349 = vector.broadcast %341 : vector<10x1xf32> to vector<10x7xf32>
    %350 = arith.subf %337, %349 : vector<10x7xf32>
    %cst_91 = arith.constant 9.99999974E-6 : f32
    %351 = vector.broadcast %cst_91 : f32 to vector<10x1xf32>
    %352 = arith.addf %348, %351 : vector<10x1xf32>
    %353 = math.rsqrt %352 : vector<10x1xf32>
    %354 = vector.broadcast %353 : vector<10x1xf32> to vector<10x7xf32>
    %355 = arith.mulf %350, %354 : vector<10x7xf32>
    %356 = vector.broadcast %236 : vector<1x7xf32> to vector<10x7xf32>
    %357 = arith.mulf %355, %356 : vector<10x7xf32>
    %358 = vector.broadcast %237 : vector<1x7xf32> to vector<10x7xf32>
    %359 = arith.addf %357, %358 : vector<10x7xf32>
    %cst_92 = arith.constant dense<0.000000e+00> : vector<10x16xf32>
    %360 = tpu.matmul %359, %225, %cst_92 {dimension_numbers = #tpu.dot_dimension_numbers<[1], [0], [0], [1], [0, 0, 1, 1], [], []>} : vector<10x7xf32>, vector<7x16xf32>, vector<10x16xf32> -> vector<10x16xf32>
    %361 = vector.broadcast %234 : vector<1x16xf32> to vector<10x16xf32>
    %362 = arith.addf %360, %361 : vector<10x16xf32>
    %cst_93 = arith.constant 0.000000e+00 : f32
    %363 = vector.broadcast %cst_93 : f32 to vector<10x16xf32>
    %364 = arith.maximumf %362, %363 : vector<10x16xf32>
    %cst_94 = arith.constant dense<0.000000e+00> : vector<10x7xf32>
    %365 = tpu.matmul %364, %229, %cst_94 {dimension_numbers = #tpu.dot_dimension_numbers<[1], [0], [0], [1], [0, 0, 1, 1], [], []>} : vector<10x16xf32>, vector<16x7xf32>, vector<10x7xf32> -> vector<10x7xf32>
    %366 = vector.broadcast %238 : vector<1x7xf32> to vector<10x7xf32>
    %367 = arith.addf %365, %366 : vector<10x7xf32>
    %368 = arith.addf %367, %359 : vector<10x7xf32>
    %cst_95 = arith.constant dense<0.000000e+00> : vector<10xf32>
    %369 = vector.multi_reduction <add>, %368, %cst_95 [1] : vector<10x7xf32> to vector<10xf32>
    %370 = vector.shape_cast %369 : vector<10xf32> to vector<10x1xf32>
    %cst_96 = arith.constant 7.000000e+00 : f32
    %371 = vector.broadcast %cst_96 : f32 to vector<10x1xf32>
    %372 = arith.divf %370, %371 : vector<10x1xf32>
    %373 = vector.broadcast %372 : vector<10x1xf32> to vector<10x7xf32>
    %374 = arith.subf %368, %373 : vector<10x7xf32>
    %375 = arith.mulf %374, %374 : vector<10x7xf32>
    %cst_97 = arith.constant dense<0.000000e+00> : vector<10xf32>
    %376 = vector.multi_reduction <add>, %375, %cst_97 [1] : vector<10x7xf32> to vector<10xf32>
    %377 = vector.shape_cast %376 : vector<10xf32> to vector<10x1xf32>
    %cst_98 = arith.constant 7.000000e+00 : f32
    %378 = vector.broadcast %cst_98 : f32 to vector<10x1xf32>
    %379 = arith.divf %377, %378 : vector<10x1xf32>
    %380 = vector.broadcast %372 : vector<10x1xf32> to vector<10x7xf32>
    %381 = arith.subf %368, %380 : vector<10x7xf32>
    %cst_99 = arith.constant 9.99999974E-6 : f32
    %382 = vector.broadcast %cst_99 : f32 to vector<10x1xf32>
    %383 = arith.addf %379, %382 : vector<10x1xf32>
    %384 = math.rsqrt %383 : vector<10x1xf32>
    %385 = vector.broadcast %384 : vector<10x1xf32> to vector<10x7xf32>
    %386 = arith.mulf %381, %385 : vector<10x7xf32>
    %387 = vector.broadcast %239 : vector<1x7xf32> to vector<10x7xf32>
    %388 = arith.mulf %386, %387 : vector<10x7xf32>
    %389 = vector.broadcast %240 : vector<1x7xf32> to vector<10x7xf32>
    %390 = arith.addf %388, %389 : vector<10x7xf32>
    %c0_100 = arith.constant 0 : index
    %c0_101 = arith.constant 0 : index
    %391 = vector.load %arg6[%c0_100, %c0_101] : memref<10x7xf32, #tpu.memory_space<vmem>>, vector<10x7xf32>
    tpu.vector_store %arg6[%c0_100, %c0_101], %390 {strides = array<i32>} : memref<10x7xf32, #tpu.memory_space<vmem>>, vector<10x7xf32>,
    return
  }
}

</mosaic_0001>

<llo_original>
// kernel: encoder_forward.1
$region0: #{encoder_forward.1}
  #allocation0 [shape = 'u32[]', space=smem, size = 0x4, offset = 0x4, fixed_abs, tag = 'smem constant byte address 0x4 - core index']
  #allocation1 [shape = 'u32[72,128]{1,0:T(1,128)}', space=vmem, size = 0x9000, scoped, tag = 'internal scratch']
  %s0 = inlined_call_operand.vmem [shape: s32[10,1], index: 0, kind: input, shape index: {}]
  %s1 = inlined_call_operand.vmem [shape: s32[1,10], index: 1, kind: input, shape index: {}]
  %s2 = inlined_call_operand.vmem [shape: f32[18,7], index: 2, kind: input, shape index: {}]
  %s3 = inlined_call_operand.vmem [shape: f32[2,7,64], index: 3, kind: input, shape index: {}]
  %s4 = inlined_call_operand.vmem [shape: f32[2,2,16,7], index: 4, kind: input, shape index: {}]
  %s5 = inlined_call_operand.vmem [shape: f32[2,7,64], index: 5, kind: input, shape index: {}]
  %s6 = inlined_call_operand.vmem [shape: f32[10,7], index: 6, kind: output, shape index: {0}]
  %s7 = inlined_call_operand.vmem [shape: f32[2,8,5,5], index: 7, kind: output, shape index: {1}]
  %s8 = inlined_call_operand.vmem [shape: f32[2,8,5,5], index: 8, kind: output, shape index: {2}]
  %9 = xla_tuple %s6, %s7, %s8
  %s10 = sld [smem:[#allocation0]]
  $region50: #{encoder_forward.1} parent=0
    _
  %s12 = ssub.s32 1, %s10
  %s13 = scalar_select 0, %s12, %s10
  // Predicated region
  $region2: #{encoder_forward.1} parent=0 // pred_check
    _
  $region3: #{encoder_forward.1} parent=0 // pred_check_branch
    %15 = sbr.rel (0) target = $region5
  $region4: #{encoder_forward.1} parent=0 // pred_region
    _
  $region5: #{encoder_forward.1} parent=0 // pred_fallthru
    _
  // Predicated region
  $region6: #{encoder_forward.1} parent=0 // pred_check
    _
  $region7: #{encoder_forward.1} parent=0 // pred_check_branch
    %17 = sbr.rel (0) target = $region9
  $region8: #{encoder_forward.1} parent=0 // pred_region
    _
  $region9: #{encoder_forward.1} parent=0 // pred_fallthru
    _
  // Predicated region
  $region10: #{encoder_forward.1} parent=0 // pred_check
    _
  $region11: #{encoder_forward.1} parent=0 // pred_check_branch
    %19 = sbr.rel (0) target = $region13
  $region12: #{encoder_forward.1} parent=0 // pred_region
    _
  $region13: #{encoder_forward.1} parent=0 // pred_fallthru
    _
  // Predicated region
  $region14: #{encoder_forward.1} parent=0 // pred_check
    _
  $region15: #{encoder_forward.1} parent=0 // pred_check_branch
    %21 = sbr.rel (0) target = $region17
  $region16: #{encoder_forward.1} parent=0 // pred_region
    _
  $region17: #{encoder_forward.1} parent=0 // pred_fallthru
    _
  // Predicated region
  $region18: #{encoder_forward.1} parent=0 // pred_check
    _
  $region19: #{encoder_forward.1} parent=0 // pred_check_branch
    %23 = sbr.rel (0) target = $region21
  $region20: #{encoder_forward.1} parent=0 // pred_region
    _
  $region21: #{encoder_forward.1} parent=0 // pred_fallthru
    _
  // Predicated region
  $region22: #{encoder_forward.1} parent=0 // pred_check
    _
  $region23: #{encoder_forward.1} parent=0 // pred_check_branch
    %25 = sbr.rel (0) target = $region25
  $region24: #{encoder_forward.1} parent=0 // pred_region
    _
  $region25: #{encoder_forward.1} parent=0 // pred_fallthru
    _
  %v26 = vld [vmem:[%s0] sm:$0xff]
  %v27 = vld [vmem:[%s0 + $0x8] sm:$0x3]
  %v28 = vld [vmem:[%s1] sm:$0x1]
  %v29 = vlaneseq
  %v30 = vand.u32 %v29, 127
  %31 = vset.pattern.permute.xlu0 0
  %32 = vperm.xlu0 %31, %v26
  %v33 = vpop.permute.xlu0 %32
  %34 = vset.pattern.permute.xlu0 0
  %35 = vperm.xlu0 %34, %v27
  %v36 = vpop.permute.xlu0 %35
  %vm37 = vcmp.eq.s32.totalorder %v30, %v33
  %vm38 = vcmp.eq.s32.totalorder %v30, %v36
  %v39 = vsel %vm37, 1.0, 0.0
  %v40 = vsel %vm38, 1.0, 0.0
  %v41 = vld [vmem:[%s2] sm:$0x1f]
  %v42 = vld [vmem:[%s2 + $0x8] sm:$0xff]
  %v43 = vld [vmem:[%s2 + $0x10] sm:$0x3]
  %vm44 = vcmask 39936
  %v46 = vsel %vm44, %v39, 0
  %v49 = vsel %vm44, %v40, 0
  %vm51 = vcmask 1044480
  %v53 = vsel %vm51, %v41, 0
  %55 = vmatpush.msra.mxu0 0.0
  %56 = vmatpush.msra.mxu0 0.0
  %57 = vmatpush.msra.mxu0 0.0
  %58 = vmatpush.msra.mxu0 0.0
  %59 = vmatpush.msra.mxu0 0.0
  %60 = vmatpush.msra.mxu0 0.0
  %61 = vmatpush.msra.mxu0 0.0
  %62 = vmatpush.msra.mxu0 0.0
  %63 = vmatpush.msra.mxu0 0.0
  %64 = vmatpush.msra.mxu0 0.0
  %65 = vmatpush.msra.mxu0 0.0
  %66 = vmatpush.msra.mxu0 0.0
  %67 = vmatpush.msra.mxu0 0.0
  %68 = vmatpush.msra.mxu0 0.0
  %69 = vmatpush.msra.mxu0 0.0
  %70 = vmatpush.msra.mxu0 %v53
  %71 = vmatmul.f32.gmra.mxu0 %v46
  %v72 = vpop.f32.mrf.mxu0
  %v73 = vadd.f32 %v42, %v72
  %74 = vmatmul.f32.gmra.mxu0 %v49
  %v75 = vpop.f32.mrf.mxu0
  %v76 = vadd.f32 %v43, %v75
  %77 = vdwg.mxu0
  %v78 = vperm.slane %v28, 0
  %vm79 = vcmp.eq.s32.totalorder %v78, 0
  %v80 = vlaneseq
  %v81 = vshrl.u32 %v80, 7
  %v82 = vadd.s32 %v81, 8
  %vm83 = vcmp.ge.s32.totalorder %v81, 0
  %vm84 = vcmp.ge.s32.totalorder %v82, 0
  %vm85 = vcmp.lt.s32.totalorder %v81, 5
  %vm86 = vcmp.lt.s32.totalorder %v82, 5
  %vm87 = vmand %vm83, %vm85
  %vm88 = vmand %vm84, %vm86
  %vm89 = vcmp.ge.s32.totalorder %v30, 0
  %vm90 = vcmp.lt.s32.totalorder %v30, 5
  %vm91 = vmand %vm89, %vm90
  %vm92 = vmand %vm87, %vm91
  %vm93 = vmand %vm88, %vm91
  %vm94 = vcmp.ge.s32.totalorder %v81, 5
  %vm95 = vcmp.ge.s32.totalorder %v82, 5
  %vm96 = vcmp.lt.s32.totalorder %v81, 10
  %vm97 = vcmp.lt.s32.totalorder %v82, 10
  %vm98 = vmand %vm94, %vm96
  %vm99 = vmand %vm95, %vm97
  %vm100 = vcmp.ge.s32.totalorder %v30, 5
  %vm101 = vcmp.lt.s32.totalorder %v30, 10
  %vm102 = vmand %vm100, %vm101
  %vm103 = vmand %vm98, %vm102
  %vm104 = vmand %vm99, %vm102
  %vm105 = vmor %vm92, %vm103
  %vm106 = vmor %vm93, %vm104
  %vm107 = vmxor %vm105, 1
  %vm108 = vmxor %vm106, 1
  %vm109 = vmor %vm107, %vm79
  %vm110 = vmor %vm108, %vm79
  %v111 = vsel %vm107, -1e+30, -1e+09
  %v112 = vsel %vm108, -1e+30, -1e+09
  %v113 = vsel %vm109, 1, 0
  %v114 = vsel %vm110, 1, 0
  %vm115 = vcmp.eq.s32.totalorder %v113, 1
  %vm116 = vcmp.eq.s32.totalorder %v114, 1
  %v117 = vld [vmem:[%s3] sm:$0x7f]
  %v118 = vld [vmem:[%s4] sm:$0xff]
  %v119 = vld [vmem:[%s4 + $0x8] sm:$0xff]
  %s120 = scalar_lea.vmem %s4, 16
  %v121 = vld [vmem:[%s120] sm:$0xff]
  %v122 = vld [vmem:[%s120 + $0x8] sm:$0xff]
  %v123 = vld [vmem:[%s5] sm:$0x7f]
  %v124 = vperm.slane %v123, 0
  %vm125 = vcmask 56320
  %v127 = vsel %vm125, %v73, 0
  %v130 = vsel %vm125, %v76, 0
  %vm132 = vcmask 1046528
  %v134 = vsel %vm132, %v117, 0
  %136 = vmatpush.msra.mxu0 0.0
  %137 = vmatpush.msra.mxu0 0.0
  %138 = vmatpush.msra.mxu0 0.0
  %139 = vmatpush.msra.mxu0 0.0
  %140 = vmatpush.msra.mxu0 0.0
  %141 = vmatpush.msra.mxu0 0.0
  %142 = vmatpush.msra.mxu0 0.0
  %143 = vmatpush.msra.mxu0 0.0
  %144 = vmatpush.msra.mxu0 0.0
  %145 = vmatpush.msra.mxu0 0.0
  %146 = vmatpush.msra.mxu0 0.0
  %147 = vmatpush.msra.mxu0 0.0
  %148 = vmatpush.msra.mxu0 0.0
  %149 = vmatpush.msra.mxu0 0.0
  %150 = vmatpush.msra.mxu0 0.0
  %151 = vmatpush.msra.mxu0 %v134
  %152 = vmatmul.f32.gmra.mxu0 %v127
  %v153 = vpop.f32.mrf.mxu0
  %v154 = vadd.f32 %v124, %v153
  %155 = vmatmul.f32.gmra.mxu0 %v130
  %v156 = vpop.f32.mrf.mxu0
  %v157 = vadd.f32 %v124, %v156
  %158 = vdwg.mxu0
  %161 = vrot.lane.b32.xlu0 %v154, 126
  %v162 = vpop.permute.xlu0 %161
  %163 = vrot.lane.b32.xlu0 %v157, 126
  %v164 = vpop.permute.xlu0 %163
  %165 = vrot.lane.b32.xlu0 %v154, 124
  %v166 = vpop.permute.xlu0 %165
  %167 = vrot.lane.b32.xlu0 %v157, 124
  %v168 = vpop.permute.xlu0 %167
  %169 = vrot.lane.b32.xlu0 %v154, 122
  %v170 = vpop.permute.xlu0 %169
  %171 = vrot.lane.b32.xlu0 %v157, 122
  %v172 = vpop.permute.xlu0 %171
  %173 = vrot.lane.b32.xlu0 %v154, 120
  %v174 = vpop.permute.xlu0 %173
  %175 = vrot.lane.b32.xlu0 %v157, 120
  %v176 = vpop.permute.xlu0 %175
  %177 = vrot.lane.b32.xlu0 %v154, 118
  %v178 = vpop.permute.xlu0 %177
  %179 = vrot.lane.b32.xlu0 %v157, 118
  %v180 = vpop.permute.xlu0 %179
  %181 = vrot.lane.b32.xlu0 %v154, 116
  %v182 = vpop.permute.xlu0 %181
  %183 = vrot.lane.b32.xlu0 %v157, 116
  %v184 = vpop.permute.xlu0 %183
  %185 = vrot.lane.b32.xlu0 %v154, 114
  %v186 = vpop.permute.xlu0 %185
  %187 = vrot.lane.b32.xlu0 %v157, 114
  %v188 = vpop.permute.xlu0 %187
  %189 = vrot.lane.b32.xlu0 %v154, 112
  %v190 = vpop.permute.xlu0 %189
  %191 = vrot.lane.b32.xlu0 %v157, 112
  %v192 = vpop.permute.xlu0 %191
  %vm193 = vcmask 15360
  %v194 = vsel %vm193, %v154, 0
  %v196 = vsel %vm193, %v157, 0
  %v198 = vsel %vm193, %v190, 0
  %v200 = vsel %vm193, %v192, 0
  %202 = vmatpush.xpose.msra.mxu0 0.0
  %203 = vmatpush.xpose.msra.mxu0 0.0
  %204 = vmatpush.xpose.msra.mxu0 0.0
  %205 = vmatpush.xpose.msra.mxu0 0.0
  %206 = vmatpush.xpose.msra.mxu0 0.0
  %207 = vmatpush.xpose.msra.mxu0 0.0
  %208 = vmatpush.xpose.msra.mxu0 0.0
  %209 = vmatpush.xpose.msra.mxu0 0.0
  %210 = vmatpush.xpose.msra.mxu0 0.0
  %211 = vmatpush.xpose.msra.mxu0 0.0
  %212 = vmatpush.xpose.msra.mxu0 0.0
  %213 = vmatpush.xpose.msra.mxu0 0.0
  %214 = vmatpush.xpose.msra.mxu0 0.0
  %215 = vmatpush.xpose.msra.mxu0 0.0
  %216 = vmatpush.xpose.msra.mxu0 %v200
  %217 = vmatpush.xpose.msra.mxu0 %v198
  %218 = vmatmul.f32.gmra.mxu0 %v194
  %v219 = vpop.f32.mrf.mxu0
  %v220 = vadd.f32 0.0, %v219
  %221 = vmatmul.f32.gmra.mxu0 %v196
  %v222 = vpop.f32.mrf.mxu0
  %v223 = vadd.f32 0.0, %v222
  %224 = vdwg.mxu0
  %225 = vrot.lane.b32.xlu0 %v162, 112
  %v226 = vpop.permute.xlu0 %225
  %227 = vrot.lane.b32.xlu0 %v164, 112
  %v228 = vpop.permute.xlu0 %227
  %v229 = vsel %vm193, %v162, 0
  %v231 = vsel %vm193, %v164, 0
  %v233 = vsel %vm193, %v226, 0
  %v235 = vsel %vm193, %v228, 0
  %237 = vmatpush.xpose.msra.mxu0 0.0
  %238 = vmatpush.xpose.msra.mxu0 0.0
  %239 = vmatpush.xpose.msra.mxu0 0.0
  %240 = vmatpush.xpose.msra.mxu0 0.0
  %241 = vmatpush.xpose.msra.mxu0 0.0
  %242 = vmatpush.xpose.msra.mxu0 0.0
  %243 = vmatpush.xpose.msra.mxu0 0.0
  %244 = vmatpush.xpose.msra.mxu0 0.0
  %245 = vmatpush.xpose.msra.mxu0 0.0
  %246 = vmatpush.xpose.msra.mxu0 0.0
  %247 = vmatpush.xpose.msra.mxu0 0.0
  %248 = vmatpush.xpose.msra.mxu0 0.0
  %249 = vmatpush.xpose.msra.mxu0 0.0
  %250 = vmatpush.xpose.msra.mxu0 0.0
  %251 = vmatpush.xpose.msra.mxu0 %v235
  %252 = vmatpush.xpose.msra.mxu0 %v233
  %253 = vmatmul.f32.gmra.mxu0 %v229
  %v254 = vpop.f32.mrf.mxu0
  %v255 = vadd.f32 0.0, %v254
  %256 = vmatmul.f32.gmra.mxu0 %v231
  %v257 = vpop.f32.mrf.mxu0
  %v258 = vadd.f32 0.0, %v257
  %259 = vdwg.mxu0
  %260 = vrot.lane.b32.xlu0 %v166, 112
  %v261 = vpop.permute.xlu0 %260
  %262 = vrot.lane.b32.xlu0 %v168, 112
  %v263 = vpop.permute.xlu0 %262
  %v264 = vsel %vm193, %v166, 0
  %v266 = vsel %vm193, %v168, 0
  %v268 = vsel %vm193, %v261, 0
  %v270 = vsel %vm193, %v263, 0
  %272 = vmatpush.xpose.msra.mxu0 0.0
  %273 = vmatpush.xpose.msra.mxu0 0.0
  %274 = vmatpush.xpose.msra.mxu0 0.0
  %275 = vmatpush.xpose.msra.mxu0 0.0
  %276 = vmatpush.xpose.msra.mxu0 0.0
  %277 = vmatpush.xpose.msra.mxu0 0.0
  %278 = vmatpush.xpose.msra.mxu0 0.0
  %279 = vmatpush.xpose.msra.mxu0 0.0
  %280 = vmatpush.xpose.msra.mxu0 0.0
  %281 = vmatpush.xpose.msra.mxu0 0.0
  %282 = vmatpush.xpose.msra.mxu0 0.0
  %283 = vmatpush.xpose.msra.mxu0 0.0
  %284 = vmatpush.xpose.msra.mxu0 0.0
  %285 = vmatpush.xpose.msra.mxu0 0.0
  %286 = vmatpush.xpose.msra.mxu0 %v270
  %287 = vmatpush.xpose.msra.mxu0 %v268
  %288 = vmatmul.f32.gmra.mxu0 %v264
  %v289 = vpop.f32.mrf.mxu0
  %v290 = vadd.f32 0.0, %v289
  %291 = vmatmul.f32.gmra.mxu0 %v266
  %v292 = vpop.f32.mrf.mxu0
  %v293 = vadd.f32 0.0, %v292
  %294 = vdwg.mxu0
  %295 = vrot.lane.b32.xlu0 %v170, 112
  %v296 = vpop.permute.xlu0 %295
  %297 = vrot.lane.b32.xlu0 %v172, 112
  %v298 = vpop.permute.xlu0 %297
  %v299 = vsel %vm193, %v170, 0
  %v301 = vsel %vm193, %v172, 0
  %v303 = vsel %vm193, %v296, 0
  %v305 = vsel %vm193, %v298, 0
  %307 = vmatpush.xpose.msra.mxu0 0.0
  %308 = vmatpush.xpose.msra.mxu0 0.0
  %309 = vmatpush.xpose.msra.mxu0 0.0
  %310 = vmatpush.xpose.msra.mxu0 0.0
  %311 = vmatpush.xpose.msra.mxu0 0.0
  %312 = vmatpush.xpose.msra.mxu0 0.0
  %313 = vmatpush.xpose.msra.mxu0 0.0
  %314 = vmatpush.xpose.msra.mxu0 0.0
  %315 = vmatpush.xpose.msra.mxu0 0.0
  %316 = vmatpush.xpose.msra.mxu0 0.0
  %317 = vmatpush.xpose.msra.mxu0 0.0
  %318 = vmatpush.xpose.msra.mxu0 0.0
  %319 = vmatpush.xpose.msra.mxu0 0.0
  %320 = vmatpush.xpose.msra.mxu0 0.0
  %321 = vmatpush.xpose.msra.mxu0 %v305
  %322 = vmatpush.xpose.msra.mxu0 %v303
  %323 = vmatmul.f32.gmra.mxu0 %v299
  %v324 = vpop.f32.mrf.mxu0
  %v325 = vadd.f32 0.0, %v324
  %326 = vmatmul.f32.gmra.mxu0 %v301
  %v327 = vpop.f32.mrf.mxu0
  %v328 = vadd.f32 0.0, %v327
  %329 = vdwg.mxu0
  %330 = vrot.lane.b32.xlu0 %v174, 112
  %v331 = vpop.permute.xlu0 %330
  %332 = vrot.lane.b32.xlu0 %v176, 112
  %v333 = vpop.permute.xlu0 %332
  %v334 = vsel %vm193, %v174, 0
  %v336 = vsel %vm193, %v176, 0
  %v338 = vsel %vm193, %v331, 0
  %v340 = vsel %vm193, %v333, 0
  %342 = vmatpush.xpose.msra.mxu0 0.0
  %343 = vmatpush.xpose.msra.mxu0 0.0
  %344 = vmatpush.xpose.msra.mxu0 0.0
  %345 = vmatpush.xpose.msra.mxu0 0.0
  %346 = vmatpush.xpose.msra.mxu0 0.0
  %347 = vmatpush.xpose.msra.mxu0 0.0
  %348 = vmatpush.xpose.msra.mxu0 0.0
  %349 = vmatpush.xpose.msra.mxu0 0.0
  %350 = vmatpush.xpose.msra.mxu0 0.0
  %351 = vmatpush.xpose.msra.mxu0 0.0
  %352 = vmatpush.xpose.msra.mxu0 0.0
  %353 = vmatpush.xpose.msra.mxu0 0.0
  %354 = vmatpush.xpose.msra.mxu0 0.0
  %355 = vmatpush.xpose.msra.mxu0 0.0
  %356 = vmatpush.xpose.msra.mxu0 %v340
  %357 = vmatpush.xpose.msra.mxu0 %v338
  %358 = vmatmul.f32.gmra.mxu0 %v334
  %v359 = vpop.f32.mrf.mxu0
  %v360 = vadd.f32 0.0, %v359
  %361 = vmatmul.f32.gmra.mxu0 %v336
  %v362 = vpop.f32.mrf.mxu0
  %v363 = vadd.f32 0.0, %v362
  %364 = vdwg.mxu0
  %365 = vrot.lane.b32.xlu0 %v178, 112
  %v366 = vpop.permute.xlu0 %365
  %367 = vrot.lane.b32.xlu0 %v180, 112
  %v368 = vpop.permute.xlu0 %367
  %v369 = vsel %vm193, %v178, 0
  %v371 = vsel %vm193, %v180, 0
  %v373 = vsel %vm193, %v366, 0
  %v375 = vsel %vm193, %v368, 0
  %377 = vmatpush.xpose.msra.mxu0 0.0
  %378 = vmatpush.xpose.msra.mxu0 0.0
  %379 = vmatpush.xpose.msra.mxu0 0.0
  %380 = vmatpush.xpose.msra.mxu0 0.0
  %381 = vmatpush.xpose.msra.mxu0 0.0
  %382 = vmatpush.xpose.msra.mxu0 0.0
  %383 = vmatpush.xpose.msra.mxu0 0.0
  %384 = vmatpush.xpose.msra.mxu0 0.0
  %385 = vmatpush.xpose.msra.mxu0 0.0
  %386 = vmatpush.xpose.msra.mxu0 0.0
  %387 = vmatpush.xpose.msra.mxu0 0.0
  %388 = vmatpush.xpose.msra.mxu0 0.0
  %389 = vmatpush.xpose.msra.mxu0 0.0
  %390 = vmatpush.xpose.msra.mxu0 0.0
  %391 = vmatpush.xpose.msra.mxu0 %v375
  %392 = vmatpush.xpose.msra.mxu0 %v373
  %393 = vmatmul.f32.gmra.mxu0 %v369
  %v394 = vpop.f32.mrf.mxu0
  %v395 = vadd.f32 0.0, %v394
  %396 = vmatmul.f32.gmra.mxu0 %v371
  %v397 = vpop.f32.mrf.mxu0
  %v398 = vadd.f32 0.0, %v397
  %399 = vdwg.mxu0
  %400 = vrot.lane.b32.xlu0 %v182, 112
  %v401 = vpop.permute.xlu0 %400
  %402 = vrot.lane.b32.xlu0 %v184, 112
  %v403 = vpop.permute.xlu0 %402
  %v404 = vsel %vm193, %v182, 0
  %v406 = vsel %vm193, %v184, 0
  %v408 = vsel %vm193, %v401, 0
  %v410 = vsel %vm193, %v403, 0
  %412 = vmatpush.xpose.msra.mxu0 0.0
  %413 = vmatpush.xpose.msra.mxu0 0.0
  %414 = vmatpush.xpose.msra.mxu0 0.0
  %415 = vmatpush.xpose.msra.mxu0 0.0
  %416 = vmatpush.xpose.msra.mxu0 0.0
  %417 = vmatpush.xpose.msra.mxu0 0.0
  %418 = vmatpush.xpose.msra.mxu0 0.0
  %419 = vmatpush.xpose.msra.mxu0 0.0
  %420 = vmatpush.xpose.msra.mxu0 0.0
  %421 = vmatpush.xpose.msra.mxu0 0.0
  %422 = vmatpush.xpose.msra.mxu0 0.0
  %423 = vmatpush.xpose.msra.mxu0 0.0
  %424 = vmatpush.xpose.msra.mxu0 0.0
  %425 = vmatpush.xpose.msra.mxu0 0.0
  %426 = vmatpush.xpose.msra.mxu0 %v410
  %427 = vmatpush.xpose.msra.mxu0 %v408
  %428 = vmatmul.f32.gmra.mxu0 %v404
  %v429 = vpop.f32.mrf.mxu0
  %v430 = vadd.f32 0.0, %v429
  %431 = vmatmul.f32.gmra.mxu0 %v406
  %v432 = vpop.f32.mrf.mxu0
  %v433 = vadd.f32 0.0, %v432
  %434 = vdwg.mxu0
  %435 = vrot.lane.b32.xlu0 %v186, 112
  %v436 = vpop.permute.xlu0 %435
  %437 = vrot.lane.b32.xlu0 %v188, 112
  %v438 = vpop.permute.xlu0 %437
  %v439 = vsel %vm193, %v186, 0
  %v441 = vsel %vm193, %v188, 0
  %v443 = vsel %vm193, %v436, 0
  %v445 = vsel %vm193, %v438, 0
  %447 = vmatpush.xpose.msra.mxu0 0.0
  %448 = vmatpush.xpose.msra.mxu0 0.0
  %449 = vmatpush.xpose.msra.mxu0 0.0
  %450 = vmatpush.xpose.msra.mxu0 0.0
  %451 = vmatpush.xpose.msra.mxu0 0.0
  %452 = vmatpush.xpose.msra.mxu0 0.0
  %453 = vmatpush.xpose.msra.mxu0 0.0
  %454 = vmatpush.xpose.msra.mxu0 0.0
  %455 = vmatpush.xpose.msra.mxu0 0.0
  %456 = vmatpush.xpose.msra.mxu0 0.0
  %457 = vmatpush.xpose.msra.mxu0 0.0
  %458 = vmatpush.xpose.msra.mxu0 0.0
  %459 = vmatpush.xpose.msra.mxu0 0.0
  %460 = vmatpush.xpose.msra.mxu0 0.0
  %461 = vmatpush.xpose.msra.mxu0 %v445
  %462 = vmatpush.xpose.msra.mxu0 %v443
  %463 = vmatmul.f32.gmra.mxu0 %v439
  %v464 = vpop.f32.mrf.mxu0
  %v465 = vadd.f32 0.0, %v464
  %466 = vmatmul.f32.gmra.mxu0 %v441
  %v467 = vpop.f32.mrf.mxu0
  %v468 = vadd.f32 0.0, %v467
  %469 = vdwg.mxu0
  %v470 = vmul.f32 %v220, 0.70710677
  %v471 = vmul.f32 %v223, 0.70710677
  %v472 = vmul.f32 %v255, 0.70710677
  %v473 = vmul.f32 %v258, 0.70710677
  %v474 = vmul.f32 %v290, 0.70710677
  %v475 = vmul.f32 %v293, 0.70710677
  %v476 = vmul.f32 %v325, 0.70710677
  %v477 = vmul.f32 %v328, 0.70710677
  %v478 = vmul.f32 %v360, 0.70710677
  %v479 = vmul.f32 %v363, 0.70710677
  %v480 = vmul.f32 %v395, 0.70710677
  %v481 = vmul.f32 %v398, 0.70710677
  %v482 = vmul.f32 %v430, 0.70710677
  %v483 = vmul.f32 %v433, 0.70710677
  %v484 = vmul.f32 %v465, 0.70710677
  %v485 = vmul.f32 %v468, 0.70710677
  %v486 = vsel %vm115, %v111, %v470
  %v487 = vsel %vm116, %v112, %v471
  %v488 = vsel %vm115, %v111, %v472
  %v489 = vsel %vm116, %v112, %v473
  %v490 = vsel %vm115, %v111, %v474
  %v491 = vsel %vm116, %v112, %v475
  %v492 = vsel %vm115, %v111, %v476
  %v493 = vsel %vm116, %v112, %v477
  %v494 = vsel %vm115, %v111, %v478
  %v495 = vsel %vm116, %v112, %v479
  %v496 = vsel %vm115, %v111, %v480
  %v497 = vsel %vm116, %v112, %v481
  %v498 = vsel %vm115, %v111, %v482
  %v499 = vsel %vm116, %v112, %v483
  %v500 = vsel %vm115, %v111, %v484
  %v501 = vsel %vm116, %v112, %v485
  %vm502 = vcmask 80896
  %v503 = vsel %vm502, %v486, -inf
  %504 = vmax.xlane.f32.xlu0 %v503
  %v505 = vpop.xlane.xlu0 %504
  %vm506 = vcmask 74752
  %v507 = vsel %vm506, %v487, -inf
  %508 = vmax.xlane.f32.xlu0 %v507
  %v509 = vpop.xlane.xlu0 %508
  %v510 = vsel %vm502, %v488, -inf
  %511 = vmax.xlane.f32.xlu0 %v510
  %v512 = vpop.xlane.xlu0 %511
  %v513 = vsel %vm506, %v489, -inf
  %514 = vmax.xlane.f32.xlu0 %v513
  %v515 = vpop.xlane.xlu0 %514
  %v516 = vsel %vm502, %v490, -inf
  %517 = vmax.xlane.f32.xlu0 %v516
  %v518 = vpop.xlane.xlu0 %517
  %v519 = vsel %vm506, %v491, -inf
  %520 = vmax.xlane.f32.xlu0 %v519
  %v521 = vpop.xlane.xlu0 %520
  %v522 = vsel %vm502, %v492, -inf
  %523 = vmax.xlane.f32.xlu0 %v522
  %v524 = vpop.xlane.xlu0 %523
  %v525 = vsel %vm506, %v493, -inf
  %526 = vmax.xlane.f32.xlu0 %v525
  %v527 = vpop.xlane.xlu0 %526
  %v528 = vsel %vm502, %v494, -inf
  %529 = vmax.xlane.f32.xlu0 %v528
  %v530 = vpop.xlane.xlu0 %529
  %v531 = vsel %vm506, %v495, -inf
  %532 = vmax.xlane.f32.xlu0 %v531
  %v533 = vpop.xlane.xlu0 %532
  %v534 = vsel %vm502, %v496, -inf
  %535 = vmax.xlane.f32.xlu0 %v534
  %v536 = vpop.xlane.xlu0 %535
  %v537 = vsel %vm506, %v497, -inf
  %538 = vmax.xlane.f32.xlu0 %v537
  %v539 = vpop.xlane.xlu0 %538
  %v540 = vsel %vm502, %v498, -inf
  %541 = vmax.xlane.f32.xlu0 %v540
  %v542 = vpop.xlane.xlu0 %541
  %v543 = vsel %vm506, %v499, -inf
  %544 = vmax.xlane.f32.xlu0 %v543
  %v545 = vpop.xlane.xlu0 %544
  %v546 = vsel %vm502, %v500, -inf
  %547 = vmax.xlane.f32.xlu0 %v546
  %v548 = vpop.xlane.xlu0 %547
  %v549 = vsel %vm506, %v501, -inf
  %550 = vmax.xlane.f32.xlu0 %v549
  %v551 = vpop.xlane.xlu0 %550
  %v552 = vsub.f32 %v486, %v505
  %v553 = vsub.f32 %v487, %v509
  %v554 = vsub.f32 %v488, %v512
  %v555 = vsub.f32 %v489, %v515
  %v556 = vsub.f32 %v490, %v518
  %v557 = vsub.f32 %v491, %v521
  %v558 = vsub.f32 %v492, %v524
  %v559 = vsub.f32 %v493, %v527
  %v560 = vsub.f32 %v494, %v530
  %v561 = vsub.f32 %v495, %v533
  %v562 = vsub.f32 %v496, %v536
  %v563 = vsub.f32 %v497, %v539
  %v564 = vsub.f32 %v498, %v542
  %v565 = vsub.f32 %v499, %v545
  %v566 = vsub.f32 %v500, %v548
  %v567 = vsub.f32 %v501, %v551
  %v568 = vmul.f32 %v552, 1.442695
  %v569 = vpow.pop %v568
  %v570 = vmul.f32 %v553, 1.442695
  %v571 = vpow.pop %v570
  %v572 = vmul.f32 %v554, 1.442695
  %v573 = vpow.pop %v572
  %v574 = vmul.f32 %v555, 1.442695
  %v575 = vpow.pop %v574
  %v576 = vmul.f32 %v556, 1.442695
  %v577 = vpow.pop %v576
  %v578 = vmul.f32 %v557, 1.442695
  %v579 = vpow.pop %v578
  %v580 = vmul.f32 %v558, 1.442695
  %v581 = vpow.pop %v580
  %v582 = vmul.f32 %v559, 1.442695
  %v583 = vpow.pop %v582
  %v584 = vmul.f32 %v560, 1.442695
  %v585 = vpow.pop %v584
  %v586 = vmul.f32 %v561, 1.442695
  %v587 = vpow.pop %v586
  %v588 = vmul.f32 %v562, 1.442695
  %v589 = vpow.pop %v588
  %v590 = vmul.f32 %v563, 1.442695
  %v591 = vpow.pop %v590
  %v592 = vmul.f32 %v564, 1.442695
  %v593 = vpow.pop %v592
  %v594 = vmul.f32 %v565, 1.442695
  %v595 = vpow.pop %v594
  %v596 = vmul.f32 %v566, 1.442695
  %v597 = vpow.pop %v596
  %v598 = vmul.f32 %v567, 1.442695
  %v599 = vpow.pop %v598
  %v600 = vsel %vm502, %v569, 0.0
  %601 = vadd.xlane.f32.xlu0 %v600
  %v602 = vpop.xlane.xlu0 %601
  %v603 = vsel %vm506, %v571, 0.0
  %604 = vadd.xlane.f32.xlu0 %v603
  %v605 = vpop.xlane.xlu0 %604
  %v606 = vsel %vm502, %v573, 0.0
  %607 = vadd.xlane.f32.xlu0 %v606
  %v608 = vpop.xlane.xlu0 %607
  %v609 = vsel %vm506, %v575, 0.0
  %610 = vadd.xlane.f32.xlu0 %v609
  %v611 = vpop.xlane.xlu0 %610
  %v612 = vsel %vm502, %v577, 0.0
  %613 = vadd.xlane.f32.xlu0 %v612
  %v614 = vpop.xlane.xlu0 %613
  %v615 = vsel %vm506, %v579, 0.0
  %616 = vadd.xlane.f32.xlu0 %v615
  %v617 = vpop.xlane.xlu0 %616
  %v618 = vsel %vm502, %v581, 0.0
  %619 = vadd.xlane.f32.xlu0 %v618
  %v620 = vpop.xlane.xlu0 %619
  %v621 = vsel %vm506, %v583, 0.0
  %622 = vadd.xlane.f32.xlu0 %v621
  %v623 = vpop.xlane.xlu0 %622
  %v624 = vsel %vm502, %v585, 0.0
  %625 = vadd.xlane.f32.xlu0 %v624
  %v626 = vpop.xlane.xlu0 %625
  %v627 = vsel %vm506, %v587, 0.0
  %628 = vadd.xlane.f32.xlu0 %v627
  %v629 = vpop.xlane.xlu0 %628
  %v630 = vsel %vm502, %v589, 0.0
  %631 = vadd.xlane.f32.xlu0 %v630
  %v632 = vpop.xlane.xlu0 %631
  %v633 = vsel %vm506, %v591, 0.0
  %634 = vadd.xlane.f32.xlu0 %v633
  %v635 = vpop.xlane.xlu0 %634
  %v636 = vsel %vm502, %v593, 0.0
  %637 = vadd.xlane.f32.xlu0 %v636
  %v638 = vpop.xlane.xlu0 %637
  %v639 = vsel %vm506, %v595, 0.0
  %640 = vadd.xlane.f32.xlu0 %v639
  %v641 = vpop.xlane.xlu0 %640
  %v642 = vsel %vm502, %v597, 0.0
  %643 = vadd.xlane.f32.xlu0 %v642
  %v644 = vpop.xlane.xlu0 %643
  %v645 = vsel %vm506, %v599, 0.0
  %646 = vadd.xlane.f32.xlu0 %v645
  %v647 = vpop.xlane.xlu0 %646
  %v648 = vrcp.pop %v602
  %v649 = vmul.f32 %v602, %v648
  %v650 = vsub.f32 1.0, %v649
  %v651 = vmul.f32 %v648, %v650
  %v652 = vadd.f32 %v648, %v651
  %vm653 = vweird.f32 %v602
  %vm654 = vweird.f32 %v648
  %vm655 = vmor %vm653, %vm654
  %v656 = vsel %vm655, %v648, %v652
  %v657 = vand.u32 2147483647, %v602
  %vm658 = vcmp.eq.f32.partialorder %v657, 8.507059e+37
  %v659 = vand.u32 %v602, 2147483648
  %v660 = vor.u32 1.1754944e-38, %v659
  %v661 = vsel %vm658, %v660, %v656
  %v662 = vmul.f32 %v569, %v661
  %v663 = vrcp.pop %v605
  %v664 = vmul.f32 %v605, %v663
  %v665 = vsub.f32 1.0, %v664
  %v666 = vmul.f32 %v663, %v665
  %v667 = vadd.f32 %v663, %v666
  %vm668 = vweird.f32 %v605
  %vm669 = vweird.f32 %v663
  %vm670 = vmor %vm668, %vm669
  %v671 = vsel %vm670, %v663, %v667
  %v672 = vand.u32 2147483647, %v605
  %vm673 = vcmp.eq.f32.partialorder %v672, 8.507059e+37
  %v674 = vand.u32 %v605, 2147483648
  %v675 = vor.u32 1.1754944e-38, %v674
  %v676 = vsel %vm673, %v675, %v671
  %v677 = vmul.f32 %v571, %v676
  %v678 = vrcp.pop %v608
  %v679 = vmul.f32 %v608, %v678
  %v680 = vsub.f32 1.0, %v679
  %v681 = vmul.f32 %v678, %v680
  %v682 = vadd.f32 %v678, %v681
  %vm683 = vweird.f32 %v608
  %vm684 = vweird.f32 %v678
  %vm685 = vmor %vm683, %vm684
  %v686 = vsel %vm685, %v678, %v682
  %v687 = vand.u32 2147483647, %v608
  %vm688 = vcmp.eq.f32.partialorder %v687, 8.507059e+37
  %v689 = vand.u32 %v608, 2147483648
  %v690 = vor.u32 1.1754944e-38, %v689
  %v691 = vsel %vm688, %v690, %v686
  %v692 = vmul.f32 %v573, %v691
  %v693 = vrcp.pop %v611
  %v694 = vmul.f32 %v611, %v693
  %v695 = vsub.f32 1.0, %v694
  %v696 = vmul.f32 %v693, %v695
  %v697 = vadd.f32 %v693, %v696
  %vm698 = vweird.f32 %v611
  %vm699 = vweird.f32 %v693
  %vm700 = vmor %vm698, %vm699
  %v701 = vsel %vm700, %v693, %v697
  %v702 = vand.u32 2147483647, %v611
  %vm703 = vcmp.eq.f32.partialorder %v702, 8.507059e+37
  %v704 = vand.u32 %v611, 2147483648
  %v705 = vor.u32 1.1754944e-38, %v704
  %v706 = vsel %vm703, %v705, %v701
  %v707 = vmul.f32 %v575, %v706
  %v708 = vrcp.pop %v614
  %v709 = vmul.f32 %v614, %v708
  %v710 = vsub.f32 1.0, %v709
  %v711 = vmul.f32 %v708, %v710
  %v712 = vadd.f32 %v708, %v711
  %vm713 = vweird.f32 %v614
  %vm714 = vweird.f32 %v708
  %vm715 = vmor %vm713, %vm714
  %v716 = vsel %vm715, %v708, %v712
  %v717 = vand.u32 2147483647, %v614
  %vm718 = vcmp.eq.f32.partialorder %v717, 8.507059e+37
  %v719 = vand.u32 %v614, 2147483648
  %v720 = vor.u32 1.1754944e-38, %v719
  %v721 = vsel %vm718, %v720, %v716
  %v722 = vmul.f32 %v577, %v721
  %v723 = vrcp.pop %v617
  %v724 = vmul.f32 %v617, %v723
  %v725 = vsub.f32 1.0, %v724
  %v726 = vmul.f32 %v723, %v725
  %v727 = vadd.f32 %v723, %v726
  %vm728 = vweird.f32 %v617
  %vm729 = vweird.f32 %v723
  %vm730 = vmor %vm728, %vm729
  %v731 = vsel %vm730, %v723, %v727
  %v732 = vand.u32 2147483647, %v617
  %vm733 = vcmp.eq.f32.partialorder %v732, 8.507059e+37
  %v734 = vand.u32 %v617, 2147483648
  %v735 = vor.u32 1.1754944e-38, %v734
  %v736 = vsel %vm733, %v735, %v731
  %v737 = vmul.f32 %v579, %v736
  %v738 = vrcp.pop %v620
  %v739 = vmul.f32 %v620, %v738
  %v740 = vsub.f32 1.0, %v739
  %v741 = vmul.f32 %v738, %v740
  %v742 = vadd.f32 %v738, %v741
  %vm743 = vweird.f32 %v620
  %vm744 = vweird.f32 %v738
  %vm745 = vmor %vm743, %vm744
  %v746 = vsel %vm745, %v738, %v742
  %v747 = vand.u32 2147483647, %v620
  %vm748 = vcmp.eq.f32.partialorder %v747, 8.507059e+37
  %v749 = vand.u32 %v620, 2147483648
  %v750 = vor.u32 1.1754944e-38, %v749
  %v751 = vsel %vm748, %v750, %v746
  %v752 = vmul.f32 %v581, %v751
  %v753 = vrcp.pop %v623
  %v754 = vmul.f32 %v623, %v753
  %v755 = vsub.f32 1.0, %v754
  %v756 = vmul.f32 %v753, %v755
  %v757 = vadd.f32 %v753, %v756
  %vm758 = vweird.f32 %v623
  %vm759 = vweird.f32 %v753
  %vm760 = vmor %vm758, %vm759
  %v761 = vsel %vm760, %v753, %v757
  %v762 = vand.u32 2147483647, %v623
  %vm763 = vcmp.eq.f32.partialorder %v762, 8.507059e+37
  %v764 = vand.u32 %v623, 2147483648
  %v765 = vor.u32 1.1754944e-38, %v764
  %v766 = vsel %vm763, %v765, %v761
  %v767 = vmul.f32 %v583, %v766
  %v768 = vrcp.pop %v626
  %v769 = vmul.f32 %v626, %v768
  %v770 = vsub.f32 1.0, %v769
  %v771 = vmul.f32 %v768, %v770
  %v772 = vadd.f32 %v768, %v771
  %vm773 = vweird.f32 %v626
  %vm774 = vweird.f32 %v768
  %vm775 = vmor %vm773, %vm774
  %v776 = vsel %vm775, %v768, %v772
  %v777 = vand.u32 2147483647, %v626
  %vm778 = vcmp.eq.f32.partialorder %v777, 8.507059e+37
  %v779 = vand.u32 %v626, 2147483648
  %v780 = vor.u32 1.1754944e-38, %v779
  %v781 = vsel %vm778, %v780, %v776
  %v782 = vmul.f32 %v585, %v781
  %v783 = vrcp.pop %v629
  %v784 = vmul.f32 %v629, %v783
  %v785 = vsub.f32 1.0, %v784
  %v786 = vmul.f32 %v783, %v785
  %v787 = vadd.f32 %v783, %v786
  %vm788 = vweird.f32 %v629
  %vm789 = vweird.f32 %v783
  %vm790 = vmor %vm788, %vm789
  %v791 = vsel %vm790, %v783, %v787
  %v792 = vand.u32 2147483647, %v629
  %vm793 = vcmp.eq.f32.partialorder %v792, 8.507059e+37
  %v794 = vand.u32 %v629, 2147483648
  %v795 = vor.u32 1.1754944e-38, %v794
  %v796 = vsel %vm793, %v795, %v791
  %v797 = vmul.f32 %v587, %v796
  %v798 = vrcp.pop %v632
  %v799 = vmul.f32 %v632, %v798
  %v800 = vsub.f32 1.0, %v799
  %v801 = vmul.f32 %v798, %v800
  %v802 = vadd.f32 %v798, %v801
  %vm803 = vweird.f32 %v632
  %vm804 = vweird.f32 %v798
  %vm805 = vmor %vm803, %vm804
  %v806 = vsel %vm805, %v798, %v802
  %v807 = vand.u32 2147483647, %v632
  %vm808 = vcmp.eq.f32.partialorder %v807, 8.507059e+37
  %v809 = vand.u32 %v632, 2147483648
  %v810 = vor.u32 1.1754944e-38, %v809
  %v811 = vsel %vm808, %v810, %v806
  %v812 = vmul.f32 %v589, %v811
  %v813 = vrcp.pop %v635
  %v814 = vmul.f32 %v635, %v813
  %v815 = vsub.f32 1.0, %v814
  %v816 = vmul.f32 %v813, %v815
  %v817 = vadd.f32 %v813, %v816
  %vm818 = vweird.f32 %v635
  %vm819 = vweird.f32 %v813
  %vm820 = vmor %vm818, %vm819
  %v821 = vsel %vm820, %v813, %v817
  %v822 = vand.u32 2147483647, %v635
  %vm823 = vcmp.eq.f32.partialorder %v822, 8.507059e+37
  %v824 = vand.u32 %v635, 2147483648
  %v825 = vor.u32 1.1754944e-38, %v824
  %v826 = vsel %vm823, %v825, %v821
  %v827 = vmul.f32 %v591, %v826
  %v828 = vrcp.pop %v638
  %v829 = vmul.f32 %v638, %v828
  %v830 = vsub.f32 1.0, %v829
  %v831 = vmul.f32 %v828, %v830
  %v832 = vadd.f32 %v828, %v831
  %vm833 = vweird.f32 %v638
  %vm834 = vweird.f32 %v828
  %vm835 = vmor %vm833, %vm834
  %v836 = vsel %vm835, %v828, %v832
  %v837 = vand.u32 2147483647, %v638
  %vm838 = vcmp.eq.f32.partialorder %v837, 8.507059e+37
  %v839 = vand.u32 %v638, 2147483648
  %v840 = vor.u32 1.1754944e-38, %v839
  %v841 = vsel %vm838, %v840, %v836
  %v842 = vmul.f32 %v593, %v841
  %v843 = vrcp.pop %v641
  %v844 = vmul.f32 %v641, %v843
  %v845 = vsub.f32 1.0, %v844
  %v846 = vmul.f32 %v843, %v845
  %v847 = vadd.f32 %v843, %v846
  %vm848 = vweird.f32 %v641
  %vm849 = vweird.f32 %v843
  %vm850 = vmor %vm848, %vm849
  %v851 = vsel %vm850, %v843, %v847
  %v852 = vand.u32 2147483647, %v641
  %vm853 = vcmp.eq.f32.partialorder %v852, 8.507059e+37
  %v854 = vand.u32 %v641, 2147483648
  %v855 = vor.u32 1.1754944e-38, %v854
  %v856 = vsel %vm853, %v855, %v851
  %v857 = vmul.f32 %v595, %v856
  %v858 = vrcp.pop %v644
  %v859 = vmul.f32 %v644, %v858
  %v860 = vsub.f32 1.0, %v859
  %v861 = vmul.f32 %v858, %v860
  %v862 = vadd.f32 %v858, %v861
  %vm863 = vweird.f32 %v644
  %vm864 = vweird.f32 %v858
  %vm865 = vmor %vm863, %vm864
  %v866 = vsel %vm865, %v858, %v862
  %v867 = vand.u32 2147483647, %v644
  %vm868 = vcmp.eq.f32.partialorder %v867, 8.507059e+37
  %v869 = vand.u32 %v644, 2147483648
  %v870 = vor.u32 1.1754944e-38, %v869
  %v871 = vsel %vm868, %v870, %v866
  %v872 = vmul.f32 %v597, %v871
  %v873 = vrcp.pop %v647
  %v874 = vmul.f32 %v647, %v873
  %v875 = vsub.f32 1.0, %v874
  %v876 = vmul.f32 %v873, %v875
  %v877 = vadd.f32 %v873, %v876
  %vm878 = vweird.f32 %v647
  %vm879 = vweird.f32 %v873
  %vm880 = vmor %vm878, %vm879
  %v881 = vsel %vm880, %v873, %v877
  %v882 = vand.u32 2147483647, %v647
  %vm883 = vcmp.eq.f32.partialorder %v882, 8.507059e+37
  %v884 = vand.u32 %v647, 2147483648
  %v885 = vor.u32 1.1754944e-38, %v884
  %v886 = vsel %vm883, %v885, %v881
  %v887 = vmul.f32 %v599, %v886
  %888 = vrot.lane.b32.xlu0 %v154, 96
  %v889 = vpop.permute.xlu0 %888
  %890 = vrot.lane.b32.xlu0 %v157, 96
  %v891 = vpop.permute.xlu0 %890
  %v894 = vsel %vm502, %v662, 0
  %v897 = vsel %vm502, %v677, 0
  %vm899 = vcmask 1041408
  %v900 = vsel %vm899, %v891, 0
  %902 = vmatpush.msra.mxu0 0.0
  %903 = vmatpush.msra.mxu0 0.0
  %904 = vmatpush.msra.mxu0 0.0
  %905 = vmatpush.msra.mxu0 0.0
  %906 = vmatpush.msra.mxu0 0.0
  %907 = vmatpush.msra.mxu0 0.0
  %908 = vmatpush.msra.mxu0 0.0
  %909 = vmatpush.msra.mxu0 0.0
  %910 = vmatpush.msra.mxu0 0.0
  %911 = vmatpush.msra.mxu0 0.0
  %912 = vmatpush.msra.mxu0 0.0
  %913 = vmatpush.msra.mxu0 0.0
  %914 = vmatpush.msra.mxu0 0.0
  %915 = vmatpush.msra.mxu0 0.0
  %916 = vmatpush.msra.mxu0 %v900
  %917 = vmatpush.msra.mxu0 %v889
  %918 = vmatmul.f32.gmra.mxu0 %v894
  %v919 = vpop.f32.mrf.mxu0
  %v920 = vadd.f32 0.0, %v919
  %921 = vmatmul.f32.gmra.mxu0 %v897
  %v922 = vpop.f32.mrf.mxu0
  %v923 = vadd.f32 0.0, %v922
  %924 = vdwg.mxu0
  %925 = vrot.lane.b32.xlu0 %v162, 96
  %v926 = vpop.permute.xlu0 %925
  %927 = vrot.lane.b32.xlu0 %v164, 96
  %v928 = vpop.permute.xlu0 %927
  %v931 = vsel %vm502, %v692, 0
  %v934 = vsel %vm502, %v707, 0
  %v936 = vsel %vm899, %v928, 0
  %938 = vmatpush.msra.mxu0 0.0
  %939 = vmatpush.msra.mxu0 0.0
  %940 = vmatpush.msra.mxu0 0.0
  %941 = vmatpush.msra.mxu0 0.0
  %942 = vmatpush.msra.mxu0 0.0
  %943 = vmatpush.msra.mxu0 0.0
  %944 = vmatpush.msra.mxu0 0.0
  %945 = vmatpush.msra.mxu0 0.0
  %946 = vmatpush.msra.mxu0 0.0
  %947 = vmatpush.msra.mxu0 0.0
  %948 = vmatpush.msra.mxu0 0.0
  %949 = vmatpush.msra.mxu0 0.0
  %950 = vmatpush.msra.mxu0 0.0
  %951 = vmatpush.msra.mxu0 0.0
  %952 = vmatpush.msra.mxu0 %v936
  %953 = vmatpush.msra.mxu0 %v926
  %954 = vmatmul.f32.gmra.mxu0 %v931
  %v955 = vpop.f32.mrf.mxu0
  %v956 = vadd.f32 0.0, %v955
  %957 = vmatmul.f32.gmra.mxu0 %v934
  %v958 = vpop.f32.mrf.mxu0
  %v959 = vadd.f32 0.0, %v958
  %960 = vdwg.mxu0
  %961 = vrot.lane.b32.xlu0 %v166, 96
  %v962 = vpop.permute.xlu0 %961
  %963 = vrot.lane.b32.xlu0 %v168, 96
  %v964 = vpop.permute.xlu0 %963
  %v967 = vsel %vm502, %v722, 0
  %v970 = vsel %vm502, %v737, 0
  %v972 = vsel %vm899, %v964, 0
  %974 = vmatpush.msra.mxu0 0.0
  %975 = vmatpush.msra.mxu0 0.0
  %976 = vmatpush.msra.mxu0 0.0
  %977 = vmatpush.msra.mxu0 0.0
  %978 = vmatpush.msra.mxu0 0.0
  %979 = vmatpush.msra.mxu0 0.0
  %980 = vmatpush.msra.mxu0 0.0
  %981 = vmatpush.msra.mxu0 0.0
  %982 = vmatpush.msra.mxu0 0.0
  %983 = vmatpush.msra.mxu0 0.0
  %984 = vmatpush.msra.mxu0 0.0
  %985 = vmatpush.msra.mxu0 0.0
  %986 = vmatpush.msra.mxu0 0.0
  %987 = vmatpush.msra.mxu0 0.0
  %988 = vmatpush.msra.mxu0 %v972
  %989 = vmatpush.msra.mxu0 %v962
  %990 = vmatmul.f32.gmra.mxu0 %v967
  %v991 = vpop.f32.mrf.mxu0
  %v992 = vadd.f32 0.0, %v991
  %993 = vmatmul.f32.gmra.mxu0 %v970
  %v994 = vpop.f32.mrf.mxu0
  %v995 = vadd.f32 0.0, %v994
  %996 = vdwg.mxu0
  %997 = vrot.lane.b32.xlu0 %v170, 96
  %v998 = vpop.permute.xlu0 %997
  %999 = vrot.lane.b32.xlu0 %v172, 96
  %v1000 = vpop.permute.xlu0 %999
  %v1003 = vsel %vm502, %v752, 0
  %v1006 = vsel %vm502, %v767, 0
  %v1008 = vsel %vm899, %v1000, 0
  %1010 = vmatpush.msra.mxu0 0.0
  %1011 = vmatpush.msra.mxu0 0.0
  %1012 = vmatpush.msra.mxu0 0.0
  %1013 = vmatpush.msra.mxu0 0.0
  %1014 = vmatpush.msra.mxu0 0.0
  %1015 = vmatpush.msra.mxu0 0.0
  %1016 = vmatpush.msra.mxu0 0.0
  %1017 = vmatpush.msra.mxu0 0.0
  %1018 = vmatpush.msra.mxu0 0.0
  %1019 = vmatpush.msra.mxu0 0.0
  %1020 = vmatpush.msra.mxu0 0.0
  %1021 = vmatpush.msra.mxu0 0.0
  %1022 = vmatpush.msra.mxu0 0.0
  %1023 = vmatpush.msra.mxu0 0.0
  %1024 = vmatpush.msra.mxu0 %v1008
  %1025 = vmatpush.msra.mxu0 %v998
  %1026 = vmatmul.f32.gmra.mxu0 %v1003
  %v1027 = vpop.f32.mrf.mxu0
  %v1028 = vadd.f32 0.0, %v1027
  %1029 = vmatmul.f32.gmra.mxu0 %v1006
  %v1030 = vpop.f32.mrf.mxu0
  %v1031 = vadd.f32 0.0, %v1030
  %1032 = vdwg.mxu0
  %1033 = vrot.lane.b32.xlu0 %v174, 96
  %v1034 = vpop.permute.xlu0 %1033
  %1035 = vrot.lane.b32.xlu0 %v176, 96
  %v1036 = vpop.permute.xlu0 %1035
  %v1039 = vsel %vm502, %v782, 0
  %v1042 = vsel %vm502, %v797, 0
  %v1044 = vsel %vm899, %v1036, 0
  %1046 = vmatpush.msra.mxu0 0.0
  %1047 = vmatpush.msra.mxu0 0.0
  %1048 = vmatpush.msra.mxu0 0.0
  %1049 = vmatpush.msra.mxu0 0.0
  %1050 = vmatpush.msra.mxu0 0.0
  %1051 = vmatpush.msra.mxu0 0.0
  %1052 = vmatpush.msra.mxu0 0.0
  %1053 = vmatpush.msra.mxu0 0.0
  %1054 = vmatpush.msra.mxu0 0.0
  %1055 = vmatpush.msra.mxu0 0.0
  %1056 = vmatpush.msra.mxu0 0.0
  %1057 = vmatpush.msra.mxu0 0.0
  %1058 = vmatpush.msra.mxu0 0.0
  %1059 = vmatpush.msra.mxu0 0.0
  %1060 = vmatpush.msra.mxu0 %v1044
  %1061 = vmatpush.msra.mxu0 %v1034
  %1062 = vmatmul.f32.gmra.mxu0 %v1039
  %v1063 = vpop.f32.mrf.mxu0
  %v1064 = vadd.f32 0.0, %v1063
  %1065 = vmatmul.f32.gmra.mxu0 %v1042
  %v1066 = vpop.f32.mrf.mxu0
  %v1067 = vadd.f32 0.0, %v1066
  %1068 = vdwg.mxu0
  %1069 = vrot.lane.b32.xlu0 %v178, 96
  %v1070 = vpop.permute.xlu0 %1069
  %1071 = vrot.lane.b32.xlu0 %v180, 96
  %v1072 = vpop.permute.xlu0 %1071
  %v1075 = vsel %vm502, %v812, 0
  %v1078 = vsel %vm502, %v827, 0
  %v1080 = vsel %vm899, %v1072, 0
  %1082 = vmatpush.msra.mxu0 0.0
  %1083 = vmatpush.msra.mxu0 0.0
  %1084 = vmatpush.msra.mxu0 0.0
  %1085 = vmatpush.msra.mxu0 0.0
  %1086 = vmatpush.msra.mxu0 0.0
  %1087 = vmatpush.msra.mxu0 0.0
  %1088 = vmatpush.msra.mxu0 0.0
  %1089 = vmatpush.msra.mxu0 0.0
  %1090 = vmatpush.msra.mxu0 0.0
  %1091 = vmatpush.msra.mxu0 0.0
  %1092 = vmatpush.msra.mxu0 0.0
  %1093 = vmatpush.msra.mxu0 0.0
  %1094 = vmatpush.msra.mxu0 0.0
  %1095 = vmatpush.msra.mxu0 0.0
  %1096 = vmatpush.msra.mxu0 %v1080
  %1097 = vmatpush.msra.mxu0 %v1070
  %1098 = vmatmul.f32.gmra.mxu0 %v1075
  %v1099 = vpop.f32.mrf.mxu0
  %v1100 = vadd.f32 0.0, %v1099
  %1101 = vmatmul.f32.gmra.mxu0 %v1078
  %v1102 = vpop.f32.mrf.mxu0
  %v1103 = vadd.f32 0.0, %v1102
  %1104 = vdwg.mxu0
  %1105 = vrot.lane.b32.xlu0 %v182, 96
  %v1106 = vpop.permute.xlu0 %1105
  %1107 = vrot.lane.b32.xlu0 %v184, 96
  %v1108 = vpop.permute.xlu0 %1107
  %v1111 = vsel %vm502, %v842, 0
  %v1114 = vsel %vm502, %v857, 0
  %v1116 = vsel %vm899, %v1108, 0
  %1118 = vmatpush.msra.mxu0 0.0
  %1119 = vmatpush.msra.mxu0 0.0
  %1120 = vmatpush.msra.mxu0 0.0
  %1121 = vmatpush.msra.mxu0 0.0
  %1122 = vmatpush.msra.mxu0 0.0
  %1123 = vmatpush.msra.mxu0 0.0
  %1124 = vmatpush.msra.mxu0 0.0
  %1125 = vmatpush.msra.mxu0 0.0
  %1126 = vmatpush.msra.mxu0 0.0
  %1127 = vmatpush.msra.mxu0 0.0
  %1128 = vmatpush.msra.mxu0 0.0
  %1129 = vmatpush.msra.mxu0 0.0
  %1130 = vmatpush.msra.mxu0 0.0
  %1131 = vmatpush.msra.mxu0 0.0
  %1132 = vmatpush.msra.mxu0 %v1116
  %1133 = vmatpush.msra.mxu0 %v1106
  %1134 = vmatmul.f32.gmra.mxu0 %v1111
  %v1135 = vpop.f32.mrf.mxu0
  %v1136 = vadd.f32 0.0, %v1135
  %1137 = vmatmul.f32.gmra.mxu0 %v1114
  %v1138 = vpop.f32.mrf.mxu0
  %v1139 = vadd.f32 0.0, %v1138
  %1140 = vdwg.mxu0
  %1141 = vrot.lane.b32.xlu0 %v186, 96
  %v1142 = vpop.permute.xlu0 %1141
  %1143 = vrot.lane.b32.xlu0 %v188, 96
  %v1144 = vpop.permute.xlu0 %1143
  %v1147 = vsel %vm502, %v872, 0
  %v1150 = vsel %vm502, %v887, 0
  %v1152 = vsel %vm899, %v1144, 0
  %1154 = vmatpush.msra.mxu0 0.0
  %1155 = vmatpush.msra.mxu0 0.0
  %1156 = vmatpush.msra.mxu0 0.0
  %1157 = vmatpush.msra.mxu0 0.0
  %1158 = vmatpush.msra.mxu0 0.0
  %1159 = vmatpush.msra.mxu0 0.0
  %1160 = vmatpush.msra.mxu0 0.0
  %1161 = vmatpush.msra.mxu0 0.0
  %1162 = vmatpush.msra.mxu0 0.0
  %1163 = vmatpush.msra.mxu0 0.0
  %1164 = vmatpush.msra.mxu0 0.0
  %1165 = vmatpush.msra.mxu0 0.0
  %1166 = vmatpush.msra.mxu0 0.0
  %1167 = vmatpush.msra.mxu0 0.0
  %1168 = vmatpush.msra.mxu0 %v1152
  %1169 = vmatpush.msra.mxu0 %v1142
  %1170 = vmatmul.f32.gmra.mxu0 %v1147
  %v1171 = vpop.f32.mrf.mxu0
  %v1172 = vadd.f32 0.0, %v1171
  %1173 = vmatmul.f32.gmra.mxu0 %v1150
  %v1174 = vpop.f32.mrf.mxu0
  %v1175 = vadd.f32 0.0, %v1174
  %1176 = vdwg.mxu0
  %vm1177 = vcmask 36864
  %1178 = vst.msk [vmem:[%s7] sm:$0x1f] %vm1177, %v662
  %1179 = vst.msk [vmem:[%s7 + $0x8] sm:$0x1f] %vm1177, %v692
  %1180 = vst.msk [vmem:[%s7 + $0x10] sm:$0x1f] %vm1177, %v722
  %1181 = vst.msk [vmem:[%s7 + $0x18] sm:$0x1f] %vm1177, %v752
  %1182 = vst.msk [vmem:[%s7 + $0x20] sm:$0x1f] %vm1177, %v782
  %1183 = vst.msk [vmem:[%s7 + $0x28] sm:$0x1f] %vm1177, %v812
  %1184 = vst.msk [vmem:[%s7 + $0x30] sm:$0x1f] %vm1177, %v842
  %1185 = vst.msk [vmem:[%s7 + $0x38] sm:$0x1f] %vm1177, %v872
  %1186 = vrot.lane.b32.xlu0 %v662, 123
  %v1187 = vpop.permute.xlu0 %1186
  %1188 = vrot.lane.b32.xlu0 %v677, 123
  %v1189 = vpop.permute.xlu0 %1188
  %1190 = vrot.lane.b32.xlu0 %v692, 123
  %v1191 = vpop.permute.xlu0 %1190
  %1192 = vrot.lane.b32.xlu0 %v707, 123
  %v1193 = vpop.permute.xlu0 %1192
  %1194 = vrot.lane.b32.xlu0 %v722, 123
  %v1195 = vpop.permute.xlu0 %1194
  %1196 = vrot.lane.b32.xlu0 %v737, 123
  %v1197 = vpop.permute.xlu0 %1196
  %1198 = vrot.lane.b32.xlu0 %v752, 123
  %v1199 = vpop.permute.xlu0 %1198
  %1200 = vrot.lane.b32.xlu0 %v767, 123
  %v1201 = vpop.permute.xlu0 %1200
  %1202 = vrot.lane.b32.xlu0 %v782, 123
  %v1203 = vpop.permute.xlu0 %1202
  %1204 = vrot.lane.b32.xlu0 %v797, 123
  %v1205 = vpop.permute.xlu0 %1204
  %1206 = vrot.lane.b32.xlu0 %v812, 123
  %v1207 = vpop.permute.xlu0 %1206
  %1208 = vrot.lane.b32.xlu0 %v827, 123
  %v1209 = vpop.permute.xlu0 %1208
  %1210 = vrot.lane.b32.xlu0 %v842, 123
  %v1211 = vpop.permute.xlu0 %1210
  %1212 = vrot.lane.b32.xlu0 %v857, 123
  %v1213 = vpop.permute.xlu0 %1212
  %1214 = vrot.lane.b32.xlu0 %v872, 123
  %v1215 = vpop.permute.xlu0 %1214
  %1216 = vrot.lane.b32.xlu0 %v887, 123
  %v1217 = vpop.permute.xlu0 %1216
  %s1234 = scalar_lea.vmem %s7, 64
  %vm1235 = vcmask 39941
  %1236 = vst.msk [vmem:[%s1234 - $0x5] sm:$0xe0] %vm1235, %v1187
  %vm1237 = vcmask 33792
  %1238 = vst.msk [vmem:[%s1234 + $0x3] sm:$0x3] %vm1237, %v1189
  %1239 = vst.msk [vmem:[%s1234 + $0x3] sm:$0xe0] %vm1235, %v1191
  %1240 = vst.msk [vmem:[%s1234 + $0xb] sm:$0x3] %vm1237, %v1193
  %1241 = vst.msk [vmem:[%s1234 + $0xb] sm:$0xe0] %vm1235, %v1195
  %1242 = vst.msk [vmem:[%s1234 + $0x13] sm:$0x3] %vm1237, %v1197
  %1243 = vst.msk [vmem:[%s1234 + $0x13] sm:$0xe0] %vm1235, %v1199
  %1244 = vst.msk [vmem:[%s1234 + $0x1b] sm:$0x3] %vm1237, %v1201
  %1245 = vst.msk [vmem:[%s1234 + $0x1b] sm:$0xe0] %vm1235, %v1203
  %1246 = vst.msk [vmem:[%s1234 + $0x23] sm:$0x3] %vm1237, %v1205
  %1247 = vst.msk [vmem:[%s1234 + $0x23] sm:$0xe0] %vm1235, %v1207
  %1248 = vst.msk [vmem:[%s1234 + $0x2b] sm:$0x3] %vm1237, %v1209
  %1249 = vst.msk [vmem:[%s1234 + $0x2b] sm:$0xe0] %vm1235, %v1211
  %1250 = vst.msk [vmem:[%s1234 + $0x33] sm:$0x3] %vm1237, %v1213
  %1251 = vst.msk [vmem:[%s1234 + $0x33] sm:$0xe0] %vm1235, %v1215
  %1252 = vst.msk [vmem:[%s1234 + $0x3b] sm:$0x3] %vm1237, %v1217
  %1255 = vrot.lane.b32.xlu0 %v956, 2
  %v1256 = vpop.permute.xlu0 %1255
  %1257 = vrot.lane.b32.xlu0 %v959, 2
  %v1258 = vpop.permute.xlu0 %1257
  %1263 = vrot.lane.b32.xlu0 %v992, 4
  %v1264 = vpop.permute.xlu0 %1263
  %1265 = vrot.lane.b32.xlu0 %v995, 4
  %v1266 = vpop.permute.xlu0 %1265
  %1271 = vrot.lane.b32.xlu0 %v1028, 6
  %v1272 = vpop.permute.xlu0 %1271
  %1273 = vrot.lane.b32.xlu0 %v1031, 6
  %v1274 = vpop.permute.xlu0 %1273
  %1279 = vrot.lane.b32.xlu0 %v1064, 8
  %v1280 = vpop.permute.xlu0 %1279
  %1281 = vrot.lane.b32.xlu0 %v1067, 8
  %v1282 = vpop.permute.xlu0 %1281
  %1287 = vrot.lane.b32.xlu0 %v1100, 10
  %v1288 = vpop.permute.xlu0 %1287
  %1289 = vrot.lane.b32.xlu0 %v1103, 10
  %v1290 = vpop.permute.xlu0 %1289
  %1295 = vrot.lane.b32.xlu0 %v1136, 12
  %v1296 = vpop.permute.xlu0 %1295
  %1297 = vrot.lane.b32.xlu0 %v1139, 12
  %v1298 = vpop.permute.xlu0 %1297
  %1303 = vrot.lane.b32.xlu0 %v1172, 14
  %v1304 = vpop.permute.xlu0 %1303
  %1305 = vrot.lane.b32.xlu0 %v1175, 14
  %v1306 = vpop.permute.xlu0 %1305
  %v1309 = vsel %vm193, %v920, %v1256
  %v1310 = vsel %vm193, %v923, %v1258
  %vm1311 = vcmask 31744
  %v1312 = vsel %vm1311, %v1309, %v1264
  %v1313 = vsel %vm1311, %v1310, %v1266
  %vm1314 = vcmask 48128
  %v1315 = vsel %vm1314, %v1312, %v1272
  %v1316 = vsel %vm1314, %v1313, %v1274
  %vm1317 = vcmask 64512
  %v1318 = vsel %vm1317, %v1315, %v1280
  %v1319 = vsel %vm1317, %v1316, %v1282
  %v1320 = vsel %vm502, %v1318, %v1288
  %v1321 = vsel %vm502, %v1319, %v1290
  %vm1322 = vcmask 97280
  %v1323 = vsel %vm1322, %v1320, %v1296
  %v1324 = vsel %vm1322, %v1321, %v1298
  %vm1325 = vcmask 113664
  %v1326 = vsel %vm1325, %v1323, %v1304
  %v1327 = vsel %vm1325, %v1324, %v1306
  %v1328 = vperm.slane %v123, 1
  %vm1329 = vcmask 130048
  %v1331 = vsel %vm1329, %v1326, 0
  %v1334 = vsel %vm1329, %v1327, 0
  %1336 = vmatpush.msra.mxu0 0.0
  %1337 = vmatpush.msra.mxu0 0.0
  %1338 = vmatpush.msra.mxu0 0.0
  %1339 = vmatpush.msra.mxu0 0.0
  %1340 = vmatpush.msra.mxu0 0.0
  %1341 = vmatpush.msra.mxu0 0.0
  %1342 = vmatpush.msra.mxu0 0.0
  %1343 = vmatpush.msra.mxu0 0.0
  %1344 = vmatpush.msra.mxu0 0.0
  %1345 = vmatpush.msra.mxu0 0.0
  %1346 = vmatpush.msra.mxu0 0.0
  %1347 = vmatpush.msra.mxu0 0.0
  %1348 = vmatpush.msra.mxu0 0.0
  %1349 = vmatpush.msra.mxu0 0.0
  %1350 = vmatpush.msra.mxu0 %v119
  %1351 = vmatpush.msra.mxu0 %v118
  %1352 = vmatmul.f32.gmra.mxu0 %v1331
  %v1353 = vpop.f32.mrf.mxu0
  %v1354 = vadd.f32 %v1328, %v1353
  %1355 = vmatmul.f32.gmra.mxu0 %v1334
  %v1356 = vpop.f32.mrf.mxu0
  %v1357 = vadd.f32 %v1328, %v1356
  %1358 = vdwg.mxu0
  %v1359 = vadd.f32 %v1354, %v73
  %v1360 = vadd.f32 %v1357, %v76
  %v1361 = vsel %vm125, %v1359, 0.0
  %1362 = vadd.xlane.f32.xlu0 %v1361
  %v1363 = vpop.xlane.xlu0 %1362
  %vm1364 = vcmask 50176
  %v1365 = vsel %vm1364, %v1360, 0.0
  %1366 = vadd.xlane.f32.xlu0 %v1365
  %v1367 = vpop.xlane.xlu0 %1366
  %v1368 = vrcp.pop 7.0
  %v1369 = vmul.f32 7.0, %v1368
  %v1370 = vsub.f32 1.0, %v1369
  %v1371 = vmul.f32 %v1368, %v1370
  %v1372 = vadd.f32 %v1368, %v1371
  %vm1373 = vweird.f32 %v1368
  %v1374 = vsel %vm1373, %v1368, %v1372
  %v1375 = vmul.f32 %v1363, %v1374
  %v1376 = vmul.f32 %v1367, %v1374
  %v1377 = vsub.f32 %v1359, %v1375
  %v1378 = vsub.f32 %v1360, %v1376
  %v1379 = vmul.f32 %v1377, %v1377
  %v1380 = vmul.f32 %v1378, %v1378
  %v1381 = vsel %vm125, %v1379, 0.0
  %1382 = vadd.xlane.f32.xlu0 %v1381
  %v1383 = vpop.xlane.xlu0 %1382
  %v1384 = vsel %vm1364, %v1380, 0.0
  %1385 = vadd.xlane.f32.xlu0 %v1384
  %v1386 = vpop.xlane.xlu0 %1385
  %v1387 = vmul.f32 %v1383, %v1374
  %v1388 = vmul.f32 %v1386, %v1374
  %v1389 = vadd.f32 %v1387, 1e-05
  %v1390 = vadd.f32 %v1388, 1e-05
  %v1391 = vrsqrt.pop %v1389
  %v1392 = vmul.f32 %v1391, %v1389
  %v1393 = vmul.f32 %v1392, %v1391
  %v1394 = vmul.f32 0.5, %v1393
  %v1395 = vsub.f32 1.5, %v1394
  %v1396 = vmul.f32 %v1391, %v1395
  %vm1397 = vweird.f32 %v1389
  %vm1398 = vweird.f32 %v1391
  %vm1399 = vmor %vm1397, %vm1398
  %v1400 = vsel %vm1399, %v1391, %v1396
  %v1401 = vrsqrt.pop %v1390
  %v1402 = vmul.f32 %v1401, %v1390
  %v1403 = vmul.f32 %v1402, %v1401
  %v1404 = vmul.f32 0.5, %v1403
  %v1405 = vsub.f32 1.5, %v1404
  %v1406 = vmul.f32 %v1401, %v1405
  %vm1407 = vweird.f32 %v1390
  %vm1408 = vweird.f32 %v1401
  %vm1409 = vmor %vm1407, %vm1408
  %v1410 = vsel %vm1409, %v1401, %v1406
  %v1411 = vmul.f32 %v1377, %v1400
  %v1412 = vmul.f32 %v1378, %v1410
  %v1413 = vperm.slane %v123, 2
  %v1414 = vmul.f32 %v1411, %v1413
  %v1415 = vmul.f32 %v1412, %v1413
  %v1416 = vperm.slane %v123, 3
  %v1417 = vadd.f32 %v1414, %v1416
  %v1418 = vadd.f32 %v1415, %v1416
  %1419 = vrot.lane.b32.xlu0 %v117, 80
  %v1420 = vpop.permute.xlu0 %1419
  %1422 = vrot.lane.b32.xlu0 %v124, 80
  %v1423 = vpop.permute.xlu0 %1422
  %v1426 = vsel %vm125, %v1417, 0
  %v1429 = vsel %vm125, %v1418, 0
  %v1431 = vsel %vm132, %v1420, 0
  %1433 = vmatpush.msra.mxu0 0.0
  %1434 = vmatpush.msra.mxu0 0.0
  %1435 = vmatpush.msra.mxu0 0.0
  %1436 = vmatpush.msra.mxu0 0.0
  %1437 = vmatpush.msra.mxu0 0.0
  %1438 = vmatpush.msra.mxu0 0.0
  %1439 = vmatpush.msra.mxu0 0.0
  %1440 = vmatpush.msra.mxu0 0.0
  %1441 = vmatpush.msra.mxu0 0.0
  %1442 = vmatpush.msra.mxu0 0.0
  %1443 = vmatpush.msra.mxu0 0.0
  %1444 = vmatpush.msra.mxu0 0.0
  %1445 = vmatpush.msra.mxu0 0.0
  %1446 = vmatpush.msra.mxu0 0.0
  %1447 = vmatpush.msra.mxu0 0.0
  %1448 = vmatpush.msra.mxu0 %v1431
  %1449 = vmatmul.f32.gmra.mxu0 %v1426
  %v1450 = vpop.f32.mrf.mxu0
  %v1451 = vadd.f32 %v1423, %v1450
  %1452 = vmatmul.f32.gmra.mxu0 %v1429
  %v1453 = vpop.f32.mrf.mxu0
  %v1454 = vadd.f32 %v1423, %v1453
  %1455 = vdwg.mxu0
  %v1456 = vmax.f32 %v1451, 0.0
  %v1457 = vmax.f32 %v1454, 0.0
  %v1458 = vperm.slane %v123, 4
  %v1460 = vsel %vm1329, %v1456, 0
  %v1463 = vsel %vm1329, %v1457, 0
  %1465 = vmatpush.msra.mxu0 0.0
  %1466 = vmatpush.msra.mxu0 0.0
  %1467 = vmatpush.msra.mxu0 0.0
  %1468 = vmatpush.msra.mxu0 0.0
  %1469 = vmatpush.msra.mxu0 0.0
  %1470 = vmatpush.msra.mxu0 0.0
  %1471 = vmatpush.msra.mxu0 0.0
  %1472 = vmatpush.msra.mxu0 0.0
  %1473 = vmatpush.msra.mxu0 0.0
  %1474 = vmatpush.msra.mxu0 0.0
  %1475 = vmatpush.msra.mxu0 0.0
  %1476 = vmatpush.msra.mxu0 0.0
  %1477 = vmatpush.msra.mxu0 0.0
  %1478 = vmatpush.msra.mxu0 0.0
  %1479 = vmatpush.msra.mxu0 %v122
  %1480 = vmatpush.msra.mxu0 %v121
  %1481 = vmatmul.f32.gmra.mxu0 %v1460
  %v1482 = vpop.f32.mrf.mxu0
  %v1483 = vadd.f32 %v1458, %v1482
  %1484 = vmatmul.f32.gmra.mxu0 %v1463
  %v1485 = vpop.f32.mrf.mxu0
  %v1486 = vadd.f32 %v1458, %v1485
  %1487 = vdwg.mxu0
  %v1488 = vadd.f32 %v1483, %v1417
  %v1489 = vadd.f32 %v1486, %v1418
  %v1490 = vsel %vm125, %v1488, 0.0
  %1491 = vadd.xlane.f32.xlu0 %v1490
  %v1492 = vpop.xlane.xlu0 %1491
  %v1493 = vsel %vm1364, %v1489, 0.0
  %1494 = vadd.xlane.f32.xlu0 %v1493
  %v1495 = vpop.xlane.xlu0 %1494
  %v1496 = vmul.f32 %v1492, %v1374
  %v1497 = vmul.f32 %v1495, %v1374
  %v1498 = vsub.f32 %v1488, %v1496
  %v1499 = vsub.f32 %v1489, %v1497
  %v1500 = vmul.f32 %v1498, %v1498
  %v1501 = vmul.f32 %v1499, %v1499
  %v1502 = vsel %vm125, %v1500, 0.0
  %1503 = vadd.xlane.f32.xlu0 %v1502
  %v1504 = vpop.xlane.xlu0 %1503
  %v1505 = vsel %vm1364, %v1501, 0.0
  %1506 = vadd.xlane.f32.xlu0 %v1505
  %v1507 = vpop.xlane.xlu0 %1506
  %v1508 = vmul.f32 %v1504, %v1374
  %v1509 = vmul.f32 %v1507, %v1374
  %v1510 = vadd.f32 %v1508, 1e-05
  %v1511 = vadd.f32 %v1509, 1e-05
  %v1512 = vrsqrt.pop %v1510
  %v1513 = vmul.f32 %v1512, %v1510
  %v1514 = vmul.f32 %v1513, %v1512
  %v1515 = vmul.f32 0.5, %v1514
  %v1516 = vsub.f32 1.5, %v1515
  %v1517 = vmul.f32 %v1512, %v1516
  %vm1518 = vweird.f32 %v1510
  %vm1519 = vweird.f32 %v1512
  %vm1520 = vmor %vm1518, %vm1519
  %v1521 = vsel %vm1520, %v1512, %v1517
  %v1522 = vrsqrt.pop %v1511
  %v1523 = vmul.f32 %v1522, %v1511
  %v1524 = vmul.f32 %v1523, %v1522
  %v1525 = vmul.f32 0.5, %v1524
  %v1526 = vsub.f32 1.5, %v1525
  %v1527 = vmul.f32 %v1522, %v1526
  %vm1528 = vweird.f32 %v1511
  %vm1529 = vweird.f32 %v1522
  %vm1530 = vmor %vm1528, %vm1529
  %v1531 = vsel %vm1530, %v1522, %v1527
  %v1532 = vmul.f32 %v1498, %v1521
  %v1533 = vmul.f32 %v1499, %v1531
  %v1534 = vperm.slane %v123, 5
  %v1535 = vmul.f32 %v1532, %v1534
  %v1536 = vmul.f32 %v1533, %v1534
  %v1537 = vperm.slane %v123, 6
  %v1538 = vadd.f32 %v1535, %v1537
  %v1539 = vadd.f32 %v1536, %v1537
  %s1540 = scalar_lea.vmem %s3, 8
  %v1541 = vld [vmem:[%s1540] sm:$0x7f]
  %s1542 = scalar_lea.vmem %s4, 32
  %v1543 = vld [vmem:[%s1542] sm:$0xff]
  %v1544 = vld [vmem:[%s1542 + $0x8] sm:$0xff]
  %s1545 = scalar_lea.vmem %s4, 48
  %v1546 = vld [vmem:[%s1545] sm:$0xff]
  %v1547 = vld [vmem:[%s1545 + $0x8] sm:$0xff]
  %s1548 = scalar_lea.vmem %s5, 8
  %v1549 = vld [vmem:[%s1548] sm:$0x7f]
  %v1550 = vperm.slane %v1549, 0
  %v1552 = vsel %vm125, %v1538, 0
  %v1555 = vsel %vm125, %v1539, 0
  %v1558 = vsel %vm132, %v1541, 0
  %1560 = vmatpush.msra.mxu0 0.0
  %1561 = vmatpush.msra.mxu0 0.0
  %1562 = vmatpush.msra.mxu0 0.0
  %1563 = vmatpush.msra.mxu0 0.0
  %1564 = vmatpush.msra.mxu0 0.0
  %1565 = vmatpush.msra.mxu0 0.0
  %1566 = vmatpush.msra.mxu0 0.0
  %1567 = vmatpush.msra.mxu0 0.0
  %1568 = vmatpush.msra.mxu0 0.0
  %1569 = vmatpush.msra.mxu0 0.0
  %1570 = vmatpush.msra.mxu0 0.0
  %1571 = vmatpush.msra.mxu0 0.0
  %1572 = vmatpush.msra.mxu0 0.0
  %1573 = vmatpush.msra.mxu0 0.0
  %1574 = vmatpush.msra.mxu0 0.0
  %1575 = vmatpush.msra.mxu0 %v1558
  %1576 = vmatmul.f32.gmra.mxu0 %v1552
  %v1577 = vpop.f32.mrf.mxu0
  %v1578 = vadd.f32 %v1550, %v1577
  %1579 = vmatmul.f32.gmra.mxu0 %v1555
  %v1580 = vpop.f32.mrf.mxu0
  %v1581 = vadd.f32 %v1550, %v1580
  %1582 = vdwg.mxu0
  %1585 = vrot.lane.b32.xlu0 %v1578, 126
  %v1586 = vpop.permute.xlu0 %1585
  %1587 = vrot.lane.b32.xlu0 %v1581, 126
  %v1588 = vpop.permute.xlu0 %1587
  %1589 = vrot.lane.b32.xlu0 %v1578, 124
  %v1590 = vpop.permute.xlu0 %1589
  %1591 = vrot.lane.b32.xlu0 %v1581, 124
  %v1592 = vpop.permute.xlu0 %1591
  %1593 = vrot.lane.b32.xlu0 %v1578, 122
  %v1594 = vpop.permute.xlu0 %1593
  %1595 = vrot.lane.b32.xlu0 %v1581, 122
  %v1596 = vpop.permute.xlu0 %1595
  %1597 = vrot.lane.b32.xlu0 %v1578, 120
  %v1598 = vpop.permute.xlu0 %1597
  %1599 = vrot.lane.b32.xlu0 %v1581, 120
  %v1600 = vpop.permute.xlu0 %1599
  %1601 = vrot.lane.b32.xlu0 %v1578, 118
  %v1602 = vpop.permute.xlu0 %1601
  %1603 = vrot.lane.b32.xlu0 %v1581, 118
  %v1604 = vpop.permute.xlu0 %1603
  %1605 = vrot.lane.b32.xlu0 %v1578, 116
  %v1606 = vpop.permute.xlu0 %1605
  %1607 = vrot.lane.b32.xlu0 %v1581, 116
  %v1608 = vpop.permute.xlu0 %1607
  %1609 = vrot.lane.b32.xlu0 %v1578, 114
  %v1610 = vpop.permute.xlu0 %1609
  %1611 = vrot.lane.b32.xlu0 %v1581, 114
  %v1612 = vpop.permute.xlu0 %1611
  %1613 = vrot.lane.b32.xlu0 %v1578, 112
  %v1614 = vpop.permute.xlu0 %1613
  %1615 = vrot.lane.b32.xlu0 %v1581, 112
  %v1616 = vpop.permute.xlu0 %1615
  %v1617 = vsel %vm193, %v1578, 0
  %v1619 = vsel %vm193, %v1581, 0
  %v1621 = vsel %vm193, %v1614, 0
  %v1623 = vsel %vm193, %v1616, 0
  %1625 = vmatpush.xpose.msra.mxu0 0.0
  %1626 = vmatpush.xpose.msra.mxu0 0.0
  %1627 = vmatpush.xpose.msra.mxu0 0.0
  %1628 = vmatpush.xpose.msra.mxu0 0.0
  %1629 = vmatpush.xpose.msra.mxu0 0.0
  %1630 = vmatpush.xpose.msra.mxu0 0.0
  %1631 = vmatpush.xpose.msra.mxu0 0.0
  %1632 = vmatpush.xpose.msra.mxu0 0.0
  %1633 = vmatpush.xpose.msra.mxu0 0.0
  %1634 = vmatpush.xpose.msra.mxu0 0.0
  %1635 = vmatpush.xpose.msra.mxu0 0.0
  %1636 = vmatpush.xpose.msra.mxu0 0.0
  %1637 = vmatpush.xpose.msra.mxu0 0.0
  %1638 = vmatpush.xpose.msra.mxu0 0.0
  %1639 = vmatpush.xpose.msra.mxu0 %v1623
  %1640 = vmatpush.xpose.msra.mxu0 %v1621
  %1641 = vmatmul.f32.gmra.mxu0 %v1617
  %v1642 = vpop.f32.mrf.mxu0
  %v1643 = vadd.f32 0.0, %v1642
  %1644 = vmatmul.f32.gmra.mxu0 %v1619
  %v1645 = vpop.f32.mrf.mxu0
  %v1646 = vadd.f32 0.0, %v1645
  %1647 = vdwg.mxu0
  %1648 = vrot.lane.b32.xlu0 %v1586, 112
  %v1649 = vpop.permute.xlu0 %1648
  %1650 = vrot.lane.b32.xlu0 %v1588, 112
  %v1651 = vpop.permute.xlu0 %1650
  %v1652 = vsel %vm193, %v1586, 0
  %v1654 = vsel %vm193, %v1588, 0
  %v1656 = vsel %vm193, %v1649, 0
  %v1658 = vsel %vm193, %v1651, 0
  %1660 = vmatpush.xpose.msra.mxu0 0.0
  %1661 = vmatpush.xpose.msra.mxu0 0.0
  %1662 = vmatpush.xpose.msra.mxu0 0.0
  %1663 = vmatpush.xpose.msra.mxu0 0.0
  %1664 = vmatpush.xpose.msra.mxu0 0.0
  %1665 = vmatpush.xpose.msra.mxu0 0.0
  %1666 = vmatpush.xpose.msra.mxu0 0.0
  %1667 = vmatpush.xpose.msra.mxu0 0.0
  %1668 = vmatpush.xpose.msra.mxu0 0.0
  %1669 = vmatpush.xpose.msra.mxu0 0.0
  %1670 = vmatpush.xpose.msra.mxu0 0.0
  %1671 = vmatpush.xpose.msra.mxu0 0.0
  %1672 = vmatpush.xpose.msra.mxu0 0.0
  %1673 = vmatpush.xpose.msra.mxu0 0.0
  %1674 = vmatpush.xpose.msra.mxu0 %v1658
  %1675 = vmatpush.xpose.msra.mxu0 %v1656
  %1676 = vmatmul.f32.gmra.mxu0 %v1652
  %v1677 = vpop.f32.mrf.mxu0
  %v1678 = vadd.f32 0.0, %v1677
  %1679 = vmatmul.f32.gmra.mxu0 %v1654
  %v1680 = vpop.f32.mrf.mxu0
  %v1681 = vadd.f32 0.0, %v1680
  %1682 = vdwg.mxu0
  %1683 = vrot.lane.b32.xlu0 %v1590, 112
  %v1684 = vpop.permute.xlu0 %1683
  %1685 = vrot.lane.b32.xlu0 %v1592, 112
  %v1686 = vpop.permute.xlu0 %1685
  %v1687 = vsel %vm193, %v1590, 0
  %v1689 = vsel %vm193, %v1592, 0
  %v1691 = vsel %vm193, %v1684, 0
  %v1693 = vsel %vm193, %v1686, 0
  %1695 = vmatpush.xpose.msra.mxu0 0.0
  %1696 = vmatpush.xpose.msra.mxu0 0.0
  %1697 = vmatpush.xpose.msra.mxu0 0.0
  %1698 = vmatpush.xpose.msra.mxu0 0.0
  %1699 = vmatpush.xpose.msra.mxu0 0.0
  %1700 = vmatpush.xpose.msra.mxu0 0.0
  %1701 = vmatpush.xpose.msra.mxu0 0.0
  %1702 = vmatpush.xpose.msra.mxu0 0.0
  %1703 = vmatpush.xpose.msra.mxu0 0.0
  %1704 = vmatpush.xpose.msra.mxu0 0.0
  %1705 = vmatpush.xpose.msra.mxu0 0.0
  %1706 = vmatpush.xpose.msra.mxu0 0.0
  %1707 = vmatpush.xpose.msra.mxu0 0.0
  %1708 = vmatpush.xpose.msra.mxu0 0.0
  %1709 = vmatpush.xpose.msra.mxu0 %v1693
  %1710 = vmatpush.xpose.msra.mxu0 %v1691
  %1711 = vmatmul.f32.gmra.mxu0 %v1687
  %v1712 = vpop.f32.mrf.mxu0
  %v1713 = vadd.f32 0.0, %v1712
  %1714 = vmatmul.f32.gmra.mxu0 %v1689
  %v1715 = vpop.f32.mrf.mxu0
  %v1716 = vadd.f32 0.0, %v1715
  %1717 = vdwg.mxu0
  %1718 = vrot.lane.b32.xlu0 %v1594, 112
  %v1719 = vpop.permute.xlu0 %1718
  %1720 = vrot.lane.b32.xlu0 %v1596, 112
  %v1721 = vpop.permute.xlu0 %1720
  %v1722 = vsel %vm193, %v1594, 0
  %v1724 = vsel %vm193, %v1596, 0
  %v1726 = vsel %vm193, %v1719, 0
  %v1728 = vsel %vm193, %v1721, 0
  %1730 = vmatpush.xpose.msra.mxu0 0.0
  %1731 = vmatpush.xpose.msra.mxu0 0.0
  %1732 = vmatpush.xpose.msra.mxu0 0.0
  %1733 = vmatpush.xpose.msra.mxu0 0.0
  %1734 = vmatpush.xpose.msra.mxu0 0.0
  %1735 = vmatpush.xpose.msra.mxu0 0.0
  %1736 = vmatpush.xpose.msra.mxu0 0.0
  %1737 = vmatpush.xpose.msra.mxu0 0.0
  %1738 = vmatpush.xpose.msra.mxu0 0.0
  %1739 = vmatpush.xpose.msra.mxu0 0.0
  %1740 = vmatpush.xpose.msra.mxu0 0.0
  %1741 = vmatpush.xpose.msra.mxu0 0.0
  %1742 = vmatpush.xpose.msra.mxu0 0.0
  %1743 = vmatpush.xpose.msra.mxu0 0.0
  %1744 = vmatpush.xpose.msra.mxu0 %v1728
  %1745 = vmatpush.xpose.msra.mxu0 %v1726
  %1746 = vmatmul.f32.gmra.mxu0 %v1722
  %v1747 = vpop.f32.mrf.mxu0
  %v1748 = vadd.f32 0.0, %v1747
  %1749 = vmatmul.f32.gmra.mxu0 %v1724
  %v1750 = vpop.f32.mrf.mxu0
  %v1751 = vadd.f32 0.0, %v1750
  %1752 = vdwg.mxu0
  %1753 = vrot.lane.b32.xlu0 %v1598, 112
  %v1754 = vpop.permute.xlu0 %1753
  %1755 = vrot.lane.b32.xlu0 %v1600, 112
  %v1756 = vpop.permute.xlu0 %1755
  %v1757 = vsel %vm193, %v1598, 0
  %v1759 = vsel %vm193, %v1600, 0
  %v1761 = vsel %vm193, %v1754, 0
  %v1763 = vsel %vm193, %v1756, 0
  %1765 = vmatpush.xpose.msra.mxu0 0.0
  %1766 = vmatpush.xpose.msra.mxu0 0.0
  %1767 = vmatpush.xpose.msra.mxu0 0.0
  %1768 = vmatpush.xpose.msra.mxu0 0.0
  %1769 = vmatpush.xpose.msra.mxu0 0.0
  %1770 = vmatpush.xpose.msra.mxu0 0.0
  %1771 = vmatpush.xpose.msra.mxu0 0.0
  %1772 = vmatpush.xpose.msra.mxu0 0.0
  %1773 = vmatpush.xpose.msra.mxu0 0.0
  %1774 = vmatpush.xpose.msra.mxu0 0.0
  %1775 = vmatpush.xpose.msra.mxu0 0.0
  %1776 = vmatpush.xpose.msra.mxu0 0.0
  %1777 = vmatpush.xpose.msra.mxu0 0.0
  %1778 = vmatpush.xpose.msra.mxu0 0.0
  %1779 = vmatpush.xpose.msra.mxu0 %v1763
  %1780 = vmatpush.xpose.msra.mxu0 %v1761
  %1781 = vmatmul.f32.gmra.mxu0 %v1757
  %v1782 = vpop.f32.mrf.mxu0
  %v1783 = vadd.f32 0.0, %v1782
  %1784 = vmatmul.f32.gmra.mxu0 %v1759
  %v1785 = vpop.f32.mrf.mxu0
  %v1786 = vadd.f32 0.0, %v1785
  %1787 = vdwg.mxu0
  %1788 = vrot.lane.b32.xlu0 %v1602, 112
  %v1789 = vpop.permute.xlu0 %1788
  %1790 = vrot.lane.b32.xlu0 %v1604, 112
  %v1791 = vpop.permute.xlu0 %1790
  %v1792 = vsel %vm193, %v1602, 0
  %v1794 = vsel %vm193, %v1604, 0
  %v1796 = vsel %vm193, %v1789, 0
  %v1798 = vsel %vm193, %v1791, 0
  %1800 = vmatpush.xpose.msra.mxu0 0.0
  %1801 = vmatpush.xpose.msra.mxu0 0.0
  %1802 = vmatpush.xpose.msra.mxu0 0.0
  %1803 = vmatpush.xpose.msra.mxu0 0.0
  %1804 = vmatpush.xpose.msra.mxu0 0.0
  %1805 = vmatpush.xpose.msra.mxu0 0.0
  %1806 = vmatpush.xpose.msra.mxu0 0.0
  %1807 = vmatpush.xpose.msra.mxu0 0.0
  %1808 = vmatpush.xpose.msra.mxu0 0.0
  %1809 = vmatpush.xpose.msra.mxu0 0.0
  %1810 = vmatpush.xpose.msra.mxu0 0.0
  %1811 = vmatpush.xpose.msra.mxu0 0.0
  %1812 = vmatpush.xpose.msra.mxu0 0.0
  %1813 = vmatpush.xpose.msra.mxu0 0.0
  %1814 = vmatpush.xpose.msra.mxu0 %v1798
  %1815 = vmatpush.xpose.msra.mxu0 %v1796
  %1816 = vmatmul.f32.gmra.mxu0 %v1792
  %v1817 = vpop.f32.mrf.mxu0
  %v1818 = vadd.f32 0.0, %v1817
  %1819 = vmatmul.f32.gmra.mxu0 %v1794
  %v1820 = vpop.f32.mrf.mxu0
  %v1821 = vadd.f32 0.0, %v1820
  %1822 = vdwg.mxu0
  %1823 = vrot.lane.b32.xlu0 %v1606, 112
  %v1824 = vpop.permute.xlu0 %1823
  %1825 = vrot.lane.b32.xlu0 %v1608, 112
  %v1826 = vpop.permute.xlu0 %1825
  %v1827 = vsel %vm193, %v1606, 0
  %v1829 = vsel %vm193, %v1608, 0
  %v1831 = vsel %vm193, %v1824, 0
  %v1833 = vsel %vm193, %v1826, 0
  %1835 = vmatpush.xpose.msra.mxu0 0.0
  %1836 = vmatpush.xpose.msra.mxu0 0.0
  %1837 = vmatpush.xpose.msra.mxu0 0.0
  %1838 = vmatpush.xpose.msra.mxu0 0.0
  %1839 = vmatpush.xpose.msra.mxu0 0.0
  %1840 = vmatpush.xpose.msra.mxu0 0.0
  %1841 = vmatpush.xpose.msra.mxu0 0.0
  %1842 = vmatpush.xpose.msra.mxu0 0.0
  %1843 = vmatpush.xpose.msra.mxu0 0.0
  %1844 = vmatpush.xpose.msra.mxu0 0.0
  %1845 = vmatpush.xpose.msra.mxu0 0.0
  %1846 = vmatpush.xpose.msra.mxu0 0.0
  %1847 = vmatpush.xpose.msra.mxu0 0.0
  %1848 = vmatpush.xpose.msra.mxu0 0.0
  %1849 = vmatpush.xpose.msra.mxu0 %v1833
  %1850 = vmatpush.xpose.msra.mxu0 %v1831
  %1851 = vmatmul.f32.gmra.mxu0 %v1827
  %v1852 = vpop.f32.mrf.mxu0
  %v1853 = vadd.f32 0.0, %v1852
  %1854 = vmatmul.f32.gmra.mxu0 %v1829
  %v1855 = vpop.f32.mrf.mxu0
  %v1856 = vadd.f32 0.0, %v1855
  %1857 = vdwg.mxu0
  %1858 = vrot.lane.b32.xlu0 %v1610, 112
  %v1859 = vpop.permute.xlu0 %1858
  %1860 = vrot.lane.b32.xlu0 %v1612, 112
  %v1861 = vpop.permute.xlu0 %1860
  %v1862 = vsel %vm193, %v1610, 0
  %v1864 = vsel %vm193, %v1612, 0
  %v1866 = vsel %vm193, %v1859, 0
  %v1868 = vsel %vm193, %v1861, 0
  %1870 = vmatpush.xpose.msra.mxu0 0.0
  %1871 = vmatpush.xpose.msra.mxu0 0.0
  %1872 = vmatpush.xpose.msra.mxu0 0.0
  %1873 = vmatpush.xpose.msra.mxu0 0.0
  %1874 = vmatpush.xpose.msra.mxu0 0.0
  %1875 = vmatpush.xpose.msra.mxu0 0.0
  %1876 = vmatpush.xpose.msra.mxu0 0.0
  %1877 = vmatpush.xpose.msra.mxu0 0.0
  %1878 = vmatpush.xpose.msra.mxu0 0.0
  %1879 = vmatpush.xpose.msra.mxu0 0.0
  %1880 = vmatpush.xpose.msra.mxu0 0.0
  %1881 = vmatpush.xpose.msra.mxu0 0.0
  %1882 = vmatpush.xpose.msra.mxu0 0.0
  %1883 = vmatpush.xpose.msra.mxu0 0.0
  %1884 = vmatpush.xpose.msra.mxu0 %v1868
  %1885 = vmatpush.xpose.msra.mxu0 %v1866
  %1886 = vmatmul.f32.gmra.mxu0 %v1862
  %v1887 = vpop.f32.mrf.mxu0
  %v1888 = vadd.f32 0.0, %v1887
  %1889 = vmatmul.f32.gmra.mxu0 %v1864
  %v1890 = vpop.f32.mrf.mxu0
  %v1891 = vadd.f32 0.0, %v1890
  %1892 = vdwg.mxu0
  %v1893 = vmul.f32 %v1643, 0.70710677
  %v1894 = vmul.f32 %v1646, 0.70710677
  %v1895 = vmul.f32 %v1678, 0.70710677
  %v1896 = vmul.f32 %v1681, 0.70710677
  %v1897 = vmul.f32 %v1713, 0.70710677
  %v1898 = vmul.f32 %v1716, 0.70710677
  %v1899 = vmul.f32 %v1748, 0.70710677
  %v1900 = vmul.f32 %v1751, 0.70710677
  %v1901 = vmul.f32 %v1783, 0.70710677
  %v1902 = vmul.f32 %v1786, 0.70710677
  %v1903 = vmul.f32 %v1818, 0.70710677
  %v1904 = vmul.f32 %v1821, 0.70710677
  %v1905 = vmul.f32 %v1853, 0.70710677
  %v1906 = vmul.f32 %v1856, 0.70710677
  %v1907 = vmul.f32 %v1888, 0.70710677
  %v1908 = vmul.f32 %v1891, 0.70710677
  %v1909 = vsel %vm115, %v111, %v1893
  %v1910 = vsel %vm116, %v112, %v1894
  %v1911 = vsel %vm115, %v111, %v1895
  %v1912 = vsel %vm116, %v112, %v1896
  %v1913 = vsel %vm115, %v111, %v1897
  %v1914 = vsel %vm116, %v112, %v1898
  %v1915 = vsel %vm115, %v111, %v1899
  %v1916 = vsel %vm116, %v112, %v1900
  %v1917 = vsel %vm115, %v111, %v1901
  %v1918 = vsel %vm116, %v112, %v1902
  %v1919 = vsel %vm115, %v111, %v1903
  %v1920 = vsel %vm116, %v112, %v1904
  %v1921 = vsel %vm115, %v111, %v1905
  %v1922 = vsel %vm116, %v112, %v1906
  %v1923 = vsel %vm115, %v111, %v1907
  %v1924 = vsel %vm116, %v112, %v1908
  %v1925 = vsel %vm502, %v1909, -inf
  %1926 = vmax.xlane.f32.xlu0 %v1925
  %v1927 = vpop.xlane.xlu0 %1926
  %v1928 = vsel %vm506, %v1910, -inf
  %1929 = vmax.xlane.f32.xlu0 %v1928
  %v1930 = vpop.xlane.xlu0 %1929
  %v1931 = vsel %vm502, %v1911, -inf
  %1932 = vmax.xlane.f32.xlu0 %v1931
  %v1933 = vpop.xlane.xlu0 %1932
  %v1934 = vsel %vm506, %v1912, -inf
  %1935 = vmax.xlane.f32.xlu0 %v1934
  %v1936 = vpop.xlane.xlu0 %1935
  %v1937 = vsel %vm502, %v1913, -inf
  %1938 = vmax.xlane.f32.xlu0 %v1937
  %v1939 = vpop.xlane.xlu0 %1938
  %v1940 = vsel %vm506, %v1914, -inf
  %1941 = vmax.xlane.f32.xlu0 %v1940
  %v1942 = vpop.xlane.xlu0 %1941
  %v1943 = vsel %vm502, %v1915, -inf
  %1944 = vmax.xlane.f32.xlu0 %v1943
  %v1945 = vpop.xlane.xlu0 %1944
  %v1946 = vsel %vm506, %v1916, -inf
  %1947 = vmax.xlane.f32.xlu0 %v1946
  %v1948 = vpop.xlane.xlu0 %1947
  %v1949 = vsel %vm502, %v1917, -inf
  %1950 = vmax.xlane.f32.xlu0 %v1949
  %v1951 = vpop.xlane.xlu0 %1950
  %v1952 = vsel %vm506, %v1918, -inf
  %1953 = vmax.xlane.f32.xlu0 %v1952
  %v1954 = vpop.xlane.xlu0 %1953
  %v1955 = vsel %vm502, %v1919, -inf
  %1956 = vmax.xlane.f32.xlu0 %v1955
  %v1957 = vpop.xlane.xlu0 %1956
  %v1958 = vsel %vm506, %v1920, -inf
  %1959 = vmax.xlane.f32.xlu0 %v1958
  %v1960 = vpop.xlane.xlu0 %1959
  %v1961 = vsel %vm502, %v1921, -inf
  %1962 = vmax.xlane.f32.xlu0 %v1961
  %v1963 = vpop.xlane.xlu0 %1962
  %v1964 = vsel %vm506, %v1922, -inf
  %1965 = vmax.xlane.f32.xlu0 %v1964
  %v1966 = vpop.xlane.xlu0 %1965
  %v1967 = vsel %vm502, %v1923, -inf
  %1968 = vmax.xlane.f32.xlu0 %v1967
  %v1969 = vpop.xlane.xlu0 %1968
  %v1970 = vsel %vm506, %v1924, -inf
  %1971 = vmax.xlane.f32.xlu0 %v1970
  %v1972 = vpop.xlane.xlu0 %1971
  %v1973 = vsub.f32 %v1909, %v1927
  %v1974 = vsub.f32 %v1910, %v1930
  %v1975 = vsub.f32 %v1911, %v1933
  %v1976 = vsub.f32 %v1912, %v1936
  %v1977 = vsub.f32 %v1913, %v1939
  %v1978 = vsub.f32 %v1914, %v1942
  %v1979 = vsub.f32 %v1915, %v1945
  %v1980 = vsub.f32 %v1916, %v1948
  %v1981 = vsub.f32 %v1917, %v1951
  %v1982 = vsub.f32 %v1918, %v1954
  %v1983 = vsub.f32 %v1919, %v1957
  %v1984 = vsub.f32 %v1920, %v1960
  %v1985 = vsub.f32 %v1921, %v1963
  %v1986 = vsub.f32 %v1922, %v1966
  %v1987 = vsub.f32 %v1923, %v1969
  %v1988 = vsub.f32 %v1924, %v1972
  %v1989 = vmul.f32 %v1973, 1.442695
  %v1990 = vpow.pop %v1989
  %v1991 = vmul.f32 %v1974, 1.442695
  %v1992 = vpow.pop %v1991
  %v1993 = vmul.f32 %v1975, 1.442695
  %v1994 = vpow.pop %v1993
  %v1995 = vmul.f32 %v1976, 1.442695
  %v1996 = vpow.pop %v1995
  %v1997 = vmul.f32 %v1977, 1.442695
  %v1998 = vpow.pop %v1997
  %v1999 = vmul.f32 %v1978, 1.442695
  %v2000 = vpow.pop %v1999
  %v2001 = vmul.f32 %v1979, 1.442695
  %v2002 = vpow.pop %v2001
  %v2003 = vmul.f32 %v1980, 1.442695
  %v2004 = vpow.pop %v2003
  %v2005 = vmul.f32 %v1981, 1.442695
  %v2006 = vpow.pop %v2005
  %v2007 = vmul.f32 %v1982, 1.442695
  %v2008 = vpow.pop %v2007
  %v2009 = vmul.f32 %v1983, 1.442695
  %v2010 = vpow.pop %v2009
  %v2011 = vmul.f32 %v1984, 1.442695
  %v2012 = vpow.pop %v2011
  %v2013 = vmul.f32 %v1985, 1.442695
  %v2014 = vpow.pop %v2013
  %v2015 = vmul.f32 %v1986, 1.442695
  %v2016 = vpow.pop %v2015
  %v2017 = vmul.f32 %v1987, 1.442695
  %v2018 = vpow.pop %v2017
  %v2019 = vmul.f32 %v1988, 1.442695
  %v2020 = vpow.pop %v2019
  %v2021 = vsel %vm502, %v1990, 0.0
  %2022 = vadd.xlane.f32.xlu0 %v2021
  %v2023 = vpop.xlane.xlu0 %2022
  %v2024 = vsel %vm506, %v1992, 0.0
  %2025 = vadd.xlane.f32.xlu0 %v2024
  %v2026 = vpop.xlane.xlu0 %2025
  %v2027 = vsel %vm502, %v1994, 0.0
  %2028 = vadd.xlane.f32.xlu0 %v2027
  %v2029 = vpop.xlane.xlu0 %2028
  %v2030 = vsel %vm506, %v1996, 0.0
  %2031 = vadd.xlane.f32.xlu0 %v2030
  %v2032 = vpop.xlane.xlu0 %2031
  %v2033 = vsel %vm502, %v1998, 0.0
  %2034 = vadd.xlane.f32.xlu0 %v2033
  %v2035 = vpop.xlane.xlu0 %2034
  %v2036 = vsel %vm506, %v2000, 0.0
  %2037 = vadd.xlane.f32.xlu0 %v2036
  %v2038 = vpop.xlane.xlu0 %2037
  %v2039 = vsel %vm502, %v2002, 0.0
  %2040 = vadd.xlane.f32.xlu0 %v2039
  %v2041 = vpop.xlane.xlu0 %2040
  %v2042 = vsel %vm506, %v2004, 0.0
  %2043 = vadd.xlane.f32.xlu0 %v2042
  %v2044 = vpop.xlane.xlu0 %2043
  %v2045 = vsel %vm502, %v2006, 0.0
  %2046 = vadd.xlane.f32.xlu0 %v2045
  %v2047 = vpop.xlane.xlu0 %2046
  %v2048 = vsel %vm506, %v2008, 0.0
  %2049 = vadd.xlane.f32.xlu0 %v2048
  %v2050 = vpop.xlane.xlu0 %2049
  %v2051 = vsel %vm502, %v2010, 0.0
  %2052 = vadd.xlane.f32.xlu0 %v2051
  %v2053 = vpop.xlane.xlu0 %2052
  %v2054 = vsel %vm506, %v2012, 0.0
  %2055 = vadd.xlane.f32.xlu0 %v2054
  %v2056 = vpop.xlane.xlu0 %2055
  %v2057 = vsel %vm502, %v2014, 0.0
  %2058 = vadd.xlane.f32.xlu0 %v2057
  %v2059 = vpop.xlane.xlu0 %2058
  %v2060 = vsel %vm506, %v2016, 0.0
  %2061 = vadd.xlane.f32.xlu0 %v2060
  %v2062 = vpop.xlane.xlu0 %2061
  %v2063 = vsel %vm502, %v2018, 0.0
  %2064 = vadd.xlane.f32.xlu0 %v2063
  %v2065 = vpop.xlane.xlu0 %2064
  %v2066 = vsel %vm506, %v2020, 0.0
  %2067 = vadd.xlane.f32.xlu0 %v2066
  %v2068 = vpop.xlane.xlu0 %2067
  %v2069 = vrcp.pop %v2023
  %v2070 = vmul.f32 %v2023, %v2069
  %v2071 = vsub.f32 1.0, %v2070
  %v2072 = vmul.f32 %v2069, %v2071
  %v2073 = vadd.f32 %v2069, %v2072
  %vm2074 = vweird.f32 %v2023
  %vm2075 = vweird.f32 %v2069
  %vm2076 = vmor %vm2074, %vm2075
  %v2077 = vsel %vm2076, %v2069, %v2073
  %v2078 = vand.u32 2147483647, %v2023
  %vm2079 = vcmp.eq.f32.partialorder %v2078, 8.507059e+37
  %v2080 = vand.u32 %v2023, 2147483648
  %v2081 = vor.u32 1.1754944e-38, %v2080
  %v2082 = vsel %vm2079, %v2081, %v2077
  %v2083 = vmul.f32 %v1990, %v2082
  %v2084 = vrcp.pop %v2026
  %v2085 = vmul.f32 %v2026, %v2084
  %v2086 = vsub.f32 1.0, %v2085
  %v2087 = vmul.f32 %v2084, %v2086
  %v2088 = vadd.f32 %v2084, %v2087
  %vm2089 = vweird.f32 %v2026
  %vm2090 = vweird.f32 %v2084
  %vm2091 = vmor %vm2089, %vm2090
  %v2092 = vsel %vm2091, %v2084, %v2088
  %v2093 = vand.u32 2147483647, %v2026
  %vm2094 = vcmp.eq.f32.partialorder %v2093, 8.507059e+37
  %v2095 = vand.u32 %v2026, 2147483648
  %v2096 = vor.u32 1.1754944e-38, %v2095
  %v2097 = vsel %vm2094, %v2096, %v2092
  %v2098 = vmul.f32 %v1992, %v2097
  %v2099 = vrcp.pop %v2029
  %v2100 = vmul.f32 %v2029, %v2099
  %v2101 = vsub.f32 1.0, %v2100
  %v2102 = vmul.f32 %v2099, %v2101
  %v2103 = vadd.f32 %v2099, %v2102
  %vm2104 = vweird.f32 %v2029
  %vm2105 = vweird.f32 %v2099
  %vm2106 = vmor %vm2104, %vm2105
  %v2107 = vsel %vm2106, %v2099, %v2103
  %v2108 = vand.u32 2147483647, %v2029
  %vm2109 = vcmp.eq.f32.partialorder %v2108, 8.507059e+37
  %v2110 = vand.u32 %v2029, 2147483648
  %v2111 = vor.u32 1.1754944e-38, %v2110
  %v2112 = vsel %vm2109, %v2111, %v2107
  %v2113 = vmul.f32 %v1994, %v2112
  %v2114 = vrcp.pop %v2032
  %v2115 = vmul.f32 %v2032, %v2114
  %v2116 = vsub.f32 1.0, %v2115
  %v2117 = vmul.f32 %v2114, %v2116
  %v2118 = vadd.f32 %v2114, %v2117
  %vm2119 = vweird.f32 %v2032
  %vm2120 = vweird.f32 %v2114
  %vm2121 = vmor %vm2119, %vm2120
  %v2122 = vsel %vm2121, %v2114, %v2118
  %v2123 = vand.u32 2147483647, %v2032
  %vm2124 = vcmp.eq.f32.partialorder %v2123, 8.507059e+37
  %v2125 = vand.u32 %v2032, 2147483648
  %v2126 = vor.u32 1.1754944e-38, %v2125
  %v2127 = vsel %vm2124, %v2126, %v2122
  %v2128 = vmul.f32 %v1996, %v2127
  %v2129 = vrcp.pop %v2035
  %v2130 = vmul.f32 %v2035, %v2129
  %v2131 = vsub.f32 1.0, %v2130
  %v2132 = vmul.f32 %v2129, %v2131
  %v2133 = vadd.f32 %v2129, %v2132
  %vm2134 = vweird.f32 %v2035
  %vm2135 = vweird.f32 %v2129
  %vm2136 = vmor %vm2134, %vm2135
  %v2137 = vsel %vm2136, %v2129, %v2133
  %v2138 = vand.u32 2147483647, %v2035
  %vm2139 = vcmp.eq.f32.partialorder %v2138, 8.507059e+37
  %v2140 = vand.u32 %v2035, 2147483648
  %v2141 = vor.u32 1.1754944e-38, %v2140
  %v2142 = vsel %vm2139, %v2141, %v2137
  %v2143 = vmul.f32 %v1998, %v2142
  %v2144 = vrcp.pop %v2038
  %v2145 = vmul.f32 %v2038, %v2144
  %v2146 = vsub.f32 1.0, %v2145
  %v2147 = vmul.f32 %v2144, %v2146
  %v2148 = vadd.f32 %v2144, %v2147
  %vm2149 = vweird.f32 %v2038
  %vm2150 = vweird.f32 %v2144
  %vm2151 = vmor %vm2149, %vm2150
  %v2152 = vsel %vm2151, %v2144, %v2148
  %v2153 = vand.u32 2147483647, %v2038
  %vm2154 = vcmp.eq.f32.partialorder %v2153, 8.507059e+37
  %v2155 = vand.u32 %v2038, 2147483648
  %v2156 = vor.u32 1.1754944e-38, %v2155
  %v2157 = vsel %vm2154, %v2156, %v2152
  %v2158 = vmul.f32 %v2000, %v2157
  %v2159 = vrcp.pop %v2041
  %v2160 = vmul.f32 %v2041, %v2159
  %v2161 = vsub.f32 1.0, %v2160
  %v2162 = vmul.f32 %v2159, %v2161
  %v2163 = vadd.f32 %v2159, %v2162
  %vm2164 = vweird.f32 %v2041
  %vm2165 = vweird.f32 %v2159
  %vm2166 = vmor %vm2164, %vm2165
  %v2167 = vsel %vm2166, %v2159, %v2163
  %v2168 = vand.u32 2147483647, %v2041
  %vm2169 = vcmp.eq.f32.partialorder %v2168, 8.507059e+37
  %v2170 = vand.u32 %v2041, 2147483648
  %v2171 = vor.u32 1.1754944e-38, %v2170
  %v2172 = vsel %vm2169, %v2171, %v2167
  %v2173 = vmul.f32 %v2002, %v2172
  %v2174 = vrcp.pop %v2044
  %v2175 = vmul.f32 %v2044, %v2174
  %v2176 = vsub.f32 1.0, %v2175
  %v2177 = vmul.f32 %v2174, %v2176
  %v2178 = vadd.f32 %v2174, %v2177
  %vm2179 = vweird.f32 %v2044
  %vm2180 = vweird.f32 %v2174
  %vm2181 = vmor %vm2179, %vm2180
  %v2182 = vsel %vm2181, %v2174, %v2178
  %v2183 = vand.u32 2147483647, %v2044
  %vm2184 = vcmp.eq.f32.partialorder %v2183, 8.507059e+37
  %v2185 = vand.u32 %v2044, 2147483648
  %v2186 = vor.u32 1.1754944e-38, %v2185
  %v2187 = vsel %vm2184, %v2186, %v2182
  %v2188 = vmul.f32 %v2004, %v2187
  %v2189 = vrcp.pop %v2047
  %v2190 = vmul.f32 %v2047, %v2189
  %v2191 = vsub.f32 1.0, %v2190
  %v2192 = vmul.f32 %v2189, %v2191
  %v2193 = vadd.f32 %v2189, %v2192
  %vm2194 = vweird.f32 %v2047
  %vm2195 = vweird.f32 %v2189
  %vm2196 = vmor %vm2194, %vm2195
  %v2197 = vsel %vm2196, %v2189, %v2193
  %v2198 = vand.u32 2147483647, %v2047
  %vm2199 = vcmp.eq.f32.partialorder %v2198, 8.507059e+37
  %v2200 = vand.u32 %v2047, 2147483648
  %v2201 = vor.u32 1.1754944e-38, %v2200
  %v2202 = vsel %vm2199, %v2201, %v2197
  %v2203 = vmul.f32 %v2006, %v2202
  %v2204 = vrcp.pop %v2050
  %v2205 = vmul.f32 %v2050, %v2204
  %v2206 = vsub.f32 1.0, %v2205
  %v2207 = vmul.f32 %v2204, %v2206
  %v2208 = vadd.f32 %v2204, %v2207
  %vm2209 = vweird.f32 %v2050
  %vm2210 = vweird.f32 %v2204
  %vm2211 = vmor %vm2209, %vm2210
  %v2212 = vsel %vm2211, %v2204, %v2208
  %v2213 = vand.u32 2147483647, %v2050
  %vm2214 = vcmp.eq.f32.partialorder %v2213, 8.507059e+37
  %v2215 = vand.u32 %v2050, 2147483648
  %v2216 = vor.u32 1.1754944e-38, %v2215
  %v2217 = vsel %vm2214, %v2216, %v2212
  %v2218 = vmul.f32 %v2008, %v2217
  %v2219 = vrcp.pop %v2053
  %v2220 = vmul.f32 %v2053, %v2219
  %v2221 = vsub.f32 1.0, %v2220
  %v2222 = vmul.f32 %v2219, %v2221
  %v2223 = vadd.f32 %v2219, %v2222
  %vm2224 = vweird.f32 %v2053
  %vm2225 = vweird.f32 %v2219
  %vm2226 = vmor %vm2224, %vm2225
  %v2227 = vsel %vm2226, %v2219, %v2223
  %v2228 = vand.u32 2147483647, %v2053
  %vm2229 = vcmp.eq.f32.partialorder %v2228, 8.507059e+37
  %v2230 = vand.u32 %v2053, 2147483648
  %v2231 = vor.u32 1.1754944e-38, %v2230
  %v2232 = vsel %vm2229, %v2231, %v2227
  %v2233 = vmul.f32 %v2010, %v2232
  %v2234 = vrcp.pop %v2056
  %v2235 = vmul.f32 %v2056, %v2234
  %v2236 = vsub.f32 1.0, %v2235
  %v2237 = vmul.f32 %v2234, %v2236
  %v2238 = vadd.f32 %v2234, %v2237
  %vm2239 = vweird.f32 %v2056
  %vm2240 = vweird.f32 %v2234
  %vm2241 = vmor %vm2239, %vm2240
  %v2242 = vsel %vm2241, %v2234, %v2238
  %v2243 = vand.u32 2147483647, %v2056
  %vm2244 = vcmp.eq.f32.partialorder %v2243, 8.507059e+37
  %v2245 = vand.u32 %v2056, 2147483648
  %v2246 = vor.u32 1.1754944e-38, %v2245
  %v2247 = vsel %vm2244, %v2246, %v2242
  %v2248 = vmul.f32 %v2012, %v2247
  %v2249 = vrcp.pop %v2059
  %v2250 = vmul.f32 %v2059, %v2249
  %v2251 = vsub.f32 1.0, %v2250
  %v2252 = vmul.f32 %v2249, %v2251
  %v2253 = vadd.f32 %v2249, %v2252
  %vm2254 = vweird.f32 %v2059
  %vm2255 = vweird.f32 %v2249
  %vm2256 = vmor %vm2254, %vm2255
  %v2257 = vsel %vm2256, %v2249, %v2253
  %v2258 = vand.u32 2147483647, %v2059
  %vm2259 = vcmp.eq.f32.partialorder %v2258, 8.507059e+37
  %v2260 = vand.u32 %v2059, 2147483648
  %v2261 = vor.u32 1.1754944e-38, %v2260
  %v2262 = vsel %vm2259, %v2261, %v2257
  %v2263 = vmul.f32 %v2014, %v2262
  %v2264 = vrcp.pop %v2062
  %v2265 = vmul.f32 %v2062, %v2264
  %v2266 = vsub.f32 1.0, %v2265
  %v2267 = vmul.f32 %v2264, %v2266
  %v2268 = vadd.f32 %v2264, %v2267
  %vm2269 = vweird.f32 %v2062
  %vm2270 = vweird.f32 %v2264
  %vm2271 = vmor %vm2269, %vm2270
  %v2272 = vsel %vm2271, %v2264, %v2268
  %v2273 = vand.u32 2147483647, %v2062
  %vm2274 = vcmp.eq.f32.partialorder %v2273, 8.507059e+37
  %v2275 = vand.u32 %v2062, 2147483648
  %v2276 = vor.u32 1.1754944e-38, %v2275
  %v2277 = vsel %vm2274, %v2276, %v2272
  %v2278 = vmul.f32 %v2016, %v2277
  %v2279 = vrcp.pop %v2065
  %v2280 = vmul.f32 %v2065, %v2279
  %v2281 = vsub.f32 1.0, %v2280
  %v2282 = vmul.f32 %v2279, %v2281
  %v2283 = vadd.f32 %v2279, %v2282
  %vm2284 = vweird.f32 %v2065
  %vm2285 = vweird.f32 %v2279
  %vm2286 = vmor %vm2284, %vm2285
  %v2287 = vsel %vm2286, %v2279, %v2283
  %v2288 = vand.u32 2147483647, %v2065
  %vm2289 = vcmp.eq.f32.partialorder %v2288, 8.507059e+37
  %v2290 = vand.u32 %v2065, 2147483648
  %v2291 = vor.u32 1.1754944e-38, %v2290
  %v2292 = vsel %vm2289, %v2291, %v2287
  %v2293 = vmul.f32 %v2018, %v2292
  %v2294 = vrcp.pop %v2068
  %v2295 = vmul.f32 %v2068, %v2294
  %v2296 = vsub.f32 1.0, %v2295
  %v2297 = vmul.f32 %v2294, %v2296
  %v2298 = vadd.f32 %v2294, %v2297
  %vm2299 = vweird.f32 %v2068
  %vm2300 = vweird.f32 %v2294
  %vm2301 = vmor %vm2299, %vm2300
  %v2302 = vsel %vm2301, %v2294, %v2298
  %v2303 = vand.u32 2147483647, %v2068
  %vm2304 = vcmp.eq.f32.partialorder %v2303, 8.507059e+37
  %v2305 = vand.u32 %v2068, 2147483648
  %v2306 = vor.u32 1.1754944e-38, %v2305
  %v2307 = vsel %vm2304, %v2306, %v2302
  %v2308 = vmul.f32 %v2020, %v2307
  %2309 = vrot.lane.b32.xlu0 %v1578, 96
  %v2310 = vpop.permute.xlu0 %2309
  %2311 = vrot.lane.b32.xlu0 %v1581, 96
  %v2312 = vpop.permute.xlu0 %2311
  %v2315 = vsel %vm502, %v2083, 0
  %v2318 = vsel %vm502, %v2098, 0
  %v2320 = vsel %vm899, %v2312, 0
  %2322 = vmatpush.msra.mxu0 0.0
  %2323 = vmatpush.msra.mxu0 0.0
  %2324 = vmatpush.msra.mxu0 0.0
  %2325 = vmatpush.msra.mxu0 0.0
  %2326 = vmatpush.msra.mxu0 0.0
  %2327 = vmatpush.msra.mxu0 0.0
  %2328 = vmatpush.msra.mxu0 0.0
  %2329 = vmatpush.msra.mxu0 0.0
  %2330 = vmatpush.msra.mxu0 0.0
  %2331 = vmatpush.msra.mxu0 0.0
  %2332 = vmatpush.msra.mxu0 0.0
  %2333 = vmatpush.msra.mxu0 0.0
  %2334 = vmatpush.msra.mxu0 0.0
  %2335 = vmatpush.msra.mxu0 0.0
  %2336 = vmatpush.msra.mxu0 %v2320
  %2337 = vmatpush.msra.mxu0 %v2310
  %2338 = vmatmul.f32.gmra.mxu0 %v2315
  %v2339 = vpop.f32.mrf.mxu0
  %v2340 = vadd.f32 0.0, %v2339
  %2341 = vmatmul.f32.gmra.mxu0 %v2318
  %v2342 = vpop.f32.mrf.mxu0
  %v2343 = vadd.f32 0.0, %v2342
  %2344 = vdwg.mxu0
  %2345 = vrot.lane.b32.xlu0 %v1586, 96
  %v2346 = vpop.permute.xlu0 %2345
  %2347 = vrot.lane.b32.xlu0 %v1588, 96
  %v2348 = vpop.permute.xlu0 %2347
  %v2351 = vsel %vm502, %v2113, 0
  %v2354 = vsel %vm502, %v2128, 0
  %v2356 = vsel %vm899, %v2348, 0
  %2358 = vmatpush.msra.mxu0 0.0
  %2359 = vmatpush.msra.mxu0 0.0
  %2360 = vmatpush.msra.mxu0 0.0
  %2361 = vmatpush.msra.mxu0 0.0
  %2362 = vmatpush.msra.mxu0 0.0
  %2363 = vmatpush.msra.mxu0 0.0
  %2364 = vmatpush.msra.mxu0 0.0
  %2365 = vmatpush.msra.mxu0 0.0
  %2366 = vmatpush.msra.mxu0 0.0
  %2367 = vmatpush.msra.mxu0 0.0
  %2368 = vmatpush.msra.mxu0 0.0
  %2369 = vmatpush.msra.mxu0 0.0
  %2370 = vmatpush.msra.mxu0 0.0
  %2371 = vmatpush.msra.mxu0 0.0
  %2372 = vmatpush.msra.mxu0 %v2356
  %2373 = vmatpush.msra.mxu0 %v2346
  %2374 = vmatmul.f32.gmra.mxu0 %v2351
  %v2375 = vpop.f32.mrf.mxu0
  %v2376 = vadd.f32 0.0, %v2375
  %2377 = vmatmul.f32.gmra.mxu0 %v2354
  %v2378 = vpop.f32.mrf.mxu0
  %v2379 = vadd.f32 0.0, %v2378
  %2380 = vdwg.mxu0
  %2381 = vrot.lane.b32.xlu0 %v1590, 96
  %v2382 = vpop.permute.xlu0 %2381
  %2383 = vrot.lane.b32.xlu0 %v1592, 96
  %v2384 = vpop.permute.xlu0 %2383
  %v2387 = vsel %vm502, %v2143, 0
  %v2390 = vsel %vm502, %v2158, 0
  %v2392 = vsel %vm899, %v2384, 0
  %2394 = vmatpush.msra.mxu0 0.0
  %2395 = vmatpush.msra.mxu0 0.0
  %2396 = vmatpush.msra.mxu0 0.0
  %2397 = vmatpush.msra.mxu0 0.0
  %2398 = vmatpush.msra.mxu0 0.0
  %2399 = vmatpush.msra.mxu0 0.0
  %2400 = vmatpush.msra.mxu0 0.0
  %2401 = vmatpush.msra.mxu0 0.0
  %2402 = vmatpush.msra.mxu0 0.0
  %2403 = vmatpush.msra.mxu0 0.0
  %2404 = vmatpush.msra.mxu0 0.0
  %2405 = vmatpush.msra.mxu0 0.0
  %2406 = vmatpush.msra.mxu0 0.0
  %2407 = vmatpush.msra.mxu0 0.0
  %2408 = vmatpush.msra.mxu0 %v2392
  %2409 = vmatpush.msra.mxu0 %v2382
  %2410 = vmatmul.f32.gmra.mxu0 %v2387
  %v2411 = vpop.f32.mrf.mxu0
  %v2412 = vadd.f32 0.0, %v2411
  %2413 = vmatmul.f32.gmra.mxu0 %v2390
  %v2414 = vpop.f32.mrf.mxu0
  %v2415 = vadd.f32 0.0, %v2414
  %2416 = vdwg.mxu0
  %2417 = vrot.lane.b32.xlu0 %v1594, 96
  %v2418 = vpop.permute.xlu0 %2417
  %2419 = vrot.lane.b32.xlu0 %v1596, 96
  %v2420 = vpop.permute.xlu0 %2419
  %v2423 = vsel %vm502, %v2173, 0
  %v2426 = vsel %vm502, %v2188, 0
  %v2428 = vsel %vm899, %v2420, 0
  %2430 = vmatpush.msra.mxu0 0.0
  %2431 = vmatpush.msra.mxu0 0.0
  %2432 = vmatpush.msra.mxu0 0.0
  %2433 = vmatpush.msra.mxu0 0.0
  %2434 = vmatpush.msra.mxu0 0.0
  %2435 = vmatpush.msra.mxu0 0.0
  %2436 = vmatpush.msra.mxu0 0.0
  %2437 = vmatpush.msra.mxu0 0.0
  %2438 = vmatpush.msra.mxu0 0.0
  %2439 = vmatpush.msra.mxu0 0.0
  %2440 = vmatpush.msra.mxu0 0.0
  %2441 = vmatpush.msra.mxu0 0.0
  %2442 = vmatpush.msra.mxu0 0.0
  %2443 = vmatpush.msra.mxu0 0.0
  %2444 = vmatpush.msra.mxu0 %v2428
  %2445 = vmatpush.msra.mxu0 %v2418
  %2446 = vmatmul.f32.gmra.mxu0 %v2423
  %v2447 = vpop.f32.mrf.mxu0
  %v2448 = vadd.f32 0.0, %v2447
  %2449 = vmatmul.f32.gmra.mxu0 %v2426
  %v2450 = vpop.f32.mrf.mxu0
  %v2451 = vadd.f32 0.0, %v2450
  %2452 = vdwg.mxu0
  %2453 = vrot.lane.b32.xlu0 %v1598, 96
  %v2454 = vpop.permute.xlu0 %2453
  %2455 = vrot.lane.b32.xlu0 %v1600, 96
  %v2456 = vpop.permute.xlu0 %2455
  %v2459 = vsel %vm502, %v2203, 0
  %v2462 = vsel %vm502, %v2218, 0
  %v2464 = vsel %vm899, %v2456, 0
  %2466 = vmatpush.msra.mxu0 0.0
  %2467 = vmatpush.msra.mxu0 0.0
  %2468 = vmatpush.msra.mxu0 0.0
  %2469 = vmatpush.msra.mxu0 0.0
  %2470 = vmatpush.msra.mxu0 0.0
  %2471 = vmatpush.msra.mxu0 0.0
  %2472 = vmatpush.msra.mxu0 0.0
  %2473 = vmatpush.msra.mxu0 0.0
  %2474 = vmatpush.msra.mxu0 0.0
  %2475 = vmatpush.msra.mxu0 0.0
  %2476 = vmatpush.msra.mxu0 0.0
  %2477 = vmatpush.msra.mxu0 0.0
  %2478 = vmatpush.msra.mxu0 0.0
  %2479 = vmatpush.msra.mxu0 0.0
  %2480 = vmatpush.msra.mxu0 %v2464
  %2481 = vmatpush.msra.mxu0 %v2454
  %2482 = vmatmul.f32.gmra.mxu0 %v2459
  %v2483 = vpop.f32.mrf.mxu0
  %v2484 = vadd.f32 0.0, %v2483
  %2485 = vmatmul.f32.gmra.mxu0 %v2462
  %v2486 = vpop.f32.mrf.mxu0
  %v2487 = vadd.f32 0.0, %v2486
  %2488 = vdwg.mxu0
  %2489 = vrot.lane.b32.xlu0 %v1602, 96
  %v2490 = vpop.permute.xlu0 %2489
  %2491 = vrot.lane.b32.xlu0 %v1604, 96
  %v2492 = vpop.permute.xlu0 %2491
  %v2495 = vsel %vm502, %v2233, 0
  %v2498 = vsel %vm502, %v2248, 0
  %v2500 = vsel %vm899, %v2492, 0
  %2502 = vmatpush.msra.mxu0 0.0
  %2503 = vmatpush.msra.mxu0 0.0
  %2504 = vmatpush.msra.mxu0 0.0
  %2505 = vmatpush.msra.mxu0 0.0
  %2506 = vmatpush.msra.mxu0 0.0
  %2507 = vmatpush.msra.mxu0 0.0
  %2508 = vmatpush.msra.mxu0 0.0
  %2509 = vmatpush.msra.mxu0 0.0
  %2510 = vmatpush.msra.mxu0 0.0
  %2511 = vmatpush.msra.mxu0 0.0
  %2512 = vmatpush.msra.mxu0 0.0
  %2513 = vmatpush.msra.mxu0 0.0
  %2514 = vmatpush.msra.mxu0 0.0
  %2515 = vmatpush.msra.mxu0 0.0
  %2516 = vmatpush.msra.mxu0 %v2500
  %2517 = vmatpush.msra.mxu0 %v2490
  %2518 = vmatmul.f32.gmra.mxu0 %v2495
  %v2519 = vpop.f32.mrf.mxu0
  %v2520 = vadd.f32 0.0, %v2519
  %2521 = vmatmul.f32.gmra.mxu0 %v2498
  %v2522 = vpop.f32.mrf.mxu0
  %v2523 = vadd.f32 0.0, %v2522
  %2524 = vdwg.mxu0
  %2525 = vrot.lane.b32.xlu0 %v1606, 96
  %v2526 = vpop.permute.xlu0 %2525
  %2527 = vrot.lane.b32.xlu0 %v1608, 96
  %v2528 = vpop.permute.xlu0 %2527
  %v2531 = vsel %vm502, %v2263, 0
  %v2534 = vsel %vm502, %v2278, 0
  %v2536 = vsel %vm899, %v2528, 0
  %2538 = vmatpush.msra.mxu0 0.0
  %2539 = vmatpush.msra.mxu0 0.0
  %2540 = vmatpush.msra.mxu0 0.0
  %2541 = vmatpush.msra.mxu0 0.0
  %2542 = vmatpush.msra.mxu0 0.0
  %2543 = vmatpush.msra.mxu0 0.0
  %2544 = vmatpush.msra.mxu0 0.0
  %2545 = vmatpush.msra.mxu0 0.0
  %2546 = vmatpush.msra.mxu0 0.0
  %2547 = vmatpush.msra.mxu0 0.0
  %2548 = vmatpush.msra.mxu0 0.0
  %2549 = vmatpush.msra.mxu0 0.0
  %2550 = vmatpush.msra.mxu0 0.0
  %2551 = vmatpush.msra.mxu0 0.0
  %2552 = vmatpush.msra.mxu0 %v2536
  %2553 = vmatpush.msra.mxu0 %v2526
  %2554 = vmatmul.f32.gmra.mxu0 %v2531
  %v2555 = vpop.f32.mrf.mxu0
  %v2556 = vadd.f32 0.0, %v2555
  %2557 = vmatmul.f32.gmra.mxu0 %v2534
  %v2558 = vpop.f32.mrf.mxu0
  %v2559 = vadd.f32 0.0, %v2558
  %2560 = vdwg.mxu0
  %2561 = vrot.lane.b32.xlu0 %v1610, 96
  %v2562 = vpop.permute.xlu0 %2561
  %2563 = vrot.lane.b32.xlu0 %v1612, 96
  %v2564 = vpop.permute.xlu0 %2563
  %v2567 = vsel %vm502, %v2293, 0
  %v2570 = vsel %vm502, %v2308, 0
  %v2572 = vsel %vm899, %v2564, 0
  %2574 = vmatpush.msra.mxu0 0.0
  %2575 = vmatpush.msra.mxu0 0.0
  %2576 = vmatpush.msra.mxu0 0.0
  %2577 = vmatpush.msra.mxu0 0.0
  %2578 = vmatpush.msra.mxu0 0.0
  %2579 = vmatpush.msra.mxu0 0.0
  %2580 = vmatpush.msra.mxu0 0.0
  %2581 = vmatpush.msra.mxu0 0.0
  %2582 = vmatpush.msra.mxu0 0.0
  %2583 = vmatpush.msra.mxu0 0.0
  %2584 = vmatpush.msra.mxu0 0.0
  %2585 = vmatpush.msra.mxu0 0.0
  %2586 = vmatpush.msra.mxu0 0.0
  %2587 = vmatpush.msra.mxu0 0.0
  %2588 = vmatpush.msra.mxu0 %v2572
  %2589 = vmatpush.msra.mxu0 %v2562
  %2590 = vmatmul.f32.gmra.mxu0 %v2567
  %v2591 = vpop.f32.mrf.mxu0
  %v2592 = vadd.f32 0.0, %v2591
  %2593 = vmatmul.f32.gmra.mxu0 %v2570
  %v2594 = vpop.f32.mrf.mxu0
  %v2595 = vadd.f32 0.0, %v2594
  %2596 = vdwg.mxu0
  %2597 = vst.msk [vmem:[%s8] sm:$0x1f] %vm1177, %v2083
  %2598 = vst.msk [vmem:[%s8 + $0x8] sm:$0x1f] %vm1177, %v2113
  %2599 = vst.msk [vmem:[%s8 + $0x10] sm:$0x1f] %vm1177, %v2143
  %2600 = vst.msk [vmem:[%s8 + $0x18] sm:$0x1f] %vm1177, %v2173
  %2601 = vst.msk [vmem:[%s8 + $0x20] sm:$0x1f] %vm1177, %v2203
  %2602 = vst.msk [vmem:[%s8 + $0x28] sm:$0x1f] %vm1177, %v2233
  %2603 = vst.msk [vmem:[%s8 + $0x30] sm:$0x1f] %vm1177, %v2263
  %2604 = vst.msk [vmem:[%s8 + $0x38] sm:$0x1f] %vm1177, %v2293
  %2605 = vrot.lane.b32.xlu0 %v2083, 123
  %v2606 = vpop.permute.xlu0 %2605
  %2607 = vrot.lane.b32.xlu0 %v2098, 123
  %v2608 = vpop.permute.xlu0 %2607
  %2609 = vrot.lane.b32.xlu0 %v2113, 123
  %v2610 = vpop.permute.xlu0 %2609
  %2611 = vrot.lane.b32.xlu0 %v2128, 123
  %v2612 = vpop.permute.xlu0 %2611
  %2613 = vrot.lane.b32.xlu0 %v2143, 123
  %v2614 = vpop.permute.xlu0 %2613
  %2615 = vrot.lane.b32.xlu0 %v2158, 123
  %v2616 = vpop.permute.xlu0 %2615
  %2617 = vrot.lane.b32.xlu0 %v2173, 123
  %v2618 = vpop.permute.xlu0 %2617
  %2619 = vrot.lane.b32.xlu0 %v2188, 123
  %v2620 = vpop.permute.xlu0 %2619
  %2621 = vrot.lane.b32.xlu0 %v2203, 123
  %v2622 = vpop.permute.xlu0 %2621
  %2623 = vrot.lane.b32.xlu0 %v2218, 123
  %v2624 = vpop.permute.xlu0 %2623
  %2625 = vrot.lane.b32.xlu0 %v2233, 123
  %v2626 = vpop.permute.xlu0 %2625
  %2627 = vrot.lane.b32.xlu0 %v2248, 123
  %v2628 = vpop.permute.xlu0 %2627
  %2629 = vrot.lane.b32.xlu0 %v2263, 123
  %v2630 = vpop.permute.xlu0 %2629
  %2631 = vrot.lane.b32.xlu0 %v2278, 123
  %v2632 = vpop.permute.xlu0 %2631
  %2633 = vrot.lane.b32.xlu0 %v2293, 123
  %v2634 = vpop.permute.xlu0 %2633
  %2635 = vrot.lane.b32.xlu0 %v2308, 123
  %v2636 = vpop.permute.xlu0 %2635
  %s2653 = scalar_lea.vmem %s8, 64
  %2654 = vst.msk [vmem:[%s2653 - $0x5] sm:$0xe0] %vm1235, %v2606
  %2655 = vst.msk [vmem:[%s2653 + $0x3] sm:$0x3] %vm1237, %v2608
  %2656 = vst.msk [vmem:[%s2653 + $0x3] sm:$0xe0] %vm1235, %v2610
  %2657 = vst.msk [vmem:[%s2653 + $0xb] sm:$0x3] %vm1237, %v2612
  %2658 = vst.msk [vmem:[%s2653 + $0xb] sm:$0xe0] %vm1235, %v2614
  %2659 = vst.msk [vmem:[%s2653 + $0x13] sm:$0x3] %vm1237, %v2616
  %2660 = vst.msk [vmem:[%s2653 + $0x13] sm:$0xe0] %vm1235, %v2618
  %2661 = vst.msk [vmem:[%s2653 + $0x1b] sm:$0x3] %vm1237, %v2620
  %2662 = vst.msk [vmem:[%s2653 + $0x1b] sm:$0xe0] %vm1235, %v2622
  %2663 = vst.msk [vmem:[%s2653 + $0x23] sm:$0x3] %vm1237, %v2624
  %2664 = vst.msk [vmem:[%s2653 + $0x23] sm:$0xe0] %vm1235, %v2626
  %2665 = vst.msk [vmem:[%s2653 + $0x2b] sm:$0x3] %vm1237, %v2628
  %2666 = vst.msk [vmem:[%s2653 + $0x2b] sm:$0xe0] %vm1235, %v2630
  %2667 = vst.msk [vmem:[%s2653 + $0x33] sm:$0x3] %vm1237, %v2632
  %2668 = vst.msk [vmem:[%s2653 + $0x33] sm:$0xe0] %vm1235, %v2634
  %2669 = vst.msk [vmem:[%s2653 + $0x3b] sm:$0x3] %vm1237, %v2636
  %2672 = vrot.lane.b32.xlu0 %v2376, 2
  %v2673 = vpop.permute.xlu0 %2672
  %2674 = vrot.lane.b32.xlu0 %v2379, 2
  %v2675 = vpop.permute.xlu0 %2674
  %2680 = vrot.lane.b32.xlu0 %v2412, 4
  %v2681 = vpop.permute.xlu0 %2680
  %2682 = vrot.lane.b32.xlu0 %v2415, 4
  %v2683 = vpop.permute.xlu0 %2682
  %2688 = vrot.lane.b32.xlu0 %v2448, 6
  %v2689 = vpop.permute.xlu0 %2688
  %2690 = vrot.lane.b32.xlu0 %v2451, 6
  %v2691 = vpop.permute.xlu0 %2690
  %2696 = vrot.lane.b32.xlu0 %v2484, 8
  %v2697 = vpop.permute.xlu0 %2696
  %2698 = vrot.lane.b32.xlu0 %v2487, 8
  %v2699 = vpop.permute.xlu0 %2698
  %2704 = vrot.lane.b32.xlu0 %v2520, 10
  %v2705 = vpop.permute.xlu0 %2704
  %2706 = vrot.lane.b32.xlu0 %v2523, 10
  %v2707 = vpop.permute.xlu0 %2706
  %2712 = vrot.lane.b32.xlu0 %v2556, 12
  %v2713 = vpop.permute.xlu0 %2712
  %2714 = vrot.lane.b32.xlu0 %v2559, 12
  %v2715 = vpop.permute.xlu0 %2714
  %2720 = vrot.lane.b32.xlu0 %v2592, 14
  %v2721 = vpop.permute.xlu0 %2720
  %2722 = vrot.lane.b32.xlu0 %v2595, 14
  %v2723 = vpop.permute.xlu0 %2722
  %v2726 = vsel %vm193, %v2340, %v2673
  %v2727 = vsel %vm193, %v2343, %v2675
  %v2728 = vsel %vm1311, %v2726, %v2681
  %v2729 = vsel %vm1311, %v2727, %v2683
  %v2730 = vsel %vm1314, %v2728, %v2689
  %v2731 = vsel %vm1314, %v2729, %v2691
  %v2732 = vsel %vm1317, %v2730, %v2697
  %v2733 = vsel %vm1317, %v2731, %v2699
  %v2734 = vsel %vm502, %v2732, %v2705
  %v2735 = vsel %vm502, %v2733, %v2707
  %v2736 = vsel %vm1322, %v2734, %v2713
  %v2737 = vsel %vm1322, %v2735, %v2715
  %v2738 = vsel %vm1325, %v2736, %v2721
  %v2739 = vsel %vm1325, %v2737, %v2723
  %v2740 = vperm.slane %v1549, 1
  %v2742 = vsel %vm1329, %v2738, 0
  %v2745 = vsel %vm1329, %v2739, 0
  %2747 = vmatpush.msra.mxu0 0.0
  %2748 = vmatpush.msra.mxu0 0.0
  %2749 = vmatpush.msra.mxu0 0.0
  %2750 = vmatpush.msra.mxu0 0.0
  %2751 = vmatpush.msra.mxu0 0.0
  %2752 = vmatpush.msra.mxu0 0.0
  %2753 = vmatpush.msra.mxu0 0.0
  %2754 = vmatpush.msra.mxu0 0.0
  %2755 = vmatpush.msra.mxu0 0.0
  %2756 = vmatpush.msra.mxu0 0.0
  %2757 = vmatpush.msra.mxu0 0.0
  %2758 = vmatpush.msra.mxu0 0.0
  %2759 = vmatpush.msra.mxu0 0.0
  %2760 = vmatpush.msra.mxu0 0.0
  %2761 = vmatpush.msra.mxu0 %v1544
  %2762 = vmatpush.msra.mxu0 %v1543
  %2763 = vmatmul.f32.gmra.mxu0 %v2742
  %v2764 = vpop.f32.mrf.mxu0
  %v2765 = vadd.f32 %v2740, %v2764
  %2766 = vmatmul.f32.gmra.mxu0 %v2745
  %v2767 = vpop.f32.mrf.mxu0
  %v2768 = vadd.f32 %v2740, %v2767
  %2769 = vdwg.mxu0
  %v2770 = vadd.f32 %v2765, %v1538
  %v2771 = vadd.f32 %v2768, %v1539
  %v2772 = vsel %vm125, %v2770, 0.0
  %2773 = vadd.xlane.f32.xlu0 %v2772
  %v2774 = vpop.xlane.xlu0 %2773
  %v2775 = vsel %vm1364, %v2771, 0.0
  %2776 = vadd.xlane.f32.xlu0 %v2775
  %v2777 = vpop.xlane.xlu0 %2776
  %v2778 = vmul.f32 %v2774, %v1374
  %v2779 = vmul.f32 %v2777, %v1374
  %v2780 = vsub.f32 %v2770, %v2778
  %v2781 = vsub.f32 %v2771, %v2779
  %v2782 = vmul.f32 %v2780, %v2780
  %v2783 = vmul.f32 %v2781, %v2781
  %v2784 = vsel %vm125, %v2782, 0.0
  %2785 = vadd.xlane.f32.xlu0 %v2784
  %v2786 = vpop.xlane.xlu0 %2785
  %v2787 = vsel %vm1364, %v2783, 0.0
  %2788 = vadd.xlane.f32.xlu0 %v2787
  %v2789 = vpop.xlane.xlu0 %2788
  %v2790 = vmul.f32 %v2786, %v1374
  %v2791 = vmul.f32 %v2789, %v1374
  %v2792 = vadd.f32 %v2790, 1e-05
  %v2793 = vadd.f32 %v2791, 1e-05
  %v2794 = vrsqrt.pop %v2792
  %v2795 = vmul.f32 %v2794, %v2792
  %v2796 = vmul.f32 %v2795, %v2794
  %v2797 = vmul.f32 0.5, %v2796
  %v2798 = vsub.f32 1.5, %v2797
  %v2799 = vmul.f32 %v2794, %v2798
  %vm2800 = vweird.f32 %v2792
  %vm2801 = vweird.f32 %v2794
  %vm2802 = vmor %vm2800, %vm2801
  %v2803 = vsel %vm2802, %v2794, %v2799
  %v2804 = vrsqrt.pop %v2793
  %v2805 = vmul.f32 %v2804, %v2793
  %v2806 = vmul.f32 %v2805, %v2804
  %v2807 = vmul.f32 0.5, %v2806
  %v2808 = vsub.f32 1.5, %v2807
  %v2809 = vmul.f32 %v2804, %v2808
  %vm2810 = vweird.f32 %v2793
  %vm2811 = vweird.f32 %v2804
  %vm2812 = vmor %vm2810, %vm2811
  %v2813 = vsel %vm2812, %v2804, %v2809
  %v2814 = vmul.f32 %v2780, %v2803
  %v2815 = vmul.f32 %v2781, %v2813
  %v2816 = vperm.slane %v1549, 2
  %v2817 = vmul.f32 %v2814, %v2816
  %v2818 = vmul.f32 %v2815, %v2816
  %v2819 = vperm.slane %v1549, 3
  %v2820 = vadd.f32 %v2817, %v2819
  %v2821 = vadd.f32 %v2818, %v2819
  %2822 = vrot.lane.b32.xlu0 %v1541, 80
  %v2823 = vpop.permute.xlu0 %2822
  %2825 = vrot.lane.b32.xlu0 %v1550, 80
  %v2826 = vpop.permute.xlu0 %2825
  %v2829 = vsel %vm125, %v2820, 0
  %v2832 = vsel %vm125, %v2821, 0
  %v2834 = vsel %vm132, %v2823, 0
  %2836 = vmatpush.msra.mxu0 0.0
  %2837 = vmatpush.msra.mxu0 0.0
  %2838 = vmatpush.msra.mxu0 0.0
  %2839 = vmatpush.msra.mxu0 0.0
  %2840 = vmatpush.msra.mxu0 0.0
  %2841 = vmatpush.msra.mxu0 0.0
  %2842 = vmatpush.msra.mxu0 0.0
  %2843 = vmatpush.msra.mxu0 0.0
  %2844 = vmatpush.msra.mxu0 0.0
  %2845 = vmatpush.msra.mxu0 0.0
  %2846 = vmatpush.msra.mxu0 0.0
  %2847 = vmatpush.msra.mxu0 0.0
  %2848 = vmatpush.msra.mxu0 0.0
  %2849 = vmatpush.msra.mxu0 0.0
  %2850 = vmatpush.msra.mxu0 0.0
  %2851 = vmatpush.msra.mxu0 %v2834
  %2852 = vmatmul.f32.gmra.mxu0 %v2829
  %v2853 = vpop.f32.mrf.mxu0
  %v2854 = vadd.f32 %v2826, %v2853
  %2855 = vmatmul.f32.gmra.mxu0 %v2832
  %v2856 = vpop.f32.mrf.mxu0
  %v2857 = vadd.f32 %v2826, %v2856
  %2858 = vdwg.mxu0
  %v2859 = vmax.f32 %v2854, 0.0
  %v2860 = vmax.f32 %v2857, 0.0
  %v2861 = vperm.slane %v1549, 4
  %v2863 = vsel %vm1329, %v2859, 0
  %v2866 = vsel %vm1329, %v2860, 0
  %2868 = vmatpush.msra.mxu0 0.0
  %2869 = vmatpush.msra.mxu0 0.0
  %2870 = vmatpush.msra.mxu0 0.0
  %2871 = vmatpush.msra.mxu0 0.0
  %2872 = vmatpush.msra.mxu0 0.0
  %2873 = vmatpush.msra.mxu0 0.0
  %2874 = vmatpush.msra.mxu0 0.0
  %2875 = vmatpush.msra.mxu0 0.0
  %2876 = vmatpush.msra.mxu0 0.0
  %2877 = vmatpush.msra.mxu0 0.0
  %2878 = vmatpush.msra.mxu0 0.0
  %2879 = vmatpush.msra.mxu0 0.0
  %2880 = vmatpush.msra.mxu0 0.0
  %2881 = vmatpush.msra.mxu0 0.0
  %2882 = vmatpush.msra.mxu0 %v1547
  %2883 = vmatpush.msra.mxu0 %v1546
  %2884 = vmatmul.f32.gmra.mxu0 %v2863
  %v2885 = vpop.f32.mrf.mxu0
  %v2886 = vadd.f32 %v2861, %v2885
  %2887 = vmatmul.f32.gmra.mxu0 %v2866
  %v2888 = vpop.f32.mrf.mxu0
  %v2889 = vadd.f32 %v2861, %v2888
  %2890 = vdwg.mxu0
  %v2891 = vadd.f32 %v2886, %v2820
  %v2892 = vadd.f32 %v2889, %v2821
  %v2893 = vsel %vm125, %v2891, 0.0
  %2894 = vadd.xlane.f32.xlu0 %v2893
  %v2895 = vpop.xlane.xlu0 %2894
  %v2896 = vsel %vm1364, %v2892, 0.0
  %2897 = vadd.xlane.f32.xlu0 %v2896
  %v2898 = vpop.xlane.xlu0 %2897
  %v2899 = vmul.f32 %v2895, %v1374
  %v2900 = vmul.f32 %v2898, %v1374
  %v2901 = vsub.f32 %v2891, %v2899
  %v2902 = vsub.f32 %v2892, %v2900
  %v2903 = vmul.f32 %v2901, %v2901
  %v2904 = vmul.f32 %v2902, %v2902
  %v2905 = vsel %vm125, %v2903, 0.0
  %2906 = vadd.xlane.f32.xlu0 %v2905
  %v2907 = vpop.xlane.xlu0 %2906
  %v2908 = vsel %vm1364, %v2904, 0.0
  %2909 = vadd.xlane.f32.xlu0 %v2908
  %v2910 = vpop.xlane.xlu0 %2909
  %v2911 = vmul.f32 %v2907, %v1374
  %v2912 = vmul.f32 %v2910, %v1374
  %v2913 = vadd.f32 %v2911, 1e-05
  %v2914 = vadd.f32 %v2912, 1e-05
  %v2915 = vrsqrt.pop %v2913
  %v2916 = vmul.f32 %v2915, %v2913
  %v2917 = vmul.f32 %v2916, %v2915
  %v2918 = vmul.f32 0.5, %v2917
  %v2919 = vsub.f32 1.5, %v2918
  %v2920 = vmul.f32 %v2915, %v2919
  %vm2921 = vweird.f32 %v2913
  %vm2922 = vweird.f32 %v2915
  %vm2923 = vmor %vm2921, %vm2922
  %v2924 = vsel %vm2923, %v2915, %v2920
  %v2925 = vrsqrt.pop %v2914
  %v2926 = vmul.f32 %v2925, %v2914
  %v2927 = vmul.f32 %v2926, %v2925
  %v2928 = vmul.f32 0.5, %v2927
  %v2929 = vsub.f32 1.5, %v2928
  %v2930 = vmul.f32 %v2925, %v2929
  %vm2931 = vweird.f32 %v2914
  %vm2932 = vweird.f32 %v2925
  %vm2933 = vmor %vm2931, %vm2932
  %v2934 = vsel %vm2933, %v2925, %v2930
  %v2935 = vmul.f32 %v2901, %v2924
  %v2936 = vmul.f32 %v2902, %v2934
  %v2937 = vperm.slane %v1549, 5
  %v2938 = vmul.f32 %v2935, %v2937
  %v2939 = vmul.f32 %v2936, %v2937
  %v2940 = vperm.slane %v1549, 6
  %v2941 = vadd.f32 %v2938, %v2940
  %v2942 = vadd.f32 %v2939, %v2940
  %2943 = vst.msk [vmem:[%s6] sm:$0xff] %vm125, %v2941
  %2944 = vst.msk [vmem:[%s6 + $0x8] sm:$0x3] %vm1364, %v2942
  // Predicated region
  $region26: #{encoder_forward.1} parent=0 // pred_check
    _
  $region27: #{encoder_forward.1} parent=0 // pred_check_branch
    %2946 = sbr.rel (0) target = $region29
  $region28: #{encoder_forward.1} parent=0 // pred_region
    _
  $region29: #{encoder_forward.1} parent=0 // pred_fallthru
    _
  // Predicated region
  $region30: #{encoder_forward.1} parent=0 // pred_check
    _
  $region31: #{encoder_forward.1} parent=0 // pred_check_branch
    %2948 = sbr.rel (0) target = $region33
  $region32: #{encoder_forward.1} parent=0 // pred_region
    _
  $region33: #{encoder_forward.1} parent=0 // pred_fallthru
    _
  // Predicated region
  $region34: #{encoder_forward.1} parent=0 // pred_check
    _
  $region35: #{encoder_forward.1} parent=0 // pred_check_branch
    %2950 = sbr.rel (0) target = $region37
  $region36: #{encoder_forward.1} parent=0 // pred_region
    _
  $region37: #{encoder_forward.1} parent=0 // pred_fallthru
    _
  // Predicated region
  $region38: #{encoder_forward.1} parent=0 // pred_check
    _
  $region39: #{encoder_forward.1} parent=0 // pred_check_branch
    %2952 = sbr.rel (0) target = $region41
  $region40: #{encoder_forward.1} parent=0 // pred_region
    _
  $region41: #{encoder_forward.1} parent=0 // pred_fallthru
    _
  // Predicated region
  $region42: #{encoder_forward.1} parent=0 // pred_check
    _
  $region43: #{encoder_forward.1} parent=0 // pred_check_branch
    %2954 = sbr.rel (0) target = $region45
  $region44: #{encoder_forward.1} parent=0 // pred_region
    _
  $region45: #{encoder_forward.1} parent=0 // pred_fallthru
    _
  // Predicated region
  $region46: #{encoder_forward.1} parent=0 // pred_check
    _
  $region47: #{encoder_forward.1} parent=0 // pred_check_branch
    %2956 = sbr.rel (0) target = $region49
  $region48: #{encoder_forward.1} parent=0 // pred_region
    _
  $region49: #{encoder_forward.1} parent=0 // pred_fallthru
    _

</llo_original>
